<compile_context>
chip_gen: v5e
topology: v5e:2x2
jax: 0.10.0
libtpu: 0.0.40
codegen_flags: <defaults>
</compile_context>

<pallas_src>
import functools

import jax
import jax.numpy as jnp
import numpy as np
from jax.experimental import pallas as pl
from jax.experimental.pallas import tpu as pltpu

EPS = 1e-6


def wasam_kernel(xr_ref, xh_ref, wq_ref, wl_ref, wr_ref, b_ref, out_ref,
                 *, scale, ch):
    R, W, C = xr_ref.shape
    Cr = xh_ref.shape[-1]
    N = R * W

    xr = xr_ref[...].reshape(N, C)        # (N, C)   row tokens, channels-last
    xh = xh_ref[...].reshape(N, Cr)       # (N, Cr)

    # --- LayerNorm2d over the channel axis (affine folded into wq / bq) ---
    mu = jnp.mean(xr, axis=-1, keepdims=True)
    xc = xr - mu
    var = jnp.mean(xc * xc, axis=-1, keepdims=True)
    xhat = xc * jax.lax.rsqrt(var + EPS)

    # Packed biases: [bq (C) | bl (2*ch) | br (C + 2*ch)]
    bq = b_ref[:, 0:C]
    bl = b_ref[:, C:C + 2 * ch]
    br = b_ref[:, C + 2 * ch:]

    # --- fused 1x1-conv projections: one matmul per input stream ---
    q_l = jnp.dot(xhat, wq_ref[...], preferred_element_type=jnp.float32) + bq   # (N, C)
    lv = jnp.dot(xr, wl_ref[...], preferred_element_type=jnp.float32) + bl      # (N, 2ch)  [v_l*gamma | res_l]
    rv = jnp.dot(xh, wr_ref[...], preferred_element_type=jnp.float32) + br      # (N, C+2ch) [q_r | v_r*beta | res_r]

    v_l = lv[:, :ch].reshape(R, W, ch)          # gamma already folded in
    res_l = lv[:, ch:]                          # (N, ch)
    q_r = rv[:, :C].reshape(R, W, C)
    v_r = rv[:, C:C + ch].reshape(R, W, ch)     # beta already folded in
    res_r = rv[:, C + ch:]                      # (N, ch)
    q_l = q_l.reshape(R, W, C)

    # --- cross attention over the W axis, batched over the R rows ---
    attn = jnp.einsum('rwc,rvc->rwv', q_l, q_r,
                      preferred_element_type=jnp.float32) * scale     # (R, W, W)

    # softmax(attn^T, dim=-1) without materializing attn^T: reduce over axis=-2.
    m2 = jnp.max(attn, axis=-2, keepdims=True)
    e2 = jnp.exp(attn - m2)
    p2 = e2 * pl.reciprocal(jnp.sum(e2, axis=-2, keepdims=True), approx=True)
    f_l2r = jnp.einsum('rvw,rvc->rwc', p2, v_l,
                       preferred_element_type=jnp.float32)            # (R, W, ch)
    out_r = res_r.reshape(R, W, ch) + f_l2r

    # softmax(attn, dim=-1)
    m1 = jnp.max(attn, axis=-1, keepdims=True)
    e1 = jnp.exp(attn - m1)
    p1 = e1 * pl.reciprocal(jnp.sum(e1, axis=-1, keepdims=True), approx=True)
    f_r2l = jnp.einsum('rwv,rvc->rwc', p1, v_r,
                       preferred_element_type=jnp.float32)            # (R, W, ch)
    out_l = res_l.reshape(R, W, ch) + f_r2l

    out = jnp.concatenate([out_l, out_r], axis=-1)                    # (R, W, C)
    out_ref[...] = out.reshape(R, W * C)                              # lane-dense store


def _pick_rows(bh, w, target_tokens=256):
    """Largest divisor R of bh with R*w <= ~target_tokens and R layout-friendly."""
    target = max(1, target_tokens // max(w, 1))
    best = None
    for r in range(1, bh + 1):
        if bh % r == 0 and r <= target and (r % 8 == 0 or r == bh):
            best = r
    return best if best is not None else bh


def wasam_forward(x_rgb, x_hfw, params, rows_per_block=None):
    B, C, H, W = x_rgb.shape
    Cr = x_hfw.shape[1]
    Ch = C // 2
    scale = (0.5 * (C + Cr)) ** (-0.5)
    BH = B * H

    # NCHW -> (B*H, W, C) row tokens, channels-last.
    xr = jnp.transpose(x_rgb, (0, 2, 3, 1)).reshape(BH, W, C)
    xh = jnp.transpose(x_hfw, (0, 2, 3, 1)).reshape(BH, W, Cr)

    # --- host-side weight folding (constant under jit) ---
    ln_w = params["ln_w"].reshape(C)
    ln_b = params["ln_b"].reshape(C)
    beta = params["beta"].reshape(Ch)
    gamma = params["gamma"].reshape(Ch)

    # q_l = (xhat*ln_w + ln_b) @ wql + bql  ==  xhat @ (ln_w[:,None]*wql) + (ln_b@wql + bql)
    wq = ln_w[:, None] * params["wql"]                                   # (C, C)
    bq = params["bql"].reshape(C) + ln_b @ params["wql"]                 # (C,)

    # xr consumers: [v_l*gamma | res_l]
    wl = jnp.concatenate([params["wvl"] * gamma, params["wrl"]], axis=1)  # (C, 2Ch)
    bl = jnp.concatenate([params["bvl"].reshape(Ch) * gamma,
                          params["brl"].reshape(Ch)])                     # (2Ch,)

    # xh consumers: [q_r | v_r*beta | res_r]
    wr = jnp.concatenate([params["wqr"], params["wvr"] * beta,
                          params["wrr"]], axis=1)                         # (Cr, C+2Ch)
    br = jnp.concatenate([params["bqr"].reshape(C),
                          params["bvr"].reshape(Ch) * beta,
                          params["brr"].reshape(Ch)])                     # (C+2Ch,)

    b_all = jnp.concatenate([bq, bl, br]).reshape(1, -1)                  # (1, 2C+4Ch)

    R = rows_per_block if rows_per_block is not None else _pick_rows(BH, W)
    assert BH % R == 0, "rows_per_block must divide B*H"
    WC = W * C

    def const_spec(a):
        nd = a.ndim
        return pl.BlockSpec(a.shape, lambda i: (0,) * nd)

    out = pl.pallas_call(
        functools.partial(wasam_kernel, scale=scale, ch=Ch),
        out_shape=jax.ShapeDtypeStruct((BH, WC), jnp.float32),
        grid=(BH // R,),
        in_specs=[
            pl.BlockSpec((R, W, C), lambda i: (i, 0, 0)),
            pl.BlockSpec((R, W, Cr), lambda i: (i, 0, 0)),
            const_spec(wq), const_spec(wl), const_spec(wr), const_spec(b_all),
        ],
        out_specs=pl.BlockSpec((R, WC), lambda i: (i, 0)),
        # Tiles are tiny (< 1 MiB even double-buffered) so the default VMEM
        # limit is ample on v5e/v6e/v7x; 'parallel' lets v7x shard the row
        # blocks across its 2 TensorCores.
        compiler_params=pltpu.CompilerParams(dimension_semantics=("parallel",)),
    )(xr, xh, wq, wl, wr, b_all)

    # (BH, W*C) -> (B, H, W, C) (free reshape) -> NCHW.
    return jnp.transpose(out.reshape(B, H, W, C), (0, 3, 1, 2))


def reference(x_rgb, x_hfw, params):
    """Pure-JAX reference mirroring the PyTorch forward (unfused params)."""
    B, C, H, W = x_rgb.shape
    Cr = x_hfw.shape[1]
    scale = (0.5 * (C + Cr)) ** (-0.5)
    xr = jnp.transpose(x_rgb, (0, 2, 3, 1))   # (B,H,W,C)
    xh = jnp.transpose(x_hfw, (0, 2, 3, 1))   # (B,H,W,Cr)

    mu = xr.mean(-1, keepdims=True)
    var = ((xr - mu) ** 2).mean(-1, keepdims=True)
    xn = (xr - mu) / jnp.sqrt(var + EPS) * params["ln_w"] + params["ln_b"]

    q_l = xn @ params["wql"] + params["bql"]
    q_r = xh @ params["wqr"] + params["bqr"]
    v_l = xr @ params["wvl"] + params["bvl"]
    v_r = xh @ params["wvr"] + params["bvr"]
    res_l = xr @ params["wrl"] + params["brl"]
    res_r = xh @ params["wrr"] + params["brr"]

    attn = jnp.einsum("bhwc,bhvc->bhwv", q_l, q_r) * scale
    f_r2l = jnp.einsum("bhwv,bhvc->bhwc", jax.nn.softmax(attn, axis=-1), v_r)
    f_l2r = jnp.einsum("bhwv,bhvc->bhwc",
                       jax.nn.softmax(jnp.swapaxes(attn, -1, -2), axis=-1), v_l)

    out = jnp.concatenate(
        [res_l + f_r2l * params["beta"], res_r + f_l2r * params["gamma"]], axis=-1)
    return jnp.transpose(out, (0, 3, 1, 2))


def init_params(key, c_rgb, cr):
    ch = c_rgb // 2
    ks = jax.random.split(key, 16)

    def w(k, cin, cout):
        return jax.random.normal(k, (cin, cout), jnp.float32) * 0.1

    def b(k, cout):
        return jax.random.normal(k, (1, cout), jnp.float32) * 0.05

    # NOTE: PyTorch __init__ zero-inits beta/gamma; here we use non-zero values
    # so the attention branch is actually exercised by the test.
    return {
        "ln_w": jnp.ones((1, c_rgb), jnp.float32),
        "ln_b": jnp.zeros((1, c_rgb), jnp.float32),
        "wql": w(ks[0], c_rgb, c_rgb), "bql": b(ks[1], c_rgb),
        "wqr": w(ks[2], cr, c_rgb),    "bqr": b(ks[3], c_rgb),
        "wvl": w(ks[4], c_rgb, ch),    "bvl": b(ks[5], ch),
        "wvr": w(ks[6], cr, ch),       "bvr": b(ks[7], ch),
        "wrl": w(ks[8], c_rgb, ch),    "brl": b(ks[9], ch),
        "wrr": w(ks[10], cr, ch),      "brr": b(ks[11], ch),
        "beta": jax.random.normal(ks[12], (1, ch), jnp.float32) * 0.1,
        "gamma": jax.random.normal(ks[13], (1, ch), jnp.float32) * 0.1,
    }


if __name__ == "__main__":
    B, c_rgb, cr, H, W = 2, 8, 4, 16, 16

    key = jax.random.PRNGKey(0)
    k_x, k_y, k_p = jax.random.split(key, 3)
    x_rgb = jax.random.normal(k_x, (B, c_rgb, H, W), jnp.float32)
    x_hfw = jax.random.normal(k_y, (B, cr, H, W), jnp.float32)
    params = init_params(k_p, c_rgb, cr)

    out = wasam_forward(x_rgb, x_hfw, params)
    out = jax.block_until_ready(out)

    ref = jax.block_until_ready(reference(x_rgb, x_hfw, params))
    # Tolerance slightly relaxed vs pure-f32 because the softmax denominators
    # use the EUP approximate reciprocal.
    np.testing.assert_allclose(np.asarray(out), np.asarray(ref), rtol=5e-4, atol=5e-4)
    assert out.shape == (B, c_rgb, H, W)

    print("KERNEL_OK")
</pallas_src>

<mosaic_0001>
module attributes {stable_mosaic.version = 11 : i64} {
  func.func @wasam_kernel(%arg0: i32, %arg1: memref<16x16x8xf32, #tpu.memory_space<vmem>>, %arg2: memref<16x16x4xf32, #tpu.memory_space<vmem>>, %arg3: memref<8x8xf32, #tpu.memory_space<vmem>>, %arg4: memref<8x8xf32, #tpu.memory_space<vmem>>, %arg5: memref<4x16xf32, #tpu.memory_space<vmem>>, %arg6: memref<1x32xf32, #tpu.memory_space<vmem>>, %arg7: memref<16x128xf32, #tpu.memory_space<vmem>>) attributes {dimension_semantics = [#tpu.dimension_semantics<parallel>], iteration_bounds = array<i64: 2>, scalar_prefetch = 0 : i64, scratch_operands = 0 : i64, tpu.core_type = #tpu.core_type<tc>, window_params = [{transform_indices = @transform_0, window_bounds = array<i64: 16, 16, 8>}, {transform_indices = @transform_1, window_bounds = array<i64: 16, 16, 4>}, {pipeline_mode = #tpu.pipeline_mode<synchronous>, transform_indices = @transform_2, window_bounds = array<i64: 8, 8>}, {pipeline_mode = #tpu.pipeline_mode<synchronous>, transform_indices = @transform_3, window_bounds = array<i64: 8, 8>}, {pipeline_mode = #tpu.pipeline_mode<synchronous>, transform_indices = @transform_4, window_bounds = array<i64: 4, 16>}, {pipeline_mode = #tpu.pipeline_mode<synchronous>, transform_indices = @transform_5, window_bounds = array<i64: 1, 32>}, {transform_indices = @transform_6, window_bounds = array<i64: 16, 128>}]} {
    %c0 = arith.constant 0 : index
    %c0_0 = arith.constant 0 : index
    %c0_1 = arith.constant 0 : index
    %0 = vector.load %arg1[%c0, %c0_0, %c0_1] : memref<16x16x8xf32, #tpu.memory_space<vmem>>, vector<16x16x8xf32>
    %1 = vector.shape_cast %0 : vector<16x16x8xf32> to vector<256x8xf32>
    %c0_2 = arith.constant 0 : index
    %c0_3 = arith.constant 0 : index
    %c0_4 = arith.constant 0 : index
    %2 = vector.load %arg2[%c0_2, %c0_3, %c0_4] : memref<16x16x4xf32, #tpu.memory_space<vmem>>, vector<16x16x4xf32>
    %3 = vector.shape_cast %2 : vector<16x16x4xf32> to vector<256x4xf32>
    %cst = arith.constant dense<0.000000e+00> : vector<256xf32>
    %4 = vector.multi_reduction <add>, %1, %cst [1] : vector<256x8xf32> to vector<256xf32>
    %5 = vector.shape_cast %4 : vector<256xf32> to vector<256x1xf32>
    %cst_5 = arith.constant 8.000000e+00 : f32
    %6 = vector.broadcast %cst_5 : f32 to vector<256x1xf32>
    %7 = arith.divf %5, %6 : vector<256x1xf32>
    %8 = vector.broadcast %7 : vector<256x1xf32> to vector<256x8xf32>
    %9 = arith.subf %1, %8 : vector<256x8xf32>
    %10 = arith.mulf %9, %9 : vector<256x8xf32>
    %cst_6 = arith.constant dense<0.000000e+00> : vector<256xf32>
    %11 = vector.multi_reduction <add>, %10, %cst_6 [1] : vector<256x8xf32> to vector<256xf32>
    %12 = vector.shape_cast %11 : vector<256xf32> to vector<256x1xf32>
    %cst_7 = arith.constant 8.000000e+00 : f32
    %13 = vector.broadcast %cst_7 : f32 to vector<256x1xf32>
    %14 = arith.divf %12, %13 : vector<256x1xf32>
    %cst_8 = arith.constant 9.99999997E-7 : f32
    %15 = vector.broadcast %cst_8 : f32 to vector<256x1xf32>
    %16 = arith.addf %14, %15 : vector<256x1xf32>
    %17 = math.rsqrt %16 : vector<256x1xf32>
    %18 = vector.broadcast %17 : vector<256x1xf32> to vector<256x8xf32>
    %19 = arith.mulf %9, %18 : vector<256x8xf32>
    %c0_9 = arith.constant 0 : index
    %c0_10 = arith.constant 0 : index
    %20 = vector.load %arg6[%c0_9, %c0_10] : memref<1x32xf32, #tpu.memory_space<vmem>>, vector<1x8xf32>
    %c0_11 = arith.constant 0 : index
    %c8 = arith.constant 8 : index
    %21 = vector.load %arg6[%c0_11, %c8] : memref<1x32xf32, #tpu.memory_space<vmem>>, vector<1x8xf32>
    %c0_12 = arith.constant 0 : index
    %c16 = arith.constant 16 : index
    %22 = vector.load %arg6[%c0_12, %c16] : memref<1x32xf32, #tpu.memory_space<vmem>>, vector<1x16xf32>
    %c0_13 = arith.constant 0 : index
    %c0_14 = arith.constant 0 : index
    %23 = vector.load %arg3[%c0_13, %c0_14] : memref<8x8xf32, #tpu.memory_space<vmem>>, vector<8x8xf32>
    %cst_15 = arith.constant dense<0.000000e+00> : vector<256x8xf32>
    %24 = tpu.matmul %19, %23, %cst_15 {dimension_numbers = #tpu.dot_dimension_numbers<[1], [0], [0], [1], [0, 0, 1, 1], [], []>} : vector<256x8xf32>, vector<8x8xf32>, vector<256x8xf32> -> vector<256x8xf32>
    %25 = vector.broadcast %20 : vector<1x8xf32> to vector<256x8xf32>
    %26 = arith.addf %24, %25 : vector<256x8xf32>
    %c0_16 = arith.constant 0 : index
    %c0_17 = arith.constant 0 : index
    %27 = vector.load %arg4[%c0_16, %c0_17] : memref<8x8xf32, #tpu.memory_space<vmem>>, vector<8x8xf32>
    %cst_18 = arith.constant dense<0.000000e+00> : vector<256x8xf32>
    %28 = tpu.matmul %1, %27, %cst_18 {dimension_numbers = #tpu.dot_dimension_numbers<[1], [0], [0], [1], [0, 0, 1, 1], [], []>} : vector<256x8xf32>, vector<8x8xf32>, vector<256x8xf32> -> vector<256x8xf32>
    %29 = vector.broadcast %21 : vector<1x8xf32> to vector<256x8xf32>
    %30 = arith.addf %28, %29 : vector<256x8xf32>
    %c0_19 = arith.constant 0 : index
    %c0_20 = arith.constant 0 : index
    %31 = vector.load %arg5[%c0_19, %c0_20] : memref<4x16xf32, #tpu.memory_space<vmem>>, vector<4x16xf32>
    %cst_21 = arith.constant dense<0.000000e+00> : vector<256x16xf32>
    %32 = tpu.matmul %3, %31, %cst_21 {dimension_numbers = #tpu.dot_dimension_numbers<[1], [0], [0], [1], [0, 0, 1, 1], [], []>} : vector<256x4xf32>, vector<4x16xf32>, vector<256x16xf32> -> vector<256x16xf32>
    %33 = vector.broadcast %22 : vector<1x16xf32> to vector<256x16xf32>
    %34 = arith.addf %32, %33 : vector<256x16xf32>
    %35 = vector.extract_strided_slice %30 {offsets = [0, 0], sizes = [256, 4], strides = [1, 1]} : vector<256x8xf32> to vector<256x4xf32>
    %36 = vector.shape_cast %35 : vector<256x4xf32> to vector<16x16x4xf32>
    %37 = vector.extract_strided_slice %30 {offsets = [0, 4], sizes = [256, 4], strides = [1, 1]} : vector<256x8xf32> to vector<256x4xf32>
    %38 = vector.extract_strided_slice %34 {offsets = [0, 0], sizes = [256, 8], strides = [1, 1]} : vector<256x16xf32> to vector<256x8xf32>
    %39 = vector.shape_cast %38 : vector<256x8xf32> to vector<16x16x8xf32>
    %40 = vector.extract_strided_slice %34 {offsets = [0, 8], sizes = [256, 4], strides = [1, 1]} : vector<256x16xf32> to vector<256x4xf32>
    %41 = vector.shape_cast %40 : vector<256x4xf32> to vector<16x16x4xf32>
    %42 = vector.extract_strided_slice %34 {offsets = [0, 12], sizes = [256, 4], strides = [1, 1]} : vector<256x16xf32> to vector<256x4xf32>
    %43 = vector.shape_cast %26 : vector<256x8xf32> to vector<16x16x8xf32>
    "tpu.trace_start"() <{level = 10 : i32, message = "rwc,rvc->rwv"}> : () -> ()
    %cst_22 = arith.constant dense<0.000000e+00> : vector<16x16x16xf32>
    %44 = tpu.matmul %43, %39, %cst_22 {dimension_numbers = #tpu.dot_dimension_numbers<[2], [2], [1], [1], [0, 0, 0, 1, 1, 1], [0], [0]>} : vector<16x16x8xf32>, vector<16x16x8xf32>, vector<16x16x16xf32> -> vector<16x16x16xf32>
    "tpu.trace_stop"() : () -> ()
    %cst_23 = arith.constant 0.408248305 : f32
    %45 = vector.broadcast %cst_23 : f32 to vector<16x16x16xf32>
    %46 = arith.mulf %44, %45 : vector<16x16x16xf32>
    %cst_24 = arith.constant dense<0xFF800000> : vector<16x16xf32>
    %47 = vector.multi_reduction <maximumf>, %46, %cst_24 [1] : vector<16x16x16xf32> to vector<16x16xf32>
    %48 = vector.shape_cast %47 : vector<16x16xf32> to vector<16x1x16xf32>
    %49 = vector.broadcast %48 : vector<16x1x16xf32> to vector<16x16x16xf32>
    %50 = arith.subf %46, %49 : vector<16x16x16xf32>
    %51 = math.exp %50 : vector<16x16x16xf32>
    %cst_25 = arith.constant dense<0.000000e+00> : vector<16x16xf32>
    %52 = vector.multi_reduction <add>, %51, %cst_25 [1] : vector<16x16x16xf32> to vector<16x16xf32>
    %53 = vector.shape_cast %52 : vector<16x16xf32> to vector<16x1x16xf32>
    %54 = tpu.reciprocal %53 {approx = true} : vector<16x1x16xf32> -> vector<16x1x16xf32>
    %55 = vector.broadcast %54 : vector<16x1x16xf32> to vector<16x16x16xf32>
    %56 = arith.mulf %51, %55 : vector<16x16x16xf32>
    "tpu.trace_start"() <{level = 10 : i32, message = "rvw,rvc->rwc"}> : () -> ()
    %cst_26 = arith.constant dense<0.000000e+00> : vector<16x16x4xf32>
    %57 = tpu.matmul %56, %36, %cst_26 {dimension_numbers = #tpu.dot_dimension_numbers<[1], [1], [2], [2], [0, 0, 0, 2, 1, 2], [0], [0]>} : vector<16x16x16xf32>, vector<16x16x4xf32>, vector<16x16x4xf32> -> vector<16x16x4xf32>
    "tpu.trace_stop"() : () -> ()
    %58 = vector.shape_cast %42 : vector<256x4xf32> to vector<16x16x4xf32>
    %59 = arith.addf %58, %57 : vector<16x16x4xf32>
    %cst_27 = arith.constant dense<0xFF800000> : vector<16x16xf32>
    %60 = vector.multi_reduction <maximumf>, %46, %cst_27 [2] : vector<16x16x16xf32> to vector<16x16xf32>
    %61 = vector.shape_cast %60 : vector<16x16xf32> to vector<16x16x1xf32>
    %62 = vector.broadcast %61 : vector<16x16x1xf32> to vector<16x16x16xf32>
    %63 = arith.subf %46, %62 : vector<16x16x16xf32>
    %64 = math.exp %63 : vector<16x16x16xf32>
    %cst_28 = arith.constant dense<0.000000e+00> : vector<16x16xf32>
    %65 = vector.multi_reduction <add>, %64, %cst_28 [2] : vector<16x16x16xf32> to vector<16x16xf32>
    %66 = vector.shape_cast %65 : vector<16x16xf32> to vector<16x16x1xf32>
    %67 = tpu.reciprocal %66 {approx = true} : vector<16x16x1xf32> -> vector<16x16x1xf32>
    %68 = vector.broadcast %67 : vector<16x16x1xf32> to vector<16x16x16xf32>
    %69 = arith.mulf %64, %68 : vector<16x16x16xf32>
    "tpu.trace_start"() <{level = 10 : i32, message = "rwv,rvc->rwc"}> : () -> ()
    %cst_29 = arith.constant dense<0.000000e+00> : vector<16x16x4xf32>
    %70 = tpu.matmul %69, %41, %cst_29 {dimension_numbers = #tpu.dot_dimension_numbers<[2], [1], [1], [2], [0, 0, 0, 1, 1, 2], [0], [0]>} : vector<16x16x16xf32>, vector<16x16x4xf32>, vector<16x16x4xf32> -> vector<16x16x4xf32>
    "tpu.trace_stop"() : () -> ()
    %71 = vector.shape_cast %37 : vector<256x4xf32> to vector<16x16x4xf32>
    %72 = arith.addf %71, %70 : vector<16x16x4xf32>
    %73 = tpu.concatenate %72, %59 in 2 : vector<16x16x4xf32>, vector<16x16x4xf32> -> vector<16x16x8xf32>
    %74 = vector.shape_cast %73 : vector<16x16x8xf32> to vector<16x128xf32>
    %c0_30 = arith.constant 0 : index
    %c0_31 = arith.constant 0 : index
    %75 = vector.load %arg7[%c0_30, %c0_31] : memref<16x128xf32, #tpu.memory_space<vmem>>, vector<16x128xf32>
    tpu.vector_store %arg7[%c0_30, %c0_31], %74 {strides = array<i32>} : memref<16x128xf32, #tpu.memory_space<vmem>>, vector<16x128xf32>,
    return
  }
  func.func @transform_0(%arg0: i32) -> (i32, i32, i32) {
    %c0_i32 = arith.constant 0 : i32
    %c0_i32_0 = arith.constant 0 : i32
    %c0_i32_1 = arith.constant 0 : i32
    return %arg0, %c0_i32, %c0_i32_0 : i32, i32, i32
  }
  func.func @transform_1(%arg0: i32) -> (i32, i32, i32) {
    %c0_i32 = arith.constant 0 : i32
    %c0_i32_0 = arith.constant 0 : i32
    %c0_i32_1 = arith.constant 0 : i32
    return %arg0, %c0_i32, %c0_i32_0 : i32, i32, i32
  }
  func.func @transform_2(%arg0: i32) -> (i32, i32) {
    %c0_i32 = arith.constant 0 : i32
    %c0_i32_0 = arith.constant 0 : i32
    %c0_i32_1 = arith.constant 0 : i32
    return %c0_i32, %c0_i32_0 : i32, i32
  }
  func.func @transform_3(%arg0: i32) -> (i32, i32) {
    %c0_i32 = arith.constant 0 : i32
    %c0_i32_0 = arith.constant 0 : i32
    %c0_i32_1 = arith.constant 0 : i32
    return %c0_i32, %c0_i32_0 : i32, i32
  }
  func.func @transform_4(%arg0: i32) -> (i32, i32) {
    %c0_i32 = arith.constant 0 : i32
    %c0_i32_0 = arith.constant 0 : i32
    %c0_i32_1 = arith.constant 0 : i32
    return %c0_i32, %c0_i32_0 : i32, i32
  }
  func.func @transform_5(%arg0: i32) -> (i32, i32) {
    %c0_i32 = arith.constant 0 : i32
    %c0_i32_0 = arith.constant 0 : i32
    %c0_i32_1 = arith.constant 0 : i32
    return %c0_i32, %c0_i32_0 : i32, i32
  }
  func.func @transform_6(%arg0: i32) -> (i32, i32) {
    %c0_i32 = arith.constant 0 : i32
    %c0_i32_0 = arith.constant 0 : i32
    return %arg0, %c0_i32 : i32, i32
  }
}

</mosaic_0001>

<llo_original>
// kernel: tpu_custom_call.1
$region0: #{tpu_custom_call.1}
  #allocation0 [shape = 'u32[]', space=smem, size = 0x4, offset = 0x4, fixed_abs, tag = 'smem constant byte address 0x4 - core index']
  #allocation1 [shape = 'u32[72,128]{1,0:T(1,128)}', space=vmem, size = 0x9000, scoped, tag = 'internal scratch']
  %s0 = inlined_call_operand.vmem [shape: f32[32,16,8], index: 0, kind: input, shape index: {}]
  %s1 = inlined_call_operand.vmem [shape: f32[32,16,4], index: 1, kind: input, shape index: {}]
  %s2 = inlined_call_operand.vmem [shape: f32[8,8], index: 2, kind: input, shape index: {}]
  %s3 = inlined_call_operand.vmem [shape: f32[8,8], index: 3, kind: input, shape index: {}]
  %s4 = inlined_call_operand.vmem [shape: f32[4,16], index: 4, kind: input, shape index: {}]
  %s5 = inlined_call_operand.vmem [shape: f32[1,32], index: 5, kind: input, shape index: {}]
  %s6 = inlined_call_operand.hbm [shape: f32[32,128], index: 6, kind: output, shape index: {}]
  %s7 = sld [smem:[#allocation0]]
  $region57: #{tpu_custom_call.1} parent=0
    _
  %s9 = ssub.s32 1, %s7
  %s10 = scalar_select 0, %s9, %s7
  $region1: #{tpu_custom_call.1} parent=0
    #allocation2 [shape = 'u8[16384]{0}', space=vmem, size = 0x4000, scoped, tag = 'output window, operand 0']
    #allocation3 [shape = 's32[2]{0}', space=sflag, size = 0x8, scoped, tag = 'scoped memory for tpu_custom_call.1']
    %11 = vsyncpa [#allocation3], 0
    %s12 = scalar_lea.sflag [#allocation3], 1
    %13 = vsyncpa %s12, 0
    loop: start=0, step=1, limit=4
    $region2: #{tpu_custom_call.1} parent=1 // loop_pre_header
      _
    $region3: #{tpu_custom_call.1} parent=1 // loop_header
      %s15 = sphi 0, %s19
      %p16 = scmp.ge.s32.totalorder %s15, 4
      %s25 = sphi 0, %s27
      %s28 = sphi 0, %s25
      %s29 = sphi 0, %s28
      %s45 = sphi 0, %s29
      %s51 = sphi 0, %s53
      %s54 = sphi 0, %s51
      %s55 = sphi 0, %s54
      %s71 = sphi 0, %s55
      %s75 = sphi 0, %s75
      %s77 = sphi 0, %s75
      %s78 = sphi 0, %s77
      %s92 = sphi 0, %s78
      %s96 = sphi 0, %s96
      %s98 = sphi 0, %s96
      %s99 = sphi 0, %s98
      %s113 = sphi 0, %s99
      %s117 = sphi 0, %s117
      %s119 = sphi 0, %s117
      %s120 = sphi 0, %s119
      %s134 = sphi 0, %s120
      %s138 = sphi 0, %s138
      %s140 = sphi 0, %s138
      %s141 = sphi 0, %s140
      %s155 = sphi 0, %s141
      %s161 = sphi 0, %s163
      %s164 = sphi 0, %s161
      %s165 = sphi 0, %s164
      %s181 = sphi 0, %s165
    $region4: #{tpu_custom_call.1} parent=1 // loop_header_branch
      %18 = sbr.rel (%p16) target = $region8
    $region5: #{tpu_custom_call.1} parent=1 // loop_body
      %s20 = ssub.s32 %s15, 1
      %s21 = ssub.s32 %s15, 2
      %s22 = sadd.s32 %s15, 1
      %s23 = ssub.s32 %s15, %s22
      %p24 = scmp.eq.s32.totalorder %s23, 0
      %s26 = sadd.s32 %s25, 1
      %s27 = scalar_select %p24, %s25, %s26
      %p30 = pneg %p24
      %p31 = scmp.eq.s32.totalorder %s15, 1
      %p32 = por %p30, %p31
      %p33 = scmp.ne.s32.totalorder %s25, %s28
      %p34 = scmp.eq.s32.totalorder %s15, 0
      %p35 = por %p33, %p34
      %p36 = scmp.ne.s32.totalorder %s25, %s28
      %p37 = scmp.eq.s32.totalorder %s20, 1
      %p38 = por %p36, %p37
      %p39 = scmp.ne.s32.totalorder %s28, %s29
      %p40 = scmp.eq.s32.totalorder %s20, 0
      %p41 = por %p39, %p40
      %p42 = scmp.ne.s32.totalorder %s28, %s29
      %p43 = scmp.eq.s32.totalorder %s21, 1
      %p44 = por %p42, %p43
      %p46 = scmp.ne.s32.totalorder %s29, %s45
      %p47 = scmp.eq.s32.totalorder %s21, 0
      %p48 = por %p46, %p47
      %s49 = ssub.s32 %s15, %s22
      %p50 = scmp.eq.s32.totalorder %s49, 0
      %s52 = sadd.s32 %s51, 1
      %s53 = scalar_select %p50, %s51, %s52
      %p56 = pneg %p50
      %p57 = scmp.eq.s32.totalorder %s15, 1
      %p58 = por %p56, %p57
      %p59 = scmp.ne.s32.totalorder %s51, %s54
      %p60 = scmp.eq.s32.totalorder %s15, 0
      %p61 = por %p59, %p60
      %p62 = scmp.ne.s32.totalorder %s51, %s54
      %p63 = scmp.eq.s32.totalorder %s20, 1
      %p64 = por %p62, %p63
      %p65 = scmp.ne.s32.totalorder %s54, %s55
      %p66 = scmp.eq.s32.totalorder %s20, 0
      %p67 = por %p65, %p66
      %p68 = scmp.ne.s32.totalorder %s54, %s55
      %p69 = scmp.eq.s32.totalorder %s21, 1
      %p70 = por %p68, %p69
      %p72 = scmp.ne.s32.totalorder %s55, %s71
      %p73 = scmp.eq.s32.totalorder %s21, 0
      %p74 = por %p72, %p73
      %s76 = sadd.s32 %s75, 1
      %p79 = scmp.eq.s32.totalorder %s15, 1
      %p80 = scmp.ne.s32.totalorder %s75, %s77
      %p81 = scmp.eq.s32.totalorder %s15, 0
      %p82 = por %p80, %p81
      %p83 = scmp.ne.s32.totalorder %s75, %s77
      %p84 = scmp.eq.s32.totalorder %s20, 1
      %p85 = por %p83, %p84
      %p86 = scmp.ne.s32.totalorder %s77, %s78
      %p87 = scmp.eq.s32.totalorder %s20, 0
      %p88 = por %p86, %p87
      %p89 = scmp.ne.s32.totalorder %s77, %s78
      %p90 = scmp.eq.s32.totalorder %s21, 1
      %p91 = por %p89, %p90
      %p93 = scmp.ne.s32.totalorder %s78, %s92
      %p94 = scmp.eq.s32.totalorder %s21, 0
      %p95 = por %p93, %p94
      %s97 = sadd.s32 %s96, 1
      %p100 = scmp.eq.s32.totalorder %s15, 1
      %p101 = scmp.ne.s32.totalorder %s96, %s98
      %p102 = scmp.eq.s32.totalorder %s15, 0
      %p103 = por %p101, %p102
      %p104 = scmp.ne.s32.totalorder %s96, %s98
      %p105 = scmp.eq.s32.totalorder %s20, 1
      %p106 = por %p104, %p105
      %p107 = scmp.ne.s32.totalorder %s98, %s99
      %p108 = scmp.eq.s32.totalorder %s20, 0
      %p109 = por %p107, %p108
      %p110 = scmp.ne.s32.totalorder %s98, %s99
      %p111 = scmp.eq.s32.totalorder %s21, 1
      %p112 = por %p110, %p111
      %p114 = scmp.ne.s32.totalorder %s99, %s113
      %p115 = scmp.eq.s32.totalorder %s21, 0
      %p116 = por %p114, %p115
      %s118 = sadd.s32 %s117, 1
      %p121 = scmp.eq.s32.totalorder %s15, 1
      %p122 = scmp.ne.s32.totalorder %s117, %s119
      %p123 = scmp.eq.s32.totalorder %s15, 0
      %p124 = por %p122, %p123
      %p125 = scmp.ne.s32.totalorder %s117, %s119
      %p126 = scmp.eq.s32.totalorder %s20, 1
      %p127 = por %p125, %p126
      %p128 = scmp.ne.s32.totalorder %s119, %s120
      %p129 = scmp.eq.s32.totalorder %s20, 0
      %p130 = por %p128, %p129
      %p131 = scmp.ne.s32.totalorder %s119, %s120
      %p132 = scmp.eq.s32.totalorder %s21, 1
      %p133 = por %p131, %p132
      %p135 = scmp.ne.s32.totalorder %s120, %s134
      %p136 = scmp.eq.s32.totalorder %s21, 0
      %p137 = por %p135, %p136
      %s139 = sadd.s32 %s138, 1
      %p142 = scmp.eq.s32.totalorder %s15, 1
      %p143 = scmp.ne.s32.totalorder %s138, %s140
      %p144 = scmp.eq.s32.totalorder %s15, 0
      %p145 = por %p143, %p144
      %p146 = scmp.ne.s32.totalorder %s138, %s140
      %p147 = scmp.eq.s32.totalorder %s20, 1
      %p148 = por %p146, %p147
      %p149 = scmp.ne.s32.totalorder %s140, %s141
      %p150 = scmp.eq.s32.totalorder %s20, 0
      %p151 = por %p149, %p150
      %p152 = scmp.ne.s32.totalorder %s140, %s141
      %p153 = scmp.eq.s32.totalorder %s21, 1
      %p154 = por %p152, %p153
      %p156 = scmp.ne.s32.totalorder %s141, %s155
      %p157 = scmp.eq.s32.totalorder %s21, 0
      %p158 = por %p156, %p157
      %s159 = ssub.s32 %s15, %s22
      %p160 = scmp.eq.s32.totalorder %s159, 0
      %s162 = sadd.s32 %s161, 1
      %s163 = scalar_select %p160, %s161, %s162
      %p166 = pneg %p160
      %p167 = scmp.eq.s32.totalorder %s15, 1
      %p168 = por %p166, %p167
      %p169 = scmp.ne.s32.totalorder %s161, %s164
      %p170 = scmp.eq.s32.totalorder %s15, 0
      %p171 = por %p169, %p170
      %p172 = scmp.ne.s32.totalorder %s161, %s164
      %p173 = scmp.eq.s32.totalorder %s20, 1
      %p174 = por %p172, %p173
      %p175 = scmp.ne.s32.totalorder %s164, %s165
      %p176 = scmp.eq.s32.totalorder %s20, 0
      %p177 = por %p175, %p176
      %p178 = scmp.ne.s32.totalorder %s164, %s165
      %p179 = scmp.eq.s32.totalorder %s21, 1
      %p180 = por %p178, %p179
      %p182 = scmp.ne.s32.totalorder %s165, %s181
      %p183 = scmp.eq.s32.totalorder %s21, 0
      %p184 = por %p182, %p183
      %p185 = scmp.le.s32.totalorder 1, %s15
      %p186 = scmp.lt.s32.totalorder %s15, 3
      %p187 = pnand %p185, %p186
      %p188 = pneg %p187
      // Predicated region
      $region9: #{tpu_custom_call.1} parent=5 // pred_check
        _
      $region10: #{tpu_custom_call.1} parent=5 // pred_check_branch
        %190 = sbr.rel (%p187) target = $region12
      $region11: #{tpu_custom_call.1} parent=5 // pred_region
        %s191 = ssub.s32 %s15, 1
        // Predicated region
        $region13: #{tpu_custom_call.1} parent=11 // pred_check
          %p192 = pneg %p88
        $region14: #{tpu_custom_call.1} parent=11 // pred_check_branch
          %194 = sbr.rel (%p192) target = $region16
        $region15: #{tpu_custom_call.1} parent=11 // pred_region
          _
        $region16: #{tpu_custom_call.1} parent=11 // pred_fallthru
          _
        // Predicated region
        $region17: #{tpu_custom_call.1} parent=11 // pred_check
          %p195 = pneg %p109
        $region18: #{tpu_custom_call.1} parent=11 // pred_check_branch
          %197 = sbr.rel (%p195) target = $region20
        $region19: #{tpu_custom_call.1} parent=11 // pred_region
          _
        $region20: #{tpu_custom_call.1} parent=11 // pred_fallthru
          _
        // Predicated region
        $region21: #{tpu_custom_call.1} parent=11 // pred_check
          %p198 = pneg %p130
        $region22: #{tpu_custom_call.1} parent=11 // pred_check_branch
          %200 = sbr.rel (%p198) target = $region24
        $region23: #{tpu_custom_call.1} parent=11 // pred_region
          _
        $region24: #{tpu_custom_call.1} parent=11 // pred_fallthru
          _
        // Predicated region
        $region25: #{tpu_custom_call.1} parent=11 // pred_check
          %p201 = pneg %p151
        $region26: #{tpu_custom_call.1} parent=11 // pred_check_branch
          %203 = sbr.rel (%p201) target = $region28
        $region27: #{tpu_custom_call.1} parent=11 // pred_region
          _
        $region28: #{tpu_custom_call.1} parent=11 // pred_fallthru
          _
      $region12: #{tpu_custom_call.1} parent=5 // pred_fallthru
        _
      %p204 = scmp.lt.s32.totalorder %s15, 2
      // Predicated region
      $region29: #{tpu_custom_call.1} parent=5 // pred_check
        %p205 = pneg %p204
      $region30: #{tpu_custom_call.1} parent=5 // pred_check_branch
        %207 = sbr.rel (%p205) target = $region32
      $region31: #{tpu_custom_call.1} parent=5 // pred_region
        // Predicated region
        $region33: #{tpu_custom_call.1} parent=31 // pred_check
          %p208 = pneg %p35
        $region34: #{tpu_custom_call.1} parent=31 // pred_check_branch
          %210 = sbr.rel (%p208) target = $region36
        $region35: #{tpu_custom_call.1} parent=31 // pred_region
          %s211 = smul.u32 16, %s15
          %p212 = scmp.lt.s32.totalorder %s211, 31
          %s213 = scalar_select %p212, %s211, 31
          %s214 = smul.addr %s213, 2
          %s215 = smul.addr %s214, 8
          %s216 = scalar_lea.vmem %s0, %s215
          %s217 = smul.u32 16, %s15
        $region36: #{tpu_custom_call.1} parent=31 // pred_fallthru
          _
        // Predicated region
        $region37: #{tpu_custom_call.1} parent=31 // pred_check
          %p218 = pneg %p61
        $region38: #{tpu_custom_call.1} parent=31 // pred_check_branch
          %220 = sbr.rel (%p218) target = $region40
        $region39: #{tpu_custom_call.1} parent=31 // pred_region
          %s221 = smul.u32 16, %s15
          %p222 = scmp.lt.s32.totalorder %s221, 31
          %s223 = scalar_select %p222, %s221, 31
          %s224 = smul.addr %s223, 2
          %s225 = smul.addr %s224, 8
          %s226 = scalar_lea.vmem %s1, %s225
          %s227 = smul.u32 16, %s15
        $region40: #{tpu_custom_call.1} parent=31 // pred_fallthru
          _
      $region32: #{tpu_custom_call.1} parent=5 // pred_fallthru
        _
      %p228 = scmp.le.s32.totalorder 1, %s15
      %p229 = scmp.lt.s32.totalorder %s15, 3
      %p230 = pnand %p228, %p229
      %p231 = pneg %p230
      // Predicated region
      $region41: #{tpu_custom_call.1} parent=5 // pred_check
        _
      $region42: #{tpu_custom_call.1} parent=5 // pred_check_branch
        %233 = sbr.rel (%p230) target = $region44
      $region43: #{tpu_custom_call.1} parent=5 // pred_region
        %s234 = ssub.s32 %s15, 1
        %s235 = smul.u32 16, %s20
        %p236 = scmp.lt.s32.totalorder %s235, 31
        %s237 = scalar_select %p236, %s235, 31
        %s238 = smul.addr %s237, 2
        %s239 = smul.addr %s238, 8
        %s240 = scalar_lea.vmem %s0, %s239
        %p241 = pneg %p41
        %p242 = pneg %p38
        %s243 = smul.u32 16, %s20
        %p244 = scmp.lt.s32.totalorder %s243, 31
        %s245 = scalar_select %p244, %s243, 31
        %s246 = smul.addr %s245, 2
        %s247 = smul.addr %s246, 8
        %s248 = scalar_lea.vmem %s1, %s247
        %p249 = pneg %p67
        %p250 = pneg %p64
        %p251 = pneg %p88
        %p252 = pneg %p85
        %p253 = pneg %p109
        %p254 = pneg %p106
        %p255 = pneg %p130
        %p256 = pneg %p127
        %p257 = pneg %p151
        %p258 = pneg %p148
        %p259 = pneg %p177
        %p260 = pneg %p174
        %s261 = sand.u32 %s164, 1
        %s262 = scalar_lea.sflag [#allocation3], %s261
        %s263 = sand.u32 %s164, 1
        %s264 = smul.addr %s263, 16
        %s265 = scalar_lea.vmem [#allocation2], %s264
        %s266 = smul.u32 16, %s20
        %p267 = scmp.lt.s32.totalorder %s266, 31
        %s268 = scalar_select %p267, %s266, 31
        %s269 = smul.addr %s268, 2
        %s270 = smul.addr %s269, 8
        %s271 = scalar_lea.vmem %s0, %s270
        %s272 = smul.u32 16, %s20
        %s273 = smul.u32 16, %s20
        %p274 = scmp.lt.s32.totalorder %s273, 31
        %s275 = scalar_select %p274, %s273, 31
        %s276 = smul.addr %s275, 2
        %s277 = smul.addr %s276, 8
        %s278 = scalar_lea.vmem %s1, %s277
        %s279 = smul.u32 16, %s20
        %s280 = smul.u32 2, %s20
        %v281 = vld [vmem:[%s271] sm:$0xff]
        %v282 = vld [vmem:[%s271 + $0x8] sm:$0xff]
        %v283 = vld [vmem:[%s271 + $0x10] sm:$0xff]
        %v284 = vld [vmem:[%s271 + $0x18] sm:$0xff]
        %v285 = vld [vmem:[%s271 + $0x20] sm:$0xff]
        %v286 = vld [vmem:[%s271 + $0x28] sm:$0xff]
        %v287 = vld [vmem:[%s271 + $0x30] sm:$0xff]
        %v288 = vld [vmem:[%s271 + $0x38] sm:$0xff]
        %v289 = vld [vmem:[%s271 + $0x40] sm:$0xff]
        %v290 = vld [vmem:[%s271 + $0x48] sm:$0xff]
        %v291 = vld [vmem:[%s271 + $0x50] sm:$0xff]
        %v292 = vld [vmem:[%s271 + $0x58] sm:$0xff]
        %v293 = vld [vmem:[%s271 + $0x60] sm:$0xff]
        %v294 = vld [vmem:[%s271 + $0x68] sm:$0xff]
        %v295 = vld [vmem:[%s271 + $0x70] sm:$0xff]
        %v296 = vld [vmem:[%s271 + $0x78] sm:$0xff]
        %v297 = vld [vmem:[%s271 + $0x80] sm:$0xff]
        %v298 = vld [vmem:[%s271 + $0x88] sm:$0xff]
        %v299 = vld [vmem:[%s271 + $0x90] sm:$0xff]
        %v300 = vld [vmem:[%s271 + $0x98] sm:$0xff]
        %v301 = vld [vmem:[%s271 + $0xa0] sm:$0xff]
        %v302 = vld [vmem:[%s271 + $0xa8] sm:$0xff]
        %v303 = vld [vmem:[%s271 + $0xb0] sm:$0xff]
        %v304 = vld [vmem:[%s271 + $0xb8] sm:$0xff]
        %v305 = vld [vmem:[%s271 + $0xc0] sm:$0xff]
        %v306 = vld [vmem:[%s271 + $0xc8] sm:$0xff]
        %v307 = vld [vmem:[%s271 + $0xd0] sm:$0xff]
        %v308 = vld [vmem:[%s271 + $0xd8] sm:$0xff]
        %v309 = vld [vmem:[%s271 + $0xe0] sm:$0xff]
        %v310 = vld [vmem:[%s271 + $0xe8] sm:$0xff]
        %v311 = vld [vmem:[%s271 + $0xf0] sm:$0xff]
        %v312 = vld [vmem:[%s271 + $0xf8] sm:$0xff]
        %v313 = vld [vmem:[%s278] sm:$0xff]
        %v314 = vld [vmem:[%s278 + $0x8] sm:$0xff]
        %v315 = vld [vmem:[%s278 + $0x10] sm:$0xff]
        %v316 = vld [vmem:[%s278 + $0x18] sm:$0xff]
        %v317 = vld [vmem:[%s278 + $0x20] sm:$0xff]
        %v318 = vld [vmem:[%s278 + $0x28] sm:$0xff]
        %v319 = vld [vmem:[%s278 + $0x30] sm:$0xff]
        %v320 = vld [vmem:[%s278 + $0x38] sm:$0xff]
        %v321 = vld [vmem:[%s278 + $0x40] sm:$0xff]
        %v322 = vld [vmem:[%s278 + $0x48] sm:$0xff]
        %v323 = vld [vmem:[%s278 + $0x50] sm:$0xff]
        %v324 = vld [vmem:[%s278 + $0x58] sm:$0xff]
        %v325 = vld [vmem:[%s278 + $0x60] sm:$0xff]
        %v326 = vld [vmem:[%s278 + $0x68] sm:$0xff]
        %v327 = vld [vmem:[%s278 + $0x70] sm:$0xff]
        %v328 = vld [vmem:[%s278 + $0x78] sm:$0xff]
        %v329 = vld [vmem:[%s278 + $0x80] sm:$0xff]
        %v330 = vld [vmem:[%s278 + $0x88] sm:$0xff]
        %v331 = vld [vmem:[%s278 + $0x90] sm:$0xff]
        %v332 = vld [vmem:[%s278 + $0x98] sm:$0xff]
        %v333 = vld [vmem:[%s278 + $0xa0] sm:$0xff]
        %v334 = vld [vmem:[%s278 + $0xa8] sm:$0xff]
        %v335 = vld [vmem:[%s278 + $0xb0] sm:$0xff]
        %v336 = vld [vmem:[%s278 + $0xb8] sm:$0xff]
        %v337 = vld [vmem:[%s278 + $0xc0] sm:$0xff]
        %v338 = vld [vmem:[%s278 + $0xc8] sm:$0xff]
        %v339 = vld [vmem:[%s278 + $0xd0] sm:$0xff]
        %v340 = vld [vmem:[%s278 + $0xd8] sm:$0xff]
        %v341 = vld [vmem:[%s278 + $0xe0] sm:$0xff]
        %v342 = vld [vmem:[%s278 + $0xe8] sm:$0xff]
        %v343 = vld [vmem:[%s278 + $0xf0] sm:$0xff]
        %v344 = vld [vmem:[%s278 + $0xf8] sm:$0xff]
        %vm345 = vcmask 64512
        %v346 = vsel %vm345, %v281, 0.0
        %347 = vadd.xlane.f32.xlu0 %v346
        %v348 = vpop.xlane.xlu0 %347
        %v349 = vsel %vm345, %v282, 0.0
        %350 = vadd.xlane.f32.xlu0 %v349
        %v351 = vpop.xlane.xlu0 %350
        %v352 = vsel %vm345, %v283, 0.0
        %353 = vadd.xlane.f32.xlu0 %v352
        %v354 = vpop.xlane.xlu0 %353
        %v355 = vsel %vm345, %v284, 0.0
        %356 = vadd.xlane.f32.xlu0 %v355
        %v357 = vpop.xlane.xlu0 %356
        %v358 = vsel %vm345, %v285, 0.0
        %359 = vadd.xlane.f32.xlu0 %v358
        %v360 = vpop.xlane.xlu0 %359
        %v361 = vsel %vm345, %v286, 0.0
        %362 = vadd.xlane.f32.xlu0 %v361
        %v363 = vpop.xlane.xlu0 %362
        %v364 = vsel %vm345, %v287, 0.0
        %365 = vadd.xlane.f32.xlu0 %v364
        %v366 = vpop.xlane.xlu0 %365
        %v367 = vsel %vm345, %v288, 0.0
        %368 = vadd.xlane.f32.xlu0 %v367
        %v369 = vpop.xlane.xlu0 %368
        %v370 = vsel %vm345, %v289, 0.0
        %371 = vadd.xlane.f32.xlu0 %v370
        %v372 = vpop.xlane.xlu0 %371
        %v373 = vsel %vm345, %v290, 0.0
        %374 = vadd.xlane.f32.xlu0 %v373
        %v375 = vpop.xlane.xlu0 %374
        %v376 = vsel %vm345, %v291, 0.0
        %377 = vadd.xlane.f32.xlu0 %v376
        %v378 = vpop.xlane.xlu0 %377
        %v379 = vsel %vm345, %v292, 0.0
        %380 = vadd.xlane.f32.xlu0 %v379
        %v381 = vpop.xlane.xlu0 %380
        %v382 = vsel %vm345, %v293, 0.0
        %383 = vadd.xlane.f32.xlu0 %v382
        %v384 = vpop.xlane.xlu0 %383
        %v385 = vsel %vm345, %v294, 0.0
        %386 = vadd.xlane.f32.xlu0 %v385
        %v387 = vpop.xlane.xlu0 %386
        %v388 = vsel %vm345, %v295, 0.0
        %389 = vadd.xlane.f32.xlu0 %v388
        %v390 = vpop.xlane.xlu0 %389
        %v391 = vsel %vm345, %v296, 0.0
        %392 = vadd.xlane.f32.xlu0 %v391
        %v393 = vpop.xlane.xlu0 %392
        %v394 = vsel %vm345, %v297, 0.0
        %395 = vadd.xlane.f32.xlu0 %v394
        %v396 = vpop.xlane.xlu0 %395
        %v397 = vsel %vm345, %v298, 0.0
        %398 = vadd.xlane.f32.xlu0 %v397
        %v399 = vpop.xlane.xlu0 %398
        %v400 = vsel %vm345, %v299, 0.0
        %401 = vadd.xlane.f32.xlu0 %v400
        %v402 = vpop.xlane.xlu0 %401
        %v403 = vsel %vm345, %v300, 0.0
        %404 = vadd.xlane.f32.xlu0 %v403
        %v405 = vpop.xlane.xlu0 %404
        %v406 = vsel %vm345, %v301, 0.0
        %407 = vadd.xlane.f32.xlu0 %v406
        %v408 = vpop.xlane.xlu0 %407
        %v409 = vsel %vm345, %v302, 0.0
        %410 = vadd.xlane.f32.xlu0 %v409
        %v411 = vpop.xlane.xlu0 %410
        %v412 = vsel %vm345, %v303, 0.0
        %413 = vadd.xlane.f32.xlu0 %v412
        %v414 = vpop.xlane.xlu0 %413
        %v415 = vsel %vm345, %v304, 0.0
        %416 = vadd.xlane.f32.xlu0 %v415
        %v417 = vpop.xlane.xlu0 %416
        %v418 = vsel %vm345, %v305, 0.0
        %419 = vadd.xlane.f32.xlu0 %v418
        %v420 = vpop.xlane.xlu0 %419
        %v421 = vsel %vm345, %v306, 0.0
        %422 = vadd.xlane.f32.xlu0 %v421
        %v423 = vpop.xlane.xlu0 %422
        %v424 = vsel %vm345, %v307, 0.0
        %425 = vadd.xlane.f32.xlu0 %v424
        %v426 = vpop.xlane.xlu0 %425
        %v427 = vsel %vm345, %v308, 0.0
        %428 = vadd.xlane.f32.xlu0 %v427
        %v429 = vpop.xlane.xlu0 %428
        %v430 = vsel %vm345, %v309, 0.0
        %431 = vadd.xlane.f32.xlu0 %v430
        %v432 = vpop.xlane.xlu0 %431
        %v433 = vsel %vm345, %v310, 0.0
        %434 = vadd.xlane.f32.xlu0 %v433
        %v435 = vpop.xlane.xlu0 %434
        %v436 = vsel %vm345, %v311, 0.0
        %437 = vadd.xlane.f32.xlu0 %v436
        %v438 = vpop.xlane.xlu0 %437
        %v439 = vsel %vm345, %v312, 0.0
        %440 = vadd.xlane.f32.xlu0 %v439
        %v441 = vpop.xlane.xlu0 %440
        %v442 = vrcp.pop 8.0
        %v443 = vmul.f32 8.0, %v442
        %v444 = vsub.f32 1.0, %v443
        %v445 = vmul.f32 %v442, %v444
        %v446 = vadd.f32 %v442, %v445
        %vm447 = vweird.f32 %v442
        %v448 = vsel %vm447, %v442, %v446
        %v449 = vmul.f32 %v348, %v448
        %v450 = vmul.f32 %v351, %v448
        %v451 = vmul.f32 %v354, %v448
        %v452 = vmul.f32 %v357, %v448
        %v453 = vmul.f32 %v360, %v448
        %v454 = vmul.f32 %v363, %v448
        %v455 = vmul.f32 %v366, %v448
        %v456 = vmul.f32 %v369, %v448
        %v457 = vmul.f32 %v372, %v448
        %v458 = vmul.f32 %v375, %v448
        %v459 = vmul.f32 %v378, %v448
        %v460 = vmul.f32 %v381, %v448
        %v461 = vmul.f32 %v384, %v448
        %v462 = vmul.f32 %v387, %v448
        %v463 = vmul.f32 %v390, %v448
        %v464 = vmul.f32 %v393, %v448
        %v465 = vmul.f32 %v396, %v448
        %v466 = vmul.f32 %v399, %v448
        %v467 = vmul.f32 %v402, %v448
        %v468 = vmul.f32 %v405, %v448
        %v469 = vmul.f32 %v408, %v448
        %v470 = vmul.f32 %v411, %v448
        %v471 = vmul.f32 %v414, %v448
        %v472 = vmul.f32 %v417, %v448
        %v473 = vmul.f32 %v420, %v448
        %v474 = vmul.f32 %v423, %v448
        %v475 = vmul.f32 %v426, %v448
        %v476 = vmul.f32 %v429, %v448
        %v477 = vmul.f32 %v432, %v448
        %v478 = vmul.f32 %v435, %v448
        %v479 = vmul.f32 %v438, %v448
        %v480 = vmul.f32 %v441, %v448
        %v481 = vsub.f32 %v281, %v449
        %v482 = vsub.f32 %v282, %v450
        %v483 = vsub.f32 %v283, %v451
        %v484 = vsub.f32 %v284, %v452
        %v485 = vsub.f32 %v285, %v453
        %v486 = vsub.f32 %v286, %v454
        %v487 = vsub.f32 %v287, %v455
        %v488 = vsub.f32 %v288, %v456
        %v489 = vsub.f32 %v289, %v457
        %v490 = vsub.f32 %v290, %v458
        %v491 = vsub.f32 %v291, %v459
        %v492 = vsub.f32 %v292, %v460
        %v493 = vsub.f32 %v293, %v461
        %v494 = vsub.f32 %v294, %v462
        %v495 = vsub.f32 %v295, %v463
        %v496 = vsub.f32 %v296, %v464
        %v497 = vsub.f32 %v297, %v465
        %v498 = vsub.f32 %v298, %v466
        %v499 = vsub.f32 %v299, %v467
        %v500 = vsub.f32 %v300, %v468
        %v501 = vsub.f32 %v301, %v469
        %v502 = vsub.f32 %v302, %v470
        %v503 = vsub.f32 %v303, %v471
        %v504 = vsub.f32 %v304, %v472
        %v505 = vsub.f32 %v305, %v473
        %v506 = vsub.f32 %v306, %v474
        %v507 = vsub.f32 %v307, %v475
        %v508 = vsub.f32 %v308, %v476
        %v509 = vsub.f32 %v309, %v477
        %v510 = vsub.f32 %v310, %v478
        %v511 = vsub.f32 %v311, %v479
        %v512 = vsub.f32 %v312, %v480
        %v513 = vmul.f32 %v481, %v481
        %v514 = vmul.f32 %v482, %v482
        %v515 = vmul.f32 %v483, %v483
        %v516 = vmul.f32 %v484, %v484
        %v517 = vmul.f32 %v485, %v485
        %v518 = vmul.f32 %v486, %v486
        %v519 = vmul.f32 %v487, %v487
        %v520 = vmul.f32 %v488, %v488
        %v521 = vmul.f32 %v489, %v489
        %v522 = vmul.f32 %v490, %v490
        %v523 = vmul.f32 %v491, %v491
        %v524 = vmul.f32 %v492, %v492
        %v525 = vmul.f32 %v493, %v493
        %v526 = vmul.f32 %v494, %v494
        %v527 = vmul.f32 %v495, %v495
        %v528 = vmul.f32 %v496, %v496
        %v529 = vmul.f32 %v497, %v497
        %v530 = vmul.f32 %v498, %v498
        %v531 = vmul.f32 %v499, %v499
        %v532 = vmul.f32 %v500, %v500
        %v533 = vmul.f32 %v501, %v501
        %v534 = vmul.f32 %v502, %v502
        %v535 = vmul.f32 %v503, %v503
        %v536 = vmul.f32 %v504, %v504
        %v537 = vmul.f32 %v505, %v505
        %v538 = vmul.f32 %v506, %v506
        %v539 = vmul.f32 %v507, %v507
        %v540 = vmul.f32 %v508, %v508
        %v541 = vmul.f32 %v509, %v509
        %v542 = vmul.f32 %v510, %v510
        %v543 = vmul.f32 %v511, %v511
        %v544 = vmul.f32 %v512, %v512
        %v545 = vsel %vm345, %v513, 0.0
        %546 = vadd.xlane.f32.xlu0 %v545
        %v547 = vpop.xlane.xlu0 %546
        %v548 = vsel %vm345, %v514, 0.0
        %549 = vadd.xlane.f32.xlu0 %v548
        %v550 = vpop.xlane.xlu0 %549
        %v551 = vsel %vm345, %v515, 0.0
        %552 = vadd.xlane.f32.xlu0 %v551
        %v553 = vpop.xlane.xlu0 %552
        %v554 = vsel %vm345, %v516, 0.0
        %555 = vadd.xlane.f32.xlu0 %v554
        %v556 = vpop.xlane.xlu0 %555
        %v557 = vsel %vm345, %v517, 0.0
        %558 = vadd.xlane.f32.xlu0 %v557
        %v559 = vpop.xlane.xlu0 %558
        %v560 = vsel %vm345, %v518, 0.0
        %561 = vadd.xlane.f32.xlu0 %v560
        %v562 = vpop.xlane.xlu0 %561
        %v563 = vsel %vm345, %v519, 0.0
        %564 = vadd.xlane.f32.xlu0 %v563
        %v565 = vpop.xlane.xlu0 %564
        %v566 = vsel %vm345, %v520, 0.0
        %567 = vadd.xlane.f32.xlu0 %v566
        %v568 = vpop.xlane.xlu0 %567
        %v569 = vsel %vm345, %v521, 0.0
        %570 = vadd.xlane.f32.xlu0 %v569
        %v571 = vpop.xlane.xlu0 %570
        %v572 = vsel %vm345, %v522, 0.0
        %573 = vadd.xlane.f32.xlu0 %v572
        %v574 = vpop.xlane.xlu0 %573
        %v575 = vsel %vm345, %v523, 0.0
        %576 = vadd.xlane.f32.xlu0 %v575
        %v577 = vpop.xlane.xlu0 %576
        %v578 = vsel %vm345, %v524, 0.0
        %579 = vadd.xlane.f32.xlu0 %v578
        %v580 = vpop.xlane.xlu0 %579
        %v581 = vsel %vm345, %v525, 0.0
        %582 = vadd.xlane.f32.xlu0 %v581
        %v583 = vpop.xlane.xlu0 %582
        %v584 = vsel %vm345, %v526, 0.0
        %585 = vadd.xlane.f32.xlu0 %v584
        %v586 = vpop.xlane.xlu0 %585
        %v587 = vsel %vm345, %v527, 0.0
        %588 = vadd.xlane.f32.xlu0 %v587
        %v589 = vpop.xlane.xlu0 %588
        %v590 = vsel %vm345, %v528, 0.0
        %591 = vadd.xlane.f32.xlu0 %v590
        %v592 = vpop.xlane.xlu0 %591
        %v593 = vsel %vm345, %v529, 0.0
        %594 = vadd.xlane.f32.xlu0 %v593
        %v595 = vpop.xlane.xlu0 %594
        %v596 = vsel %vm345, %v530, 0.0
        %597 = vadd.xlane.f32.xlu0 %v596
        %v598 = vpop.xlane.xlu0 %597
        %v599 = vsel %vm345, %v531, 0.0
        %600 = vadd.xlane.f32.xlu0 %v599
        %v601 = vpop.xlane.xlu0 %600
        %v602 = vsel %vm345, %v532, 0.0
        %603 = vadd.xlane.f32.xlu0 %v602
        %v604 = vpop.xlane.xlu0 %603
        %v605 = vsel %vm345, %v533, 0.0
        %606 = vadd.xlane.f32.xlu0 %v605
        %v607 = vpop.xlane.xlu0 %606
        %v608 = vsel %vm345, %v534, 0.0
        %609 = vadd.xlane.f32.xlu0 %v608
        %v610 = vpop.xlane.xlu0 %609
        %v611 = vsel %vm345, %v535, 0.0
        %612 = vadd.xlane.f32.xlu0 %v611
        %v613 = vpop.xlane.xlu0 %612
        %v614 = vsel %vm345, %v536, 0.0
        %615 = vadd.xlane.f32.xlu0 %v614
        %v616 = vpop.xlane.xlu0 %615
        %v617 = vsel %vm345, %v537, 0.0
        %618 = vadd.xlane.f32.xlu0 %v617
        %v619 = vpop.xlane.xlu0 %618
        %v620 = vsel %vm345, %v538, 0.0
        %621 = vadd.xlane.f32.xlu0 %v620
        %v622 = vpop.xlane.xlu0 %621
        %v623 = vsel %vm345, %v539, 0.0
        %624 = vadd.xlane.f32.xlu0 %v623
        %v625 = vpop.xlane.xlu0 %624
        %v626 = vsel %vm345, %v540, 0.0
        %627 = vadd.xlane.f32.xlu0 %v626
        %v628 = vpop.xlane.xlu0 %627
        %v629 = vsel %vm345, %v541, 0.0
        %630 = vadd.xlane.f32.xlu0 %v629
        %v631 = vpop.xlane.xlu0 %630
        %v632 = vsel %vm345, %v542, 0.0
        %633 = vadd.xlane.f32.xlu0 %v632
        %v634 = vpop.xlane.xlu0 %633
        %v635 = vsel %vm345, %v543, 0.0
        %636 = vadd.xlane.f32.xlu0 %v635
        %v637 = vpop.xlane.xlu0 %636
        %v638 = vsel %vm345, %v544, 0.0
        %639 = vadd.xlane.f32.xlu0 %v638
        %v640 = vpop.xlane.xlu0 %639
        %v641 = vmul.f32 %v547, %v448
        %v642 = vmul.f32 %v550, %v448
        %v643 = vmul.f32 %v553, %v448
        %v644 = vmul.f32 %v556, %v448
        %v645 = vmul.f32 %v559, %v448
        %v646 = vmul.f32 %v562, %v448
        %v647 = vmul.f32 %v565, %v448
        %v648 = vmul.f32 %v568, %v448
        %v649 = vmul.f32 %v571, %v448
        %v650 = vmul.f32 %v574, %v448
        %v651 = vmul.f32 %v577, %v448
        %v652 = vmul.f32 %v580, %v448
        %v653 = vmul.f32 %v583, %v448
        %v654 = vmul.f32 %v586, %v448
        %v655 = vmul.f32 %v589, %v448
        %v656 = vmul.f32 %v592, %v448
        %v657 = vmul.f32 %v595, %v448
        %v658 = vmul.f32 %v598, %v448
        %v659 = vmul.f32 %v601, %v448
        %v660 = vmul.f32 %v604, %v448
        %v661 = vmul.f32 %v607, %v448
        %v662 = vmul.f32 %v610, %v448
        %v663 = vmul.f32 %v613, %v448
        %v664 = vmul.f32 %v616, %v448
        %v665 = vmul.f32 %v619, %v448
        %v666 = vmul.f32 %v622, %v448
        %v667 = vmul.f32 %v625, %v448
        %v668 = vmul.f32 %v628, %v448
        %v669 = vmul.f32 %v631, %v448
        %v670 = vmul.f32 %v634, %v448
        %v671 = vmul.f32 %v637, %v448
        %v672 = vmul.f32 %v640, %v448
        %v673 = vadd.f32 %v641, 1e-06
        %v674 = vadd.f32 %v642, 1e-06
        %v675 = vadd.f32 %v643, 1e-06
        %v676 = vadd.f32 %v644, 1e-06
        %v677 = vadd.f32 %v645, 1e-06
        %v678 = vadd.f32 %v646, 1e-06
        %v679 = vadd.f32 %v647, 1e-06
        %v680 = vadd.f32 %v648, 1e-06
        %v681 = vadd.f32 %v649, 1e-06
        %v682 = vadd.f32 %v650, 1e-06
        %v683 = vadd.f32 %v651, 1e-06
        %v684 = vadd.f32 %v652, 1e-06
        %v685 = vadd.f32 %v653, 1e-06
        %v686 = vadd.f32 %v654, 1e-06
        %v687 = vadd.f32 %v655, 1e-06
        %v688 = vadd.f32 %v656, 1e-06
        %v689 = vadd.f32 %v657, 1e-06
        %v690 = vadd.f32 %v658, 1e-06
        %v691 = vadd.f32 %v659, 1e-06
        %v692 = vadd.f32 %v660, 1e-06
        %v693 = vadd.f32 %v661, 1e-06
        %v694 = vadd.f32 %v662, 1e-06
        %v695 = vadd.f32 %v663, 1e-06
        %v696 = vadd.f32 %v664, 1e-06
        %v697 = vadd.f32 %v665, 1e-06
        %v698 = vadd.f32 %v666, 1e-06
        %v699 = vadd.f32 %v667, 1e-06
        %v700 = vadd.f32 %v668, 1e-06
        %v701 = vadd.f32 %v669, 1e-06
        %v702 = vadd.f32 %v670, 1e-06
        %v703 = vadd.f32 %v671, 1e-06
        %v704 = vadd.f32 %v672, 1e-06
        %v705 = vrsqrt.pop %v673
        %v706 = vmul.f32 %v705, %v673
        %v707 = vmul.f32 %v706, %v705
        %v708 = vmul.f32 0.5, %v707
        %v709 = vsub.f32 1.5, %v708
        %v710 = vmul.f32 %v705, %v709
        %vm711 = vweird.f32 %v673
        %vm712 = vweird.f32 %v705
        %vm713 = vmor %vm711, %vm712
        %v714 = vsel %vm713, %v705, %v710
        %v715 = vrsqrt.pop %v674
        %v716 = vmul.f32 %v715, %v674
        %v717 = vmul.f32 %v716, %v715
        %v718 = vmul.f32 0.5, %v717
        %v719 = vsub.f32 1.5, %v718
        %v720 = vmul.f32 %v715, %v719
        %vm721 = vweird.f32 %v674
        %vm722 = vweird.f32 %v715
        %vm723 = vmor %vm721, %vm722
        %v724 = vsel %vm723, %v715, %v720
        %v725 = vrsqrt.pop %v675
        %v726 = vmul.f32 %v725, %v675
        %v727 = vmul.f32 %v726, %v725
        %v728 = vmul.f32 0.5, %v727
        %v729 = vsub.f32 1.5, %v728
        %v730 = vmul.f32 %v725, %v729
        %vm731 = vweird.f32 %v675
        %vm732 = vweird.f32 %v725
        %vm733 = vmor %vm731, %vm732
        %v734 = vsel %vm733, %v725, %v730
        %v735 = vrsqrt.pop %v676
        %v736 = vmul.f32 %v735, %v676
        %v737 = vmul.f32 %v736, %v735
        %v738 = vmul.f32 0.5, %v737
        %v739 = vsub.f32 1.5, %v738
        %v740 = vmul.f32 %v735, %v739
        %vm741 = vweird.f32 %v676
        %vm742 = vweird.f32 %v735
        %vm743 = vmor %vm741, %vm742
        %v744 = vsel %vm743, %v735, %v740
        %v745 = vrsqrt.pop %v677
        %v746 = vmul.f32 %v745, %v677
        %v747 = vmul.f32 %v746, %v745
        %v748 = vmul.f32 0.5, %v747
        %v749 = vsub.f32 1.5, %v748
        %v750 = vmul.f32 %v745, %v749
        %vm751 = vweird.f32 %v677
        %vm752 = vweird.f32 %v745
        %vm753 = vmor %vm751, %vm752
        %v754 = vsel %vm753, %v745, %v750
        %v755 = vrsqrt.pop %v678
        %v756 = vmul.f32 %v755, %v678
        %v757 = vmul.f32 %v756, %v755
        %v758 = vmul.f32 0.5, %v757
        %v759 = vsub.f32 1.5, %v758
        %v760 = vmul.f32 %v755, %v759
        %vm761 = vweird.f32 %v678
        %vm762 = vweird.f32 %v755
        %vm763 = vmor %vm761, %vm762
        %v764 = vsel %vm763, %v755, %v760
        %v765 = vrsqrt.pop %v679
        %v766 = vmul.f32 %v765, %v679
        %v767 = vmul.f32 %v766, %v765
        %v768 = vmul.f32 0.5, %v767
        %v769 = vsub.f32 1.5, %v768
        %v770 = vmul.f32 %v765, %v769
        %vm771 = vweird.f32 %v679
        %vm772 = vweird.f32 %v765
        %vm773 = vmor %vm771, %vm772
        %v774 = vsel %vm773, %v765, %v770
        %v775 = vrsqrt.pop %v680
        %v776 = vmul.f32 %v775, %v680
        %v777 = vmul.f32 %v776, %v775
        %v778 = vmul.f32 0.5, %v777
        %v779 = vsub.f32 1.5, %v778
        %v780 = vmul.f32 %v775, %v779
        %vm781 = vweird.f32 %v680
        %vm782 = vweird.f32 %v775
        %vm783 = vmor %vm781, %vm782
        %v784 = vsel %vm783, %v775, %v780
        %v785 = vrsqrt.pop %v681
        %v786 = vmul.f32 %v785, %v681
        %v787 = vmul.f32 %v786, %v785
        %v788 = vmul.f32 0.5, %v787
        %v789 = vsub.f32 1.5, %v788
        %v790 = vmul.f32 %v785, %v789
        %vm791 = vweird.f32 %v681
        %vm792 = vweird.f32 %v785
        %vm793 = vmor %vm791, %vm792
        %v794 = vsel %vm793, %v785, %v790
        %v795 = vrsqrt.pop %v682
        %v796 = vmul.f32 %v795, %v682
        %v797 = vmul.f32 %v796, %v795
        %v798 = vmul.f32 0.5, %v797
        %v799 = vsub.f32 1.5, %v798
        %v800 = vmul.f32 %v795, %v799
        %vm801 = vweird.f32 %v682
        %vm802 = vweird.f32 %v795
        %vm803 = vmor %vm801, %vm802
        %v804 = vsel %vm803, %v795, %v800
        %v805 = vrsqrt.pop %v683
        %v806 = vmul.f32 %v805, %v683
        %v807 = vmul.f32 %v806, %v805
        %v808 = vmul.f32 0.5, %v807
        %v809 = vsub.f32 1.5, %v808
        %v810 = vmul.f32 %v805, %v809
        %vm811 = vweird.f32 %v683
        %vm812 = vweird.f32 %v805
        %vm813 = vmor %vm811, %vm812
        %v814 = vsel %vm813, %v805, %v810
        %v815 = vrsqrt.pop %v684
        %v816 = vmul.f32 %v815, %v684
        %v817 = vmul.f32 %v816, %v815
        %v818 = vmul.f32 0.5, %v817
        %v819 = vsub.f32 1.5, %v818
        %v820 = vmul.f32 %v815, %v819
        %vm821 = vweird.f32 %v684
        %vm822 = vweird.f32 %v815
        %vm823 = vmor %vm821, %vm822
        %v824 = vsel %vm823, %v815, %v820
        %v825 = vrsqrt.pop %v685
        %v826 = vmul.f32 %v825, %v685
        %v827 = vmul.f32 %v826, %v825
        %v828 = vmul.f32 0.5, %v827
        %v829 = vsub.f32 1.5, %v828
        %v830 = vmul.f32 %v825, %v829
        %vm831 = vweird.f32 %v685
        %vm832 = vweird.f32 %v825
        %vm833 = vmor %vm831, %vm832
        %v834 = vsel %vm833, %v825, %v830
        %v835 = vrsqrt.pop %v686
        %v836 = vmul.f32 %v835, %v686
        %v837 = vmul.f32 %v836, %v835
        %v838 = vmul.f32 0.5, %v837
        %v839 = vsub.f32 1.5, %v838
        %v840 = vmul.f32 %v835, %v839
        %vm841 = vweird.f32 %v686
        %vm842 = vweird.f32 %v835
        %vm843 = vmor %vm841, %vm842
        %v844 = vsel %vm843, %v835, %v840
        %v845 = vrsqrt.pop %v687
        %v846 = vmul.f32 %v845, %v687
        %v847 = vmul.f32 %v846, %v845
        %v848 = vmul.f32 0.5, %v847
        %v849 = vsub.f32 1.5, %v848
        %v850 = vmul.f32 %v845, %v849
        %vm851 = vweird.f32 %v687
        %vm852 = vweird.f32 %v845
        %vm853 = vmor %vm851, %vm852
        %v854 = vsel %vm853, %v845, %v850
        %v855 = vrsqrt.pop %v688
        %v856 = vmul.f32 %v855, %v688
        %v857 = vmul.f32 %v856, %v855
        %v858 = vmul.f32 0.5, %v857
        %v859 = vsub.f32 1.5, %v858
        %v860 = vmul.f32 %v855, %v859
        %vm861 = vweird.f32 %v688
        %vm862 = vweird.f32 %v855
        %vm863 = vmor %vm861, %vm862
        %v864 = vsel %vm863, %v855, %v860
        %v865 = vrsqrt.pop %v689
        %v866 = vmul.f32 %v865, %v689
        %v867 = vmul.f32 %v866, %v865
        %v868 = vmul.f32 0.5, %v867
        %v869 = vsub.f32 1.5, %v868
        %v870 = vmul.f32 %v865, %v869
        %vm871 = vweird.f32 %v689
        %vm872 = vweird.f32 %v865
        %vm873 = vmor %vm871, %vm872
        %v874 = vsel %vm873, %v865, %v870
        %v875 = vrsqrt.pop %v690
        %v876 = vmul.f32 %v875, %v690
        %v877 = vmul.f32 %v876, %v875
        %v878 = vmul.f32 0.5, %v877
        %v879 = vsub.f32 1.5, %v878
        %v880 = vmul.f32 %v875, %v879
        %vm881 = vweird.f32 %v690
        %vm882 = vweird.f32 %v875
        %vm883 = vmor %vm881, %vm882
        %v884 = vsel %vm883, %v875, %v880
        %v885 = vrsqrt.pop %v691
        %v886 = vmul.f32 %v885, %v691
        %v887 = vmul.f32 %v886, %v885
        %v888 = vmul.f32 0.5, %v887
        %v889 = vsub.f32 1.5, %v888
        %v890 = vmul.f32 %v885, %v889
        %vm891 = vweird.f32 %v691
        %vm892 = vweird.f32 %v885
        %vm893 = vmor %vm891, %vm892
        %v894 = vsel %vm893, %v885, %v890
        %v895 = vrsqrt.pop %v692
        %v896 = vmul.f32 %v895, %v692
        %v897 = vmul.f32 %v896, %v895
        %v898 = vmul.f32 0.5, %v897
        %v899 = vsub.f32 1.5, %v898
        %v900 = vmul.f32 %v895, %v899
        %vm901 = vweird.f32 %v692
        %vm902 = vweird.f32 %v895
        %vm903 = vmor %vm901, %vm902
        %v904 = vsel %vm903, %v895, %v900
        %v905 = vrsqrt.pop %v693
        %v906 = vmul.f32 %v905, %v693
        %v907 = vmul.f32 %v906, %v905
        %v908 = vmul.f32 0.5, %v907
        %v909 = vsub.f32 1.5, %v908
        %v910 = vmul.f32 %v905, %v909
        %vm911 = vweird.f32 %v693
        %vm912 = vweird.f32 %v905
        %vm913 = vmor %vm911, %vm912
        %v914 = vsel %vm913, %v905, %v910
        %v915 = vrsqrt.pop %v694
        %v916 = vmul.f32 %v915, %v694
        %v917 = vmul.f32 %v916, %v915
        %v918 = vmul.f32 0.5, %v917
        %v919 = vsub.f32 1.5, %v918
        %v920 = vmul.f32 %v915, %v919
        %vm921 = vweird.f32 %v694
        %vm922 = vweird.f32 %v915
        %vm923 = vmor %vm921, %vm922
        %v924 = vsel %vm923, %v915, %v920
        %v925 = vrsqrt.pop %v695
        %v926 = vmul.f32 %v925, %v695
        %v927 = vmul.f32 %v926, %v925
        %v928 = vmul.f32 0.5, %v927
        %v929 = vsub.f32 1.5, %v928
        %v930 = vmul.f32 %v925, %v929
        %vm931 = vweird.f32 %v695
        %vm932 = vweird.f32 %v925
        %vm933 = vmor %vm931, %vm932
        %v934 = vsel %vm933, %v925, %v930
        %v935 = vrsqrt.pop %v696
        %v936 = vmul.f32 %v935, %v696
        %v937 = vmul.f32 %v936, %v935
        %v938 = vmul.f32 0.5, %v937
        %v939 = vsub.f32 1.5, %v938
        %v940 = vmul.f32 %v935, %v939
        %vm941 = vweird.f32 %v696
        %vm942 = vweird.f32 %v935
        %vm943 = vmor %vm941, %vm942
        %v944 = vsel %vm943, %v935, %v940
        %v945 = vrsqrt.pop %v697
        %v946 = vmul.f32 %v945, %v697
        %v947 = vmul.f32 %v946, %v945
        %v948 = vmul.f32 0.5, %v947
        %v949 = vsub.f32 1.5, %v948
        %v950 = vmul.f32 %v945, %v949
        %vm951 = vweird.f32 %v697
        %vm952 = vweird.f32 %v945
        %vm953 = vmor %vm951, %vm952
        %v954 = vsel %vm953, %v945, %v950
        %v955 = vrsqrt.pop %v698
        %v956 = vmul.f32 %v955, %v698
        %v957 = vmul.f32 %v956, %v955
        %v958 = vmul.f32 0.5, %v957
        %v959 = vsub.f32 1.5, %v958
        %v960 = vmul.f32 %v955, %v959
        %vm961 = vweird.f32 %v698
        %vm962 = vweird.f32 %v955
        %vm963 = vmor %vm961, %vm962
        %v964 = vsel %vm963, %v955, %v960
        %v965 = vrsqrt.pop %v699
        %v966 = vmul.f32 %v965, %v699
        %v967 = vmul.f32 %v966, %v965
        %v968 = vmul.f32 0.5, %v967
        %v969 = vsub.f32 1.5, %v968
        %v970 = vmul.f32 %v965, %v969
        %vm971 = vweird.f32 %v699
        %vm972 = vweird.f32 %v965
        %vm973 = vmor %vm971, %vm972
        %v974 = vsel %vm973, %v965, %v970
        %v975 = vrsqrt.pop %v700
        %v976 = vmul.f32 %v975, %v700
        %v977 = vmul.f32 %v976, %v975
        %v978 = vmul.f32 0.5, %v977
        %v979 = vsub.f32 1.5, %v978
        %v980 = vmul.f32 %v975, %v979
        %vm981 = vweird.f32 %v700
        %vm982 = vweird.f32 %v975
        %vm983 = vmor %vm981, %vm982
        %v984 = vsel %vm983, %v975, %v980
        %v985 = vrsqrt.pop %v701
        %v986 = vmul.f32 %v985, %v701
        %v987 = vmul.f32 %v986, %v985
        %v988 = vmul.f32 0.5, %v987
        %v989 = vsub.f32 1.5, %v988
        %v990 = vmul.f32 %v985, %v989
        %vm991 = vweird.f32 %v701
        %vm992 = vweird.f32 %v985
        %vm993 = vmor %vm991, %vm992
        %v994 = vsel %vm993, %v985, %v990
        %v995 = vrsqrt.pop %v702
        %v996 = vmul.f32 %v995, %v702
        %v997 = vmul.f32 %v996, %v995
        %v998 = vmul.f32 0.5, %v997
        %v999 = vsub.f32 1.5, %v998
        %v1000 = vmul.f32 %v995, %v999
        %vm1001 = vweird.f32 %v702
        %vm1002 = vweird.f32 %v995
        %vm1003 = vmor %vm1001, %vm1002
        %v1004 = vsel %vm1003, %v995, %v1000
        %v1005 = vrsqrt.pop %v703
        %v1006 = vmul.f32 %v1005, %v703
        %v1007 = vmul.f32 %v1006, %v1005
        %v1008 = vmul.f32 0.5, %v1007
        %v1009 = vsub.f32 1.5, %v1008
        %v1010 = vmul.f32 %v1005, %v1009
        %vm1011 = vweird.f32 %v703
        %vm1012 = vweird.f32 %v1005
        %vm1013 = vmor %vm1011, %vm1012
        %v1014 = vsel %vm1013, %v1005, %v1010
        %v1015 = vrsqrt.pop %v704
        %v1016 = vmul.f32 %v1015, %v704
        %v1017 = vmul.f32 %v1016, %v1015
        %v1018 = vmul.f32 0.5, %v1017
        %v1019 = vsub.f32 1.5, %v1018
        %v1020 = vmul.f32 %v1015, %v1019
        %vm1021 = vweird.f32 %v704
        %vm1022 = vweird.f32 %v1015
        %vm1023 = vmor %vm1021, %vm1022
        %v1024 = vsel %vm1023, %v1015, %v1020
        %v1025 = vmul.f32 %v481, %v714
        %v1026 = vmul.f32 %v482, %v724
        %v1027 = vmul.f32 %v483, %v734
        %v1028 = vmul.f32 %v484, %v744
        %v1029 = vmul.f32 %v485, %v754
        %v1030 = vmul.f32 %v486, %v764
        %v1031 = vmul.f32 %v487, %v774
        %v1032 = vmul.f32 %v488, %v784
        %v1033 = vmul.f32 %v489, %v794
        %v1034 = vmul.f32 %v490, %v804
        %v1035 = vmul.f32 %v491, %v814
        %v1036 = vmul.f32 %v492, %v824
        %v1037 = vmul.f32 %v493, %v834
        %v1038 = vmul.f32 %v494, %v844
        %v1039 = vmul.f32 %v495, %v854
        %v1040 = vmul.f32 %v496, %v864
        %v1041 = vmul.f32 %v497, %v874
        %v1042 = vmul.f32 %v498, %v884
        %v1043 = vmul.f32 %v499, %v894
        %v1044 = vmul.f32 %v500, %v904
        %v1045 = vmul.f32 %v501, %v914
        %v1046 = vmul.f32 %v502, %v924
        %v1047 = vmul.f32 %v503, %v934
        %v1048 = vmul.f32 %v504, %v944
        %v1049 = vmul.f32 %v505, %v954
        %v1050 = vmul.f32 %v506, %v964
        %v1051 = vmul.f32 %v507, %v974
        %v1052 = vmul.f32 %v508, %v984
        %v1053 = vmul.f32 %v509, %v994
        %v1054 = vmul.f32 %v510, %v1004
        %v1055 = vmul.f32 %v511, %v1014
        %v1056 = vmul.f32 %v512, %v1024
        %v1057 = vld [vmem:[%s5] sm:$0x1]
        %v1058 = vld [vmem:[%s2] sm:$0xff]
        %v1060 = vperm.slane %v1057, 0
        %v1063 = vsel %vm345, %v1025, 0
        %v1066 = vsel %vm345, %v1026, 0
        %v1069 = vsel %vm345, %v1027, 0
        %v1072 = vsel %vm345, %v1028, 0
        %v1075 = vsel %vm345, %v1029, 0
        %v1078 = vsel %vm345, %v1030, 0
        %v1081 = vsel %vm345, %v1031, 0
        %v1084 = vsel %vm345, %v1032, 0
        %v1087 = vsel %vm345, %v1033, 0
        %v1090 = vsel %vm345, %v1034, 0
        %v1093 = vsel %vm345, %v1035, 0
        %v1096 = vsel %vm345, %v1036, 0
        %v1099 = vsel %vm345, %v1037, 0
        %v1102 = vsel %vm345, %v1038, 0
        %v1105 = vsel %vm345, %v1039, 0
        %v1108 = vsel %vm345, %v1040, 0
        %v1111 = vsel %vm345, %v1041, 0
        %v1114 = vsel %vm345, %v1042, 0
        %v1117 = vsel %vm345, %v1043, 0
        %v1120 = vsel %vm345, %v1044, 0
        %v1123 = vsel %vm345, %v1045, 0
        %v1126 = vsel %vm345, %v1046, 0
        %v1129 = vsel %vm345, %v1047, 0
        %v1132 = vsel %vm345, %v1048, 0
        %v1135 = vsel %vm345, %v1049, 0
        %v1138 = vsel %vm345, %v1050, 0
        %v1141 = vsel %vm345, %v1051, 0
        %v1144 = vsel %vm345, %v1052, 0
        %v1147 = vsel %vm345, %v1053, 0
        %v1150 = vsel %vm345, %v1054, 0
        %v1153 = vsel %vm345, %v1055, 0
        %v1156 = vsel %vm345, %v1056, 0
        %1158 = vmatpush.msra.mxu0 0.0
        %1159 = vmatpush.msra.mxu0 0.0
        %1160 = vmatpush.msra.mxu0 0.0
        %1161 = vmatpush.msra.mxu0 0.0
        %1162 = vmatpush.msra.mxu0 0.0
        %1163 = vmatpush.msra.mxu0 0.0
        %1164 = vmatpush.msra.mxu0 0.0
        %1165 = vmatpush.msra.mxu0 0.0
        %1166 = vmatpush.msra.mxu0 0.0
        %1167 = vmatpush.msra.mxu0 0.0
        %1168 = vmatpush.msra.mxu0 0.0
        %1169 = vmatpush.msra.mxu0 0.0
        %1170 = vmatpush.msra.mxu0 0.0
        %1171 = vmatpush.msra.mxu0 0.0
        %1172 = vmatpush.msra.mxu0 0.0
        %1173 = vmatpush.msra.mxu0 %v1058
        %1174 = vmatmul.f32.gmra.mxu0 %v1063
        %v1175 = vpop.f32.mrf.mxu0
        %v1176 = vadd.f32 %v1060, %v1175
        %1177 = vmatmul.f32.gmra.mxu0 %v1066
        %v1178 = vpop.f32.mrf.mxu0
        %v1179 = vadd.f32 %v1060, %v1178
        %1180 = vmatmul.f32.gmra.mxu0 %v1069
        %v1181 = vpop.f32.mrf.mxu0
        %v1182 = vadd.f32 %v1060, %v1181
        %1183 = vmatmul.f32.gmra.mxu0 %v1072
        %v1184 = vpop.f32.mrf.mxu0
        %v1185 = vadd.f32 %v1060, %v1184
        %1186 = vmatmul.f32.gmra.mxu0 %v1075
        %v1187 = vpop.f32.mrf.mxu0
        %v1188 = vadd.f32 %v1060, %v1187
        %1189 = vmatmul.f32.gmra.mxu0 %v1078
        %v1190 = vpop.f32.mrf.mxu0
        %v1191 = vadd.f32 %v1060, %v1190
        %1192 = vmatmul.f32.gmra.mxu0 %v1081
        %v1193 = vpop.f32.mrf.mxu0
        %v1194 = vadd.f32 %v1060, %v1193
        %1195 = vmatmul.f32.gmra.mxu0 %v1084
        %v1196 = vpop.f32.mrf.mxu0
        %v1197 = vadd.f32 %v1060, %v1196
        %1198 = vmatmul.f32.gmra.mxu0 %v1087
        %v1199 = vpop.f32.mrf.mxu0
        %v1200 = vadd.f32 %v1060, %v1199
        %1201 = vmatmul.f32.gmra.mxu0 %v1090
        %v1202 = vpop.f32.mrf.mxu0
        %v1203 = vadd.f32 %v1060, %v1202
        %1204 = vmatmul.f32.gmra.mxu0 %v1093
        %v1205 = vpop.f32.mrf.mxu0
        %v1206 = vadd.f32 %v1060, %v1205
        %1207 = vmatmul.f32.gmra.mxu0 %v1096
        %v1208 = vpop.f32.mrf.mxu0
        %v1209 = vadd.f32 %v1060, %v1208
        %1210 = vmatmul.f32.gmra.mxu0 %v1099
        %v1211 = vpop.f32.mrf.mxu0
        %v1212 = vadd.f32 %v1060, %v1211
        %1213 = vmatmul.f32.gmra.mxu0 %v1102
        %v1214 = vpop.f32.mrf.mxu0
        %v1215 = vadd.f32 %v1060, %v1214
        %1216 = vmatmul.f32.gmra.mxu0 %v1105
        %v1217 = vpop.f32.mrf.mxu0
        %v1218 = vadd.f32 %v1060, %v1217
        %1219 = vmatmul.f32.gmra.mxu0 %v1108
        %v1220 = vpop.f32.mrf.mxu0
        %v1221 = vadd.f32 %v1060, %v1220
        %1222 = vmatmul.f32.gmra.mxu0 %v1111
        %v1223 = vpop.f32.mrf.mxu0
        %v1224 = vadd.f32 %v1060, %v1223
        %1225 = vmatmul.f32.gmra.mxu0 %v1114
        %v1226 = vpop.f32.mrf.mxu0
        %v1227 = vadd.f32 %v1060, %v1226
        %1228 = vmatmul.f32.gmra.mxu0 %v1117
        %v1229 = vpop.f32.mrf.mxu0
        %v1230 = vadd.f32 %v1060, %v1229
        %1231 = vmatmul.f32.gmra.mxu0 %v1120
        %v1232 = vpop.f32.mrf.mxu0
        %v1233 = vadd.f32 %v1060, %v1232
        %1234 = vmatmul.f32.gmra.mxu0 %v1123
        %v1235 = vpop.f32.mrf.mxu0
        %v1236 = vadd.f32 %v1060, %v1235
        %1237 = vmatmul.f32.gmra.mxu0 %v1126
        %v1238 = vpop.f32.mrf.mxu0
        %v1239 = vadd.f32 %v1060, %v1238
        %1240 = vmatmul.f32.gmra.mxu0 %v1129
        %v1241 = vpop.f32.mrf.mxu0
        %v1242 = vadd.f32 %v1060, %v1241
        %1243 = vmatmul.f32.gmra.mxu0 %v1132
        %v1244 = vpop.f32.mrf.mxu0
        %v1245 = vadd.f32 %v1060, %v1244
        %1246 = vmatmul.f32.gmra.mxu0 %v1135
        %v1247 = vpop.f32.mrf.mxu0
        %v1248 = vadd.f32 %v1060, %v1247
        %1249 = vmatmul.f32.gmra.mxu0 %v1138
        %v1250 = vpop.f32.mrf.mxu0
        %v1251 = vadd.f32 %v1060, %v1250
        %1252 = vmatmul.f32.gmra.mxu0 %v1141
        %v1253 = vpop.f32.mrf.mxu0
        %v1254 = vadd.f32 %v1060, %v1253
        %1255 = vmatmul.f32.gmra.mxu0 %v1144
        %v1256 = vpop.f32.mrf.mxu0
        %v1257 = vadd.f32 %v1060, %v1256
        %1258 = vmatmul.f32.gmra.mxu0 %v1147
        %v1259 = vpop.f32.mrf.mxu0
        %v1260 = vadd.f32 %v1060, %v1259
        %1261 = vmatmul.f32.gmra.mxu0 %v1150
        %v1262 = vpop.f32.mrf.mxu0
        %v1263 = vadd.f32 %v1060, %v1262
        %1264 = vmatmul.f32.gmra.mxu0 %v1153
        %v1265 = vpop.f32.mrf.mxu0
        %v1266 = vadd.f32 %v1060, %v1265
        %1267 = vmatmul.f32.gmra.mxu0 %v1156
        %v1268 = vpop.f32.mrf.mxu0
        %v1269 = vadd.f32 %v1060, %v1268
        %1270 = vdwg.mxu0
        %v1271 = vld [vmem:[%s3] sm:$0xff]
        %1272 = vrot.lane.b32.xlu0 %v1060, 120
        %v1273 = vpop.permute.xlu0 %1272
        %v1276 = vsel %vm345, %v281, 0
        %v1279 = vsel %vm345, %v282, 0
        %v1282 = vsel %vm345, %v283, 0
        %v1285 = vsel %vm345, %v284, 0
        %v1288 = vsel %vm345, %v285, 0
        %v1291 = vsel %vm345, %v286, 0
        %v1294 = vsel %vm345, %v287, 0
        %v1297 = vsel %vm345, %v288, 0
        %v1300 = vsel %vm345, %v289, 0
        %v1303 = vsel %vm345, %v290, 0
        %v1306 = vsel %vm345, %v291, 0
        %v1309 = vsel %vm345, %v292, 0
        %v1312 = vsel %vm345, %v293, 0
        %v1315 = vsel %vm345, %v294, 0
        %v1318 = vsel %vm345, %v295, 0
        %v1321 = vsel %vm345, %v296, 0
        %v1324 = vsel %vm345, %v297, 0
        %v1327 = vsel %vm345, %v298, 0
        %v1330 = vsel %vm345, %v299, 0
        %v1333 = vsel %vm345, %v300, 0
        %v1336 = vsel %vm345, %v301, 0
        %v1339 = vsel %vm345, %v302, 0
        %v1342 = vsel %vm345, %v303, 0
        %v1345 = vsel %vm345, %v304, 0
        %v1348 = vsel %vm345, %v305, 0
        %v1351 = vsel %vm345, %v306, 0
        %v1354 = vsel %vm345, %v307, 0
        %v1357 = vsel %vm345, %v308, 0
        %v1360 = vsel %vm345, %v309, 0
        %v1363 = vsel %vm345, %v310, 0
        %v1366 = vsel %vm345, %v311, 0
        %v1369 = vsel %vm345, %v312, 0
        %1371 = vmatpush.msra.mxu0 0.0
        %1372 = vmatpush.msra.mxu0 0.0
        %1373 = vmatpush.msra.mxu0 0.0
        %1374 = vmatpush.msra.mxu0 0.0
        %1375 = vmatpush.msra.mxu0 0.0
        %1376 = vmatpush.msra.mxu0 0.0
        %1377 = vmatpush.msra.mxu0 0.0
        %1378 = vmatpush.msra.mxu0 0.0
        %1379 = vmatpush.msra.mxu0 0.0
        %1380 = vmatpush.msra.mxu0 0.0
        %1381 = vmatpush.msra.mxu0 0.0
        %1382 = vmatpush.msra.mxu0 0.0
        %1383 = vmatpush.msra.mxu0 0.0
        %1384 = vmatpush.msra.mxu0 0.0
        %1385 = vmatpush.msra.mxu0 0.0
        %1386 = vmatpush.msra.mxu0 %v1271
        %1387 = vmatmul.f32.gmra.mxu0 %v1276
        %v1388 = vpop.f32.mrf.mxu0
        %v1389 = vadd.f32 %v1273, %v1388
        %1390 = vmatmul.f32.gmra.mxu0 %v1279
        %v1391 = vpop.f32.mrf.mxu0
        %v1392 = vadd.f32 %v1273, %v1391
        %1393 = vmatmul.f32.gmra.mxu0 %v1282
        %v1394 = vpop.f32.mrf.mxu0
        %v1395 = vadd.f32 %v1273, %v1394
        %1396 = vmatmul.f32.gmra.mxu0 %v1285
        %v1397 = vpop.f32.mrf.mxu0
        %v1398 = vadd.f32 %v1273, %v1397
        %1399 = vmatmul.f32.gmra.mxu0 %v1288
        %v1400 = vpop.f32.mrf.mxu0
        %v1401 = vadd.f32 %v1273, %v1400
        %1402 = vmatmul.f32.gmra.mxu0 %v1291
        %v1403 = vpop.f32.mrf.mxu0
        %v1404 = vadd.f32 %v1273, %v1403
        %1405 = vmatmul.f32.gmra.mxu0 %v1294
        %v1406 = vpop.f32.mrf.mxu0
        %v1407 = vadd.f32 %v1273, %v1406
        %1408 = vmatmul.f32.gmra.mxu0 %v1297
        %v1409 = vpop.f32.mrf.mxu0
        %v1410 = vadd.f32 %v1273, %v1409
        %1411 = vmatmul.f32.gmra.mxu0 %v1300
        %v1412 = vpop.f32.mrf.mxu0
        %v1413 = vadd.f32 %v1273, %v1412
        %1414 = vmatmul.f32.gmra.mxu0 %v1303
        %v1415 = vpop.f32.mrf.mxu0
        %v1416 = vadd.f32 %v1273, %v1415
        %1417 = vmatmul.f32.gmra.mxu0 %v1306
        %v1418 = vpop.f32.mrf.mxu0
        %v1419 = vadd.f32 %v1273, %v1418
        %1420 = vmatmul.f32.gmra.mxu0 %v1309
        %v1421 = vpop.f32.mrf.mxu0
        %v1422 = vadd.f32 %v1273, %v1421
        %1423 = vmatmul.f32.gmra.mxu0 %v1312
        %v1424 = vpop.f32.mrf.mxu0
        %v1425 = vadd.f32 %v1273, %v1424
        %1426 = vmatmul.f32.gmra.mxu0 %v1315
        %v1427 = vpop.f32.mrf.mxu0
        %v1428 = vadd.f32 %v1273, %v1427
        %1429 = vmatmul.f32.gmra.mxu0 %v1318
        %v1430 = vpop.f32.mrf.mxu0
        %v1431 = vadd.f32 %v1273, %v1430
        %1432 = vmatmul.f32.gmra.mxu0 %v1321
        %v1433 = vpop.f32.mrf.mxu0
        %v1434 = vadd.f32 %v1273, %v1433
        %1435 = vmatmul.f32.gmra.mxu0 %v1324
        %v1436 = vpop.f32.mrf.mxu0
        %v1437 = vadd.f32 %v1273, %v1436
        %1438 = vmatmul.f32.gmra.mxu0 %v1327
        %v1439 = vpop.f32.mrf.mxu0
        %v1440 = vadd.f32 %v1273, %v1439
        %1441 = vmatmul.f32.gmra.mxu0 %v1330
        %v1442 = vpop.f32.mrf.mxu0
        %v1443 = vadd.f32 %v1273, %v1442
        %1444 = vmatmul.f32.gmra.mxu0 %v1333
        %v1445 = vpop.f32.mrf.mxu0
        %v1446 = vadd.f32 %v1273, %v1445
        %1447 = vmatmul.f32.gmra.mxu0 %v1336
        %v1448 = vpop.f32.mrf.mxu0
        %v1449 = vadd.f32 %v1273, %v1448
        %1450 = vmatmul.f32.gmra.mxu0 %v1339
        %v1451 = vpop.f32.mrf.mxu0
        %v1452 = vadd.f32 %v1273, %v1451
        %1453 = vmatmul.f32.gmra.mxu0 %v1342
        %v1454 = vpop.f32.mrf.mxu0
        %v1455 = vadd.f32 %v1273, %v1454
        %1456 = vmatmul.f32.gmra.mxu0 %v1345
        %v1457 = vpop.f32.mrf.mxu0
        %v1458 = vadd.f32 %v1273, %v1457
        %1459 = vmatmul.f32.gmra.mxu0 %v1348
        %v1460 = vpop.f32.mrf.mxu0
        %v1461 = vadd.f32 %v1273, %v1460
        %1462 = vmatmul.f32.gmra.mxu0 %v1351
        %v1463 = vpop.f32.mrf.mxu0
        %v1464 = vadd.f32 %v1273, %v1463
        %1465 = vmatmul.f32.gmra.mxu0 %v1354
        %v1466 = vpop.f32.mrf.mxu0
        %v1467 = vadd.f32 %v1273, %v1466
        %1468 = vmatmul.f32.gmra.mxu0 %v1357
        %v1469 = vpop.f32.mrf.mxu0
        %v1470 = vadd.f32 %v1273, %v1469
        %1471 = vmatmul.f32.gmra.mxu0 %v1360
        %v1472 = vpop.f32.mrf.mxu0
        %v1473 = vadd.f32 %v1273, %v1472
        %1474 = vmatmul.f32.gmra.mxu0 %v1363
        %v1475 = vpop.f32.mrf.mxu0
        %v1476 = vadd.f32 %v1273, %v1475
        %1477 = vmatmul.f32.gmra.mxu0 %v1366
        %v1478 = vpop.f32.mrf.mxu0
        %v1479 = vadd.f32 %v1273, %v1478
        %1480 = vmatmul.f32.gmra.mxu0 %v1369
        %v1481 = vpop.f32.mrf.mxu0
        %v1482 = vadd.f32 %v1273, %v1481
        %1483 = vdwg.mxu0
        %v1484 = vld [vmem:[%s4] sm:$0xf]
        %1485 = vrot.lane.b32.xlu0 %v1060, 112
        %v1486 = vpop.permute.xlu0 %1485
        %vm1488 = vcmask 31744
        %v1490 = vsel %vm1488, %v313, 0
        %v1493 = vsel %vm1488, %v314, 0
        %v1496 = vsel %vm1488, %v315, 0
        %v1499 = vsel %vm1488, %v316, 0
        %v1502 = vsel %vm1488, %v317, 0
        %v1505 = vsel %vm1488, %v318, 0
        %v1508 = vsel %vm1488, %v319, 0
        %v1511 = vsel %vm1488, %v320, 0
        %v1514 = vsel %vm1488, %v321, 0
        %v1517 = vsel %vm1488, %v322, 0
        %v1520 = vsel %vm1488, %v323, 0
        %v1523 = vsel %vm1488, %v324, 0
        %v1526 = vsel %vm1488, %v325, 0
        %v1529 = vsel %vm1488, %v326, 0
        %v1532 = vsel %vm1488, %v327, 0
        %v1535 = vsel %vm1488, %v328, 0
        %v1538 = vsel %vm1488, %v329, 0
        %v1541 = vsel %vm1488, %v330, 0
        %v1544 = vsel %vm1488, %v331, 0
        %v1547 = vsel %vm1488, %v332, 0
        %v1550 = vsel %vm1488, %v333, 0
        %v1553 = vsel %vm1488, %v334, 0
        %v1556 = vsel %vm1488, %v335, 0
        %v1559 = vsel %vm1488, %v336, 0
        %v1562 = vsel %vm1488, %v337, 0
        %v1565 = vsel %vm1488, %v338, 0
        %v1568 = vsel %vm1488, %v339, 0
        %v1571 = vsel %vm1488, %v340, 0
        %v1574 = vsel %vm1488, %v341, 0
        %v1577 = vsel %vm1488, %v342, 0
        %v1580 = vsel %vm1488, %v343, 0
        %v1583 = vsel %vm1488, %v344, 0
        %vm1585 = vcmask 1043456
        %v1587 = vsel %vm1585, %v1484, 0
        %1589 = vmatpush.msra.mxu0 0.0
        %1590 = vmatpush.msra.mxu0 0.0
        %1591 = vmatpush.msra.mxu0 0.0
        %1592 = vmatpush.msra.mxu0 0.0
        %1593 = vmatpush.msra.mxu0 0.0
        %1594 = vmatpush.msra.mxu0 0.0
        %1595 = vmatpush.msra.mxu0 0.0
        %1596 = vmatpush.msra.mxu0 0.0
        %1597 = vmatpush.msra.mxu0 0.0
        %1598 = vmatpush.msra.mxu0 0.0
        %1599 = vmatpush.msra.mxu0 0.0
        %1600 = vmatpush.msra.mxu0 0.0
        %1601 = vmatpush.msra.mxu0 0.0
        %1602 = vmatpush.msra.mxu0 0.0
        %1603 = vmatpush.msra.mxu0 0.0
        %1604 = vmatpush.msra.mxu0 %v1587
        %1605 = vmatmul.f32.gmra.mxu0 %v1490
        %v1606 = vpop.f32.mrf.mxu0
        %v1607 = vadd.f32 %v1486, %v1606
        %1608 = vmatmul.f32.gmra.mxu0 %v1493
        %v1609 = vpop.f32.mrf.mxu0
        %v1610 = vadd.f32 %v1486, %v1609
        %1611 = vmatmul.f32.gmra.mxu0 %v1496
        %v1612 = vpop.f32.mrf.mxu0
        %v1613 = vadd.f32 %v1486, %v1612
        %1614 = vmatmul.f32.gmra.mxu0 %v1499
        %v1615 = vpop.f32.mrf.mxu0
        %v1616 = vadd.f32 %v1486, %v1615
        %1617 = vmatmul.f32.gmra.mxu0 %v1502
        %v1618 = vpop.f32.mrf.mxu0
        %v1619 = vadd.f32 %v1486, %v1618
        %1620 = vmatmul.f32.gmra.mxu0 %v1505
        %v1621 = vpop.f32.mrf.mxu0
        %v1622 = vadd.f32 %v1486, %v1621
        %1623 = vmatmul.f32.gmra.mxu0 %v1508
        %v1624 = vpop.f32.mrf.mxu0
        %v1625 = vadd.f32 %v1486, %v1624
        %1626 = vmatmul.f32.gmra.mxu0 %v1511
        %v1627 = vpop.f32.mrf.mxu0
        %v1628 = vadd.f32 %v1486, %v1627
        %1629 = vmatmul.f32.gmra.mxu0 %v1514
        %v1630 = vpop.f32.mrf.mxu0
        %v1631 = vadd.f32 %v1486, %v1630
        %1632 = vmatmul.f32.gmra.mxu0 %v1517
        %v1633 = vpop.f32.mrf.mxu0
        %v1634 = vadd.f32 %v1486, %v1633
        %1635 = vmatmul.f32.gmra.mxu0 %v1520
        %v1636 = vpop.f32.mrf.mxu0
        %v1637 = vadd.f32 %v1486, %v1636
        %1638 = vmatmul.f32.gmra.mxu0 %v1523
        %v1639 = vpop.f32.mrf.mxu0
        %v1640 = vadd.f32 %v1486, %v1639
        %1641 = vmatmul.f32.gmra.mxu0 %v1526
        %v1642 = vpop.f32.mrf.mxu0
        %v1643 = vadd.f32 %v1486, %v1642
        %1644 = vmatmul.f32.gmra.mxu0 %v1529
        %v1645 = vpop.f32.mrf.mxu0
        %v1646 = vadd.f32 %v1486, %v1645
        %1647 = vmatmul.f32.gmra.mxu0 %v1532
        %v1648 = vpop.f32.mrf.mxu0
        %v1649 = vadd.f32 %v1486, %v1648
        %1650 = vmatmul.f32.gmra.mxu0 %v1535
        %v1651 = vpop.f32.mrf.mxu0
        %v1652 = vadd.f32 %v1486, %v1651
        %1653 = vmatmul.f32.gmra.mxu0 %v1538
        %v1654 = vpop.f32.mrf.mxu0
        %v1655 = vadd.f32 %v1486, %v1654
        %1656 = vmatmul.f32.gmra.mxu0 %v1541
        %v1657 = vpop.f32.mrf.mxu0
        %v1658 = vadd.f32 %v1486, %v1657
        %1659 = vmatmul.f32.gmra.mxu0 %v1544
        %v1660 = vpop.f32.mrf.mxu0
        %v1661 = vadd.f32 %v1486, %v1660
        %1662 = vmatmul.f32.gmra.mxu0 %v1547
        %v1663 = vpop.f32.mrf.mxu0
        %v1664 = vadd.f32 %v1486, %v1663
        %1665 = vmatmul.f32.gmra.mxu0 %v1550
        %v1666 = vpop.f32.mrf.mxu0
        %v1667 = vadd.f32 %v1486, %v1666
        %1668 = vmatmul.f32.gmra.mxu0 %v1553
        %v1669 = vpop.f32.mrf.mxu0
        %v1670 = vadd.f32 %v1486, %v1669
        %1671 = vmatmul.f32.gmra.mxu0 %v1556
        %v1672 = vpop.f32.mrf.mxu0
        %v1673 = vadd.f32 %v1486, %v1672
        %1674 = vmatmul.f32.gmra.mxu0 %v1559
        %v1675 = vpop.f32.mrf.mxu0
        %v1676 = vadd.f32 %v1486, %v1675
        %1677 = vmatmul.f32.gmra.mxu0 %v1562
        %v1678 = vpop.f32.mrf.mxu0
        %v1679 = vadd.f32 %v1486, %v1678
        %1680 = vmatmul.f32.gmra.mxu0 %v1565
        %v1681 = vpop.f32.mrf.mxu0
        %v1682 = vadd.f32 %v1486, %v1681
        %1683 = vmatmul.f32.gmra.mxu0 %v1568
        %v1684 = vpop.f32.mrf.mxu0
        %v1685 = vadd.f32 %v1486, %v1684
        %1686 = vmatmul.f32.gmra.mxu0 %v1571
        %v1687 = vpop.f32.mrf.mxu0
        %v1688 = vadd.f32 %v1486, %v1687
        %1689 = vmatmul.f32.gmra.mxu0 %v1574
        %v1690 = vpop.f32.mrf.mxu0
        %v1691 = vadd.f32 %v1486, %v1690
        %1692 = vmatmul.f32.gmra.mxu0 %v1577
        %v1693 = vpop.f32.mrf.mxu0
        %v1694 = vadd.f32 %v1486, %v1693
        %1695 = vmatmul.f32.gmra.mxu0 %v1580
        %v1696 = vpop.f32.mrf.mxu0
        %v1697 = vadd.f32 %v1486, %v1696
        %1698 = vmatmul.f32.gmra.mxu0 %v1583
        %v1699 = vpop.f32.mrf.mxu0
        %v1700 = vadd.f32 %v1486, %v1699
        %1701 = vdwg.mxu0
        %v1703 = vsel %vm345, %v1176, 0
        %v1706 = vsel %vm345, %v1179, 0
        %v1709 = vsel %vm345, %v1607, 0
        %v1712 = vsel %vm345, %v1610, 0
        %1714 = vmatpush.xpose.msra.mxu0 0.0
        %1715 = vmatpush.xpose.msra.mxu0 0.0
        %1716 = vmatpush.xpose.msra.mxu0 0.0
        %1717 = vmatpush.xpose.msra.mxu0 0.0
        %1718 = vmatpush.xpose.msra.mxu0 0.0
        %1719 = vmatpush.xpose.msra.mxu0 0.0
        %1720 = vmatpush.xpose.msra.mxu0 0.0
        %1721 = vmatpush.xpose.msra.mxu0 0.0
        %1722 = vmatpush.xpose.msra.mxu0 0.0
        %1723 = vmatpush.xpose.msra.mxu0 0.0
        %1724 = vmatpush.xpose.msra.mxu0 0.0
        %1725 = vmatpush.xpose.msra.mxu0 0.0
        %1726 = vmatpush.xpose.msra.mxu0 0.0
        %1727 = vmatpush.xpose.msra.mxu0 0.0
        %1728 = vmatpush.xpose.msra.mxu0 %v1712
        %1729 = vmatpush.xpose.msra.mxu0 %v1709
        %1730 = vmatmul.f32.gmra.mxu0 %v1703
        %v1731 = vpop.f32.mrf.mxu0
        %v1732 = vadd.f32 0.0, %v1731
        %1733 = vmatmul.f32.gmra.mxu0 %v1706
        %v1734 = vpop.f32.mrf.mxu0
        %v1735 = vadd.f32 0.0, %v1734
        %1736 = vdwg.mxu0
        %v1738 = vsel %vm345, %v1182, 0
        %v1741 = vsel %vm345, %v1185, 0
        %v1744 = vsel %vm345, %v1613, 0
        %v1747 = vsel %vm345, %v1616, 0
        %1749 = vmatpush.xpose.msra.mxu0 0.0
        %1750 = vmatpush.xpose.msra.mxu0 0.0
        %1751 = vmatpush.xpose.msra.mxu0 0.0
        %1752 = vmatpush.xpose.msra.mxu0 0.0
        %1753 = vmatpush.xpose.msra.mxu0 0.0
        %1754 = vmatpush.xpose.msra.mxu0 0.0
        %1755 = vmatpush.xpose.msra.mxu0 0.0
        %1756 = vmatpush.xpose.msra.mxu0 0.0
        %1757 = vmatpush.xpose.msra.mxu0 0.0
        %1758 = vmatpush.xpose.msra.mxu0 0.0
        %1759 = vmatpush.xpose.msra.mxu0 0.0
        %1760 = vmatpush.xpose.msra.mxu0 0.0
        %1761 = vmatpush.xpose.msra.mxu0 0.0
        %1762 = vmatpush.xpose.msra.mxu0 0.0
        %1763 = vmatpush.xpose.msra.mxu0 %v1747
        %1764 = vmatpush.xpose.msra.mxu0 %v1744
        %1765 = vmatmul.f32.gmra.mxu0 %v1738
        %v1766 = vpop.f32.mrf.mxu0
        %v1767 = vadd.f32 0.0, %v1766
        %1768 = vmatmul.f32.gmra.mxu0 %v1741
        %v1769 = vpop.f32.mrf.mxu0
        %v1770 = vadd.f32 0.0, %v1769
        %1771 = vdwg.mxu0
        %v1773 = vsel %vm345, %v1188, 0
        %v1776 = vsel %vm345, %v1191, 0
        %v1779 = vsel %vm345, %v1619, 0
        %v1782 = vsel %vm345, %v1622, 0
        %1784 = vmatpush.xpose.msra.mxu0 0.0
        %1785 = vmatpush.xpose.msra.mxu0 0.0
        %1786 = vmatpush.xpose.msra.mxu0 0.0
        %1787 = vmatpush.xpose.msra.mxu0 0.0
        %1788 = vmatpush.xpose.msra.mxu0 0.0
        %1789 = vmatpush.xpose.msra.mxu0 0.0
        %1790 = vmatpush.xpose.msra.mxu0 0.0
        %1791 = vmatpush.xpose.msra.mxu0 0.0
        %1792 = vmatpush.xpose.msra.mxu0 0.0
        %1793 = vmatpush.xpose.msra.mxu0 0.0
        %1794 = vmatpush.xpose.msra.mxu0 0.0
        %1795 = vmatpush.xpose.msra.mxu0 0.0
        %1796 = vmatpush.xpose.msra.mxu0 0.0
        %1797 = vmatpush.xpose.msra.mxu0 0.0
        %1798 = vmatpush.xpose.msra.mxu0 %v1782
        %1799 = vmatpush.xpose.msra.mxu0 %v1779
        %1800 = vmatmul.f32.gmra.mxu0 %v1773
        %v1801 = vpop.f32.mrf.mxu0
        %v1802 = vadd.f32 0.0, %v1801
        %1803 = vmatmul.f32.gmra.mxu0 %v1776
        %v1804 = vpop.f32.mrf.mxu0
        %v1805 = vadd.f32 0.0, %v1804
        %1806 = vdwg.mxu0
        %v1808 = vsel %vm345, %v1194, 0
        %v1811 = vsel %vm345, %v1197, 0
        %v1814 = vsel %vm345, %v1625, 0
        %v1817 = vsel %vm345, %v1628, 0
        %1819 = vmatpush.xpose.msra.mxu0 0.0
        %1820 = vmatpush.xpose.msra.mxu0 0.0
        %1821 = vmatpush.xpose.msra.mxu0 0.0
        %1822 = vmatpush.xpose.msra.mxu0 0.0
        %1823 = vmatpush.xpose.msra.mxu0 0.0
        %1824 = vmatpush.xpose.msra.mxu0 0.0
        %1825 = vmatpush.xpose.msra.mxu0 0.0
        %1826 = vmatpush.xpose.msra.mxu0 0.0
        %1827 = vmatpush.xpose.msra.mxu0 0.0
        %1828 = vmatpush.xpose.msra.mxu0 0.0
        %1829 = vmatpush.xpose.msra.mxu0 0.0
        %1830 = vmatpush.xpose.msra.mxu0 0.0
        %1831 = vmatpush.xpose.msra.mxu0 0.0
        %1832 = vmatpush.xpose.msra.mxu0 0.0
        %1833 = vmatpush.xpose.msra.mxu0 %v1817
        %1834 = vmatpush.xpose.msra.mxu0 %v1814
        %1835 = vmatmul.f32.gmra.mxu0 %v1808
        %v1836 = vpop.f32.mrf.mxu0
        %v1837 = vadd.f32 0.0, %v1836
        %1838 = vmatmul.f32.gmra.mxu0 %v1811
        %v1839 = vpop.f32.mrf.mxu0
        %v1840 = vadd.f32 0.0, %v1839
        %1841 = vdwg.mxu0
        %v1843 = vsel %vm345, %v1200, 0
        %v1846 = vsel %vm345, %v1203, 0
        %v1849 = vsel %vm345, %v1631, 0
        %v1852 = vsel %vm345, %v1634, 0
        %1854 = vmatpush.xpose.msra.mxu0 0.0
        %1855 = vmatpush.xpose.msra.mxu0 0.0
        %1856 = vmatpush.xpose.msra.mxu0 0.0
        %1857 = vmatpush.xpose.msra.mxu0 0.0
        %1858 = vmatpush.xpose.msra.mxu0 0.0
        %1859 = vmatpush.xpose.msra.mxu0 0.0
        %1860 = vmatpush.xpose.msra.mxu0 0.0
        %1861 = vmatpush.xpose.msra.mxu0 0.0
        %1862 = vmatpush.xpose.msra.mxu0 0.0
        %1863 = vmatpush.xpose.msra.mxu0 0.0
        %1864 = vmatpush.xpose.msra.mxu0 0.0
        %1865 = vmatpush.xpose.msra.mxu0 0.0
        %1866 = vmatpush.xpose.msra.mxu0 0.0
        %1867 = vmatpush.xpose.msra.mxu0 0.0
        %1868 = vmatpush.xpose.msra.mxu0 %v1852
        %1869 = vmatpush.xpose.msra.mxu0 %v1849
        %1870 = vmatmul.f32.gmra.mxu0 %v1843
        %v1871 = vpop.f32.mrf.mxu0
        %v1872 = vadd.f32 0.0, %v1871
        %1873 = vmatmul.f32.gmra.mxu0 %v1846
        %v1874 = vpop.f32.mrf.mxu0
        %v1875 = vadd.f32 0.0, %v1874
        %1876 = vdwg.mxu0
        %v1878 = vsel %vm345, %v1206, 0
        %v1881 = vsel %vm345, %v1209, 0
        %v1884 = vsel %vm345, %v1637, 0
        %v1887 = vsel %vm345, %v1640, 0
        %1889 = vmatpush.xpose.msra.mxu0 0.0
        %1890 = vmatpush.xpose.msra.mxu0 0.0
        %1891 = vmatpush.xpose.msra.mxu0 0.0
        %1892 = vmatpush.xpose.msra.mxu0 0.0
        %1893 = vmatpush.xpose.msra.mxu0 0.0
        %1894 = vmatpush.xpose.msra.mxu0 0.0
        %1895 = vmatpush.xpose.msra.mxu0 0.0
        %1896 = vmatpush.xpose.msra.mxu0 0.0
        %1897 = vmatpush.xpose.msra.mxu0 0.0
        %1898 = vmatpush.xpose.msra.mxu0 0.0
        %1899 = vmatpush.xpose.msra.mxu0 0.0
        %1900 = vmatpush.xpose.msra.mxu0 0.0
        %1901 = vmatpush.xpose.msra.mxu0 0.0
        %1902 = vmatpush.xpose.msra.mxu0 0.0
        %1903 = vmatpush.xpose.msra.mxu0 %v1887
        %1904 = vmatpush.xpose.msra.mxu0 %v1884
        %1905 = vmatmul.f32.gmra.mxu0 %v1878
        %v1906 = vpop.f32.mrf.mxu0
        %v1907 = vadd.f32 0.0, %v1906
        %1908 = vmatmul.f32.gmra.mxu0 %v1881
        %v1909 = vpop.f32.mrf.mxu0
        %v1910 = vadd.f32 0.0, %v1909
        %1911 = vdwg.mxu0
        %v1913 = vsel %vm345, %v1212, 0
        %v1916 = vsel %vm345, %v1215, 0
        %v1919 = vsel %vm345, %v1643, 0
        %v1922 = vsel %vm345, %v1646, 0
        %1924 = vmatpush.xpose.msra.mxu0 0.0
        %1925 = vmatpush.xpose.msra.mxu0 0.0
        %1926 = vmatpush.xpose.msra.mxu0 0.0
        %1927 = vmatpush.xpose.msra.mxu0 0.0
        %1928 = vmatpush.xpose.msra.mxu0 0.0
        %1929 = vmatpush.xpose.msra.mxu0 0.0
        %1930 = vmatpush.xpose.msra.mxu0 0.0
        %1931 = vmatpush.xpose.msra.mxu0 0.0
        %1932 = vmatpush.xpose.msra.mxu0 0.0
        %1933 = vmatpush.xpose.msra.mxu0 0.0
        %1934 = vmatpush.xpose.msra.mxu0 0.0
        %1935 = vmatpush.xpose.msra.mxu0 0.0
        %1936 = vmatpush.xpose.msra.mxu0 0.0
        %1937 = vmatpush.xpose.msra.mxu0 0.0
        %1938 = vmatpush.xpose.msra.mxu0 %v1922
        %1939 = vmatpush.xpose.msra.mxu0 %v1919
        %1940 = vmatmul.f32.gmra.mxu0 %v1913
        %v1941 = vpop.f32.mrf.mxu0
        %v1942 = vadd.f32 0.0, %v1941
        %1943 = vmatmul.f32.gmra.mxu0 %v1916
        %v1944 = vpop.f32.mrf.mxu0
        %v1945 = vadd.f32 0.0, %v1944
        %1946 = vdwg.mxu0
        %v1948 = vsel %vm345, %v1218, 0
        %v1951 = vsel %vm345, %v1221, 0
        %v1954 = vsel %vm345, %v1649, 0
        %v1957 = vsel %vm345, %v1652, 0
        %1959 = vmatpush.xpose.msra.mxu0 0.0
        %1960 = vmatpush.xpose.msra.mxu0 0.0
        %1961 = vmatpush.xpose.msra.mxu0 0.0
        %1962 = vmatpush.xpose.msra.mxu0 0.0
        %1963 = vmatpush.xpose.msra.mxu0 0.0
        %1964 = vmatpush.xpose.msra.mxu0 0.0
        %1965 = vmatpush.xpose.msra.mxu0 0.0
        %1966 = vmatpush.xpose.msra.mxu0 0.0
        %1967 = vmatpush.xpose.msra.mxu0 0.0
        %1968 = vmatpush.xpose.msra.mxu0 0.0
        %1969 = vmatpush.xpose.msra.mxu0 0.0
        %1970 = vmatpush.xpose.msra.mxu0 0.0
        %1971 = vmatpush.xpose.msra.mxu0 0.0
        %1972 = vmatpush.xpose.msra.mxu0 0.0
        %1973 = vmatpush.xpose.msra.mxu0 %v1957
        %1974 = vmatpush.xpose.msra.mxu0 %v1954
        %1975 = vmatmul.f32.gmra.mxu0 %v1948
        %v1976 = vpop.f32.mrf.mxu0
        %v1977 = vadd.f32 0.0, %v1976
        %1978 = vmatmul.f32.gmra.mxu0 %v1951
        %v1979 = vpop.f32.mrf.mxu0
        %v1980 = vadd.f32 0.0, %v1979
        %1981 = vdwg.mxu0
        %v1983 = vsel %vm345, %v1224, 0
        %v1986 = vsel %vm345, %v1227, 0
        %v1989 = vsel %vm345, %v1655, 0
        %v1992 = vsel %vm345, %v1658, 0
        %1994 = vmatpush.xpose.msra.mxu0 0.0
        %1995 = vmatpush.xpose.msra.mxu0 0.0
        %1996 = vmatpush.xpose.msra.mxu0 0.0
        %1997 = vmatpush.xpose.msra.mxu0 0.0
        %1998 = vmatpush.xpose.msra.mxu0 0.0
        %1999 = vmatpush.xpose.msra.mxu0 0.0
        %2000 = vmatpush.xpose.msra.mxu0 0.0
        %2001 = vmatpush.xpose.msra.mxu0 0.0
        %2002 = vmatpush.xpose.msra.mxu0 0.0
        %2003 = vmatpush.xpose.msra.mxu0 0.0
        %2004 = vmatpush.xpose.msra.mxu0 0.0
        %2005 = vmatpush.xpose.msra.mxu0 0.0
        %2006 = vmatpush.xpose.msra.mxu0 0.0
        %2007 = vmatpush.xpose.msra.mxu0 0.0
        %2008 = vmatpush.xpose.msra.mxu0 %v1992
        %2009 = vmatpush.xpose.msra.mxu0 %v1989
        %2010 = vmatmul.f32.gmra.mxu0 %v1983
        %v2011 = vpop.f32.mrf.mxu0
        %v2012 = vadd.f32 0.0, %v2011
        %2013 = vmatmul.f32.gmra.mxu0 %v1986
        %v2014 = vpop.f32.mrf.mxu0
        %v2015 = vadd.f32 0.0, %v2014
        %2016 = vdwg.mxu0
        %v2018 = vsel %vm345, %v1230, 0
        %v2021 = vsel %vm345, %v1233, 0
        %v2024 = vsel %vm345, %v1661, 0
        %v2027 = vsel %vm345, %v1664, 0
        %2029 = vmatpush.xpose.msra.mxu0 0.0
        %2030 = vmatpush.xpose.msra.mxu0 0.0
        %2031 = vmatpush.xpose.msra.mxu0 0.0
        %2032 = vmatpush.xpose.msra.mxu0 0.0
        %2033 = vmatpush.xpose.msra.mxu0 0.0
        %2034 = vmatpush.xpose.msra.mxu0 0.0
        %2035 = vmatpush.xpose.msra.mxu0 0.0
        %2036 = vmatpush.xpose.msra.mxu0 0.0
        %2037 = vmatpush.xpose.msra.mxu0 0.0
        %2038 = vmatpush.xpose.msra.mxu0 0.0
        %2039 = vmatpush.xpose.msra.mxu0 0.0
        %2040 = vmatpush.xpose.msra.mxu0 0.0
        %2041 = vmatpush.xpose.msra.mxu0 0.0
        %2042 = vmatpush.xpose.msra.mxu0 0.0
        %2043 = vmatpush.xpose.msra.mxu0 %v2027
        %2044 = vmatpush.xpose.msra.mxu0 %v2024
        %2045 = vmatmul.f32.gmra.mxu0 %v2018
        %v2046 = vpop.f32.mrf.mxu0
        %v2047 = vadd.f32 0.0, %v2046
        %2048 = vmatmul.f32.gmra.mxu0 %v2021
        %v2049 = vpop.f32.mrf.mxu0
        %v2050 = vadd.f32 0.0, %v2049
        %2051 = vdwg.mxu0
        %v2053 = vsel %vm345, %v1236, 0
        %v2056 = vsel %vm345, %v1239, 0
        %v2059 = vsel %vm345, %v1667, 0
        %v2062 = vsel %vm345, %v1670, 0
        %2064 = vmatpush.xpose.msra.mxu0 0.0
        %2065 = vmatpush.xpose.msra.mxu0 0.0
        %2066 = vmatpush.xpose.msra.mxu0 0.0
        %2067 = vmatpush.xpose.msra.mxu0 0.0
        %2068 = vmatpush.xpose.msra.mxu0 0.0
        %2069 = vmatpush.xpose.msra.mxu0 0.0
        %2070 = vmatpush.xpose.msra.mxu0 0.0
        %2071 = vmatpush.xpose.msra.mxu0 0.0
        %2072 = vmatpush.xpose.msra.mxu0 0.0
        %2073 = vmatpush.xpose.msra.mxu0 0.0
        %2074 = vmatpush.xpose.msra.mxu0 0.0
        %2075 = vmatpush.xpose.msra.mxu0 0.0
        %2076 = vmatpush.xpose.msra.mxu0 0.0
        %2077 = vmatpush.xpose.msra.mxu0 0.0
        %2078 = vmatpush.xpose.msra.mxu0 %v2062
        %2079 = vmatpush.xpose.msra.mxu0 %v2059
        %2080 = vmatmul.f32.gmra.mxu0 %v2053
        %v2081 = vpop.f32.mrf.mxu0
        %v2082 = vadd.f32 0.0, %v2081
        %2083 = vmatmul.f32.gmra.mxu0 %v2056
        %v2084 = vpop.f32.mrf.mxu0
        %v2085 = vadd.f32 0.0, %v2084
        %2086 = vdwg.mxu0
        %v2088 = vsel %vm345, %v1242, 0
        %v2091 = vsel %vm345, %v1245, 0
        %v2094 = vsel %vm345, %v1673, 0
        %v2097 = vsel %vm345, %v1676, 0
        %2099 = vmatpush.xpose.msra.mxu0 0.0
        %2100 = vmatpush.xpose.msra.mxu0 0.0
        %2101 = vmatpush.xpose.msra.mxu0 0.0
        %2102 = vmatpush.xpose.msra.mxu0 0.0
        %2103 = vmatpush.xpose.msra.mxu0 0.0
        %2104 = vmatpush.xpose.msra.mxu0 0.0
        %2105 = vmatpush.xpose.msra.mxu0 0.0
        %2106 = vmatpush.xpose.msra.mxu0 0.0
        %2107 = vmatpush.xpose.msra.mxu0 0.0
        %2108 = vmatpush.xpose.msra.mxu0 0.0
        %2109 = vmatpush.xpose.msra.mxu0 0.0
        %2110 = vmatpush.xpose.msra.mxu0 0.0
        %2111 = vmatpush.xpose.msra.mxu0 0.0
        %2112 = vmatpush.xpose.msra.mxu0 0.0
        %2113 = vmatpush.xpose.msra.mxu0 %v2097
        %2114 = vmatpush.xpose.msra.mxu0 %v2094
        %2115 = vmatmul.f32.gmra.mxu0 %v2088
        %v2116 = vpop.f32.mrf.mxu0
        %v2117 = vadd.f32 0.0, %v2116
        %2118 = vmatmul.f32.gmra.mxu0 %v2091
        %v2119 = vpop.f32.mrf.mxu0
        %v2120 = vadd.f32 0.0, %v2119
        %2121 = vdwg.mxu0
        %v2123 = vsel %vm345, %v1248, 0
        %v2126 = vsel %vm345, %v1251, 0
        %v2129 = vsel %vm345, %v1679, 0
        %v2132 = vsel %vm345, %v1682, 0
        %2134 = vmatpush.xpose.msra.mxu0 0.0
        %2135 = vmatpush.xpose.msra.mxu0 0.0
        %2136 = vmatpush.xpose.msra.mxu0 0.0
        %2137 = vmatpush.xpose.msra.mxu0 0.0
        %2138 = vmatpush.xpose.msra.mxu0 0.0
        %2139 = vmatpush.xpose.msra.mxu0 0.0
        %2140 = vmatpush.xpose.msra.mxu0 0.0
        %2141 = vmatpush.xpose.msra.mxu0 0.0
        %2142 = vmatpush.xpose.msra.mxu0 0.0
        %2143 = vmatpush.xpose.msra.mxu0 0.0
        %2144 = vmatpush.xpose.msra.mxu0 0.0
        %2145 = vmatpush.xpose.msra.mxu0 0.0
        %2146 = vmatpush.xpose.msra.mxu0 0.0
        %2147 = vmatpush.xpose.msra.mxu0 0.0
        %2148 = vmatpush.xpose.msra.mxu0 %v2132
        %2149 = vmatpush.xpose.msra.mxu0 %v2129
        %2150 = vmatmul.f32.gmra.mxu0 %v2123
        %v2151 = vpop.f32.mrf.mxu0
        %v2152 = vadd.f32 0.0, %v2151
        %2153 = vmatmul.f32.gmra.mxu0 %v2126
        %v2154 = vpop.f32.mrf.mxu0
        %v2155 = vadd.f32 0.0, %v2154
        %2156 = vdwg.mxu0
        %v2158 = vsel %vm345, %v1254, 0
        %v2161 = vsel %vm345, %v1257, 0
        %v2164 = vsel %vm345, %v1685, 0
        %v2167 = vsel %vm345, %v1688, 0
        %2169 = vmatpush.xpose.msra.mxu0 0.0
        %2170 = vmatpush.xpose.msra.mxu0 0.0
        %2171 = vmatpush.xpose.msra.mxu0 0.0
        %2172 = vmatpush.xpose.msra.mxu0 0.0
        %2173 = vmatpush.xpose.msra.mxu0 0.0
        %2174 = vmatpush.xpose.msra.mxu0 0.0
        %2175 = vmatpush.xpose.msra.mxu0 0.0
        %2176 = vmatpush.xpose.msra.mxu0 0.0
        %2177 = vmatpush.xpose.msra.mxu0 0.0
        %2178 = vmatpush.xpose.msra.mxu0 0.0
        %2179 = vmatpush.xpose.msra.mxu0 0.0
        %2180 = vmatpush.xpose.msra.mxu0 0.0
        %2181 = vmatpush.xpose.msra.mxu0 0.0
        %2182 = vmatpush.xpose.msra.mxu0 0.0
        %2183 = vmatpush.xpose.msra.mxu0 %v2167
        %2184 = vmatpush.xpose.msra.mxu0 %v2164
        %2185 = vmatmul.f32.gmra.mxu0 %v2158
        %v2186 = vpop.f32.mrf.mxu0
        %v2187 = vadd.f32 0.0, %v2186
        %2188 = vmatmul.f32.gmra.mxu0 %v2161
        %v2189 = vpop.f32.mrf.mxu0
        %v2190 = vadd.f32 0.0, %v2189
        %2191 = vdwg.mxu0
        %v2193 = vsel %vm345, %v1260, 0
        %v2196 = vsel %vm345, %v1263, 0
        %v2199 = vsel %vm345, %v1691, 0
        %v2202 = vsel %vm345, %v1694, 0
        %2204 = vmatpush.xpose.msra.mxu0 0.0
        %2205 = vmatpush.xpose.msra.mxu0 0.0
        %2206 = vmatpush.xpose.msra.mxu0 0.0
        %2207 = vmatpush.xpose.msra.mxu0 0.0
        %2208 = vmatpush.xpose.msra.mxu0 0.0
        %2209 = vmatpush.xpose.msra.mxu0 0.0
        %2210 = vmatpush.xpose.msra.mxu0 0.0
        %2211 = vmatpush.xpose.msra.mxu0 0.0
        %2212 = vmatpush.xpose.msra.mxu0 0.0
        %2213 = vmatpush.xpose.msra.mxu0 0.0
        %2214 = vmatpush.xpose.msra.mxu0 0.0
        %2215 = vmatpush.xpose.msra.mxu0 0.0
        %2216 = vmatpush.xpose.msra.mxu0 0.0
        %2217 = vmatpush.xpose.msra.mxu0 0.0
        %2218 = vmatpush.xpose.msra.mxu0 %v2202
        %2219 = vmatpush.xpose.msra.mxu0 %v2199
        %2220 = vmatmul.f32.gmra.mxu0 %v2193
        %v2221 = vpop.f32.mrf.mxu0
        %v2222 = vadd.f32 0.0, %v2221
        %2223 = vmatmul.f32.gmra.mxu0 %v2196
        %v2224 = vpop.f32.mrf.mxu0
        %v2225 = vadd.f32 0.0, %v2224
        %2226 = vdwg.mxu0
        %v2228 = vsel %vm345, %v1266, 0
        %v2231 = vsel %vm345, %v1269, 0
        %v2234 = vsel %vm345, %v1697, 0
        %v2237 = vsel %vm345, %v1700, 0
        %2239 = vmatpush.xpose.msra.mxu0 0.0
        %2240 = vmatpush.xpose.msra.mxu0 0.0
        %2241 = vmatpush.xpose.msra.mxu0 0.0
        %2242 = vmatpush.xpose.msra.mxu0 0.0
        %2243 = vmatpush.xpose.msra.mxu0 0.0
        %2244 = vmatpush.xpose.msra.mxu0 0.0
        %2245 = vmatpush.xpose.msra.mxu0 0.0
        %2246 = vmatpush.xpose.msra.mxu0 0.0
        %2247 = vmatpush.xpose.msra.mxu0 0.0
        %2248 = vmatpush.xpose.msra.mxu0 0.0
        %2249 = vmatpush.xpose.msra.mxu0 0.0
        %2250 = vmatpush.xpose.msra.mxu0 0.0
        %2251 = vmatpush.xpose.msra.mxu0 0.0
        %2252 = vmatpush.xpose.msra.mxu0 0.0
        %2253 = vmatpush.xpose.msra.mxu0 %v2237
        %2254 = vmatpush.xpose.msra.mxu0 %v2234
        %2255 = vmatmul.f32.gmra.mxu0 %v2228
        %v2256 = vpop.f32.mrf.mxu0
        %v2257 = vadd.f32 0.0, %v2256
        %2258 = vmatmul.f32.gmra.mxu0 %v2231
        %v2259 = vpop.f32.mrf.mxu0
        %v2260 = vadd.f32 0.0, %v2259
        %2261 = vdwg.mxu0
        %v2262 = vmul.f32 %v1732, 0.4082483
        %v2263 = vmul.f32 %v1735, 0.4082483
        %v2264 = vmul.f32 %v1767, 0.4082483
        %v2265 = vmul.f32 %v1770, 0.4082483
        %v2266 = vmul.f32 %v1802, 0.4082483
        %v2267 = vmul.f32 %v1805, 0.4082483
        %v2268 = vmul.f32 %v1837, 0.4082483
        %v2269 = vmul.f32 %v1840, 0.4082483
        %v2270 = vmul.f32 %v1872, 0.4082483
        %v2271 = vmul.f32 %v1875, 0.4082483
        %v2272 = vmul.f32 %v1907, 0.4082483
        %v2273 = vmul.f32 %v1910, 0.4082483
        %v2274 = vmul.f32 %v1942, 0.4082483
        %v2275 = vmul.f32 %v1945, 0.4082483
        %v2276 = vmul.f32 %v1977, 0.4082483
        %v2277 = vmul.f32 %v1980, 0.4082483
        %v2278 = vmul.f32 %v2012, 0.4082483
        %v2279 = vmul.f32 %v2015, 0.4082483
        %v2280 = vmul.f32 %v2047, 0.4082483
        %v2281 = vmul.f32 %v2050, 0.4082483
        %v2282 = vmul.f32 %v2082, 0.4082483
        %v2283 = vmul.f32 %v2085, 0.4082483
        %v2284 = vmul.f32 %v2117, 0.4082483
        %v2285 = vmul.f32 %v2120, 0.4082483
        %v2286 = vmul.f32 %v2152, 0.4082483
        %v2287 = vmul.f32 %v2155, 0.4082483
        %v2288 = vmul.f32 %v2187, 0.4082483
        %v2289 = vmul.f32 %v2190, 0.4082483
        %v2290 = vmul.f32 %v2222, 0.4082483
        %v2291 = vmul.f32 %v2225, 0.4082483
        %v2292 = vmul.f32 %v2257, 0.4082483
        %v2293 = vmul.f32 %v2260, 0.4082483
        %vm2294 = vcmask 130048
        %v2295 = vsel %vm2294, %v2262, -inf
        %v2296 = vsel %vm2294, %v2263, -inf
        %v2297 = vmax.f32 %v2295, %v2296
        %v2298 = vrot.slane %v2297, 4
        %v2299 = vmax.f32 %v2297, %v2298
        %v2300 = vrot.slane %v2299, 2
        %v2301 = vmax.f32 %v2299, %v2300
        %v2302 = vrot.slane %v2301, 1
        %v2303 = vmax.f32 %v2301, %v2302
        %v2304 = vsel %vm2294, %v2264, -inf
        %v2305 = vsel %vm2294, %v2265, -inf
        %v2306 = vmax.f32 %v2304, %v2305
        %v2307 = vrot.slane %v2306, 4
        %v2308 = vmax.f32 %v2306, %v2307
        %v2309 = vrot.slane %v2308, 2
        %v2310 = vmax.f32 %v2308, %v2309
        %v2311 = vrot.slane %v2310, 1
        %v2312 = vmax.f32 %v2310, %v2311
        %v2313 = vsel %vm2294, %v2266, -inf
        %v2314 = vsel %vm2294, %v2267, -inf
        %v2315 = vmax.f32 %v2313, %v2314
        %v2316 = vrot.slane %v2315, 4
        %v2317 = vmax.f32 %v2315, %v2316
        %v2318 = vrot.slane %v2317, 2
        %v2319 = vmax.f32 %v2317, %v2318
        %v2320 = vrot.slane %v2319, 1
        %v2321 = vmax.f32 %v2319, %v2320
        %v2322 = vsel %vm2294, %v2268, -inf
        %v2323 = vsel %vm2294, %v2269, -inf
        %v2324 = vmax.f32 %v2322, %v2323
        %v2325 = vrot.slane %v2324, 4
        %v2326 = vmax.f32 %v2324, %v2325
        %v2327 = vrot.slane %v2326, 2
        %v2328 = vmax.f32 %v2326, %v2327
        %v2329 = vrot.slane %v2328, 1
        %v2330 = vmax.f32 %v2328, %v2329
        %v2331 = vsel %vm2294, %v2270, -inf
        %v2332 = vsel %vm2294, %v2271, -inf
        %v2333 = vmax.f32 %v2331, %v2332
        %v2334 = vrot.slane %v2333, 4
        %v2335 = vmax.f32 %v2333, %v2334
        %v2336 = vrot.slane %v2335, 2
        %v2337 = vmax.f32 %v2335, %v2336
        %v2338 = vrot.slane %v2337, 1
        %v2339 = vmax.f32 %v2337, %v2338
        %v2340 = vsel %vm2294, %v2272, -inf
        %v2341 = vsel %vm2294, %v2273, -inf
        %v2342 = vmax.f32 %v2340, %v2341
        %v2343 = vrot.slane %v2342, 4
        %v2344 = vmax.f32 %v2342, %v2343
        %v2345 = vrot.slane %v2344, 2
        %v2346 = vmax.f32 %v2344, %v2345
        %v2347 = vrot.slane %v2346, 1
        %v2348 = vmax.f32 %v2346, %v2347
        %v2349 = vsel %vm2294, %v2274, -inf
        %v2350 = vsel %vm2294, %v2275, -inf
        %v2351 = vmax.f32 %v2349, %v2350
        %v2352 = vrot.slane %v2351, 4
        %v2353 = vmax.f32 %v2351, %v2352
        %v2354 = vrot.slane %v2353, 2
        %v2355 = vmax.f32 %v2353, %v2354
        %v2356 = vrot.slane %v2355, 1
        %v2357 = vmax.f32 %v2355, %v2356
        %v2358 = vsel %vm2294, %v2276, -inf
        %v2359 = vsel %vm2294, %v2277, -inf
        %v2360 = vmax.f32 %v2358, %v2359
        %v2361 = vrot.slane %v2360, 4
        %v2362 = vmax.f32 %v2360, %v2361
        %v2363 = vrot.slane %v2362, 2
        %v2364 = vmax.f32 %v2362, %v2363
        %v2365 = vrot.slane %v2364, 1
        %v2366 = vmax.f32 %v2364, %v2365
        %v2367 = vsel %vm2294, %v2278, -inf
        %v2368 = vsel %vm2294, %v2279, -inf
        %v2369 = vmax.f32 %v2367, %v2368
        %v2370 = vrot.slane %v2369, 4
        %v2371 = vmax.f32 %v2369, %v2370
        %v2372 = vrot.slane %v2371, 2
        %v2373 = vmax.f32 %v2371, %v2372
        %v2374 = vrot.slane %v2373, 1
        %v2375 = vmax.f32 %v2373, %v2374
        %v2376 = vsel %vm2294, %v2280, -inf
        %v2377 = vsel %vm2294, %v2281, -inf
        %v2378 = vmax.f32 %v2376, %v2377
        %v2379 = vrot.slane %v2378, 4
        %v2380 = vmax.f32 %v2378, %v2379
        %v2381 = vrot.slane %v2380, 2
        %v2382 = vmax.f32 %v2380, %v2381
        %v2383 = vrot.slane %v2382, 1
        %v2384 = vmax.f32 %v2382, %v2383
        %v2385 = vsel %vm2294, %v2282, -inf
        %v2386 = vsel %vm2294, %v2283, -inf
        %v2387 = vmax.f32 %v2385, %v2386
        %v2388 = vrot.slane %v2387, 4
        %v2389 = vmax.f32 %v2387, %v2388
        %v2390 = vrot.slane %v2389, 2
        %v2391 = vmax.f32 %v2389, %v2390
        %v2392 = vrot.slane %v2391, 1
        %v2393 = vmax.f32 %v2391, %v2392
        %v2394 = vsel %vm2294, %v2284, -inf
        %v2395 = vsel %vm2294, %v2285, -inf
        %v2396 = vmax.f32 %v2394, %v2395
        %v2397 = vrot.slane %v2396, 4
        %v2398 = vmax.f32 %v2396, %v2397
        %v2399 = vrot.slane %v2398, 2
        %v2400 = vmax.f32 %v2398, %v2399
        %v2401 = vrot.slane %v2400, 1
        %v2402 = vmax.f32 %v2400, %v2401
        %v2403 = vsel %vm2294, %v2286, -inf
        %v2404 = vsel %vm2294, %v2287, -inf
        %v2405 = vmax.f32 %v2403, %v2404
        %v2406 = vrot.slane %v2405, 4
        %v2407 = vmax.f32 %v2405, %v2406
        %v2408 = vrot.slane %v2407, 2
        %v2409 = vmax.f32 %v2407, %v2408
        %v2410 = vrot.slane %v2409, 1
        %v2411 = vmax.f32 %v2409, %v2410
        %v2412 = vsel %vm2294, %v2288, -inf
        %v2413 = vsel %vm2294, %v2289, -inf
        %v2414 = vmax.f32 %v2412, %v2413
        %v2415 = vrot.slane %v2414, 4
        %v2416 = vmax.f32 %v2414, %v2415
        %v2417 = vrot.slane %v2416, 2
        %v2418 = vmax.f32 %v2416, %v2417
        %v2419 = vrot.slane %v2418, 1
        %v2420 = vmax.f32 %v2418, %v2419
        %v2421 = vsel %vm2294, %v2290, -inf
        %v2422 = vsel %vm2294, %v2291, -inf
        %v2423 = vmax.f32 %v2421, %v2422
        %v2424 = vrot.slane %v2423, 4
        %v2425 = vmax.f32 %v2423, %v2424
        %v2426 = vrot.slane %v2425, 2
        %v2427 = vmax.f32 %v2425, %v2426
        %v2428 = vrot.slane %v2427, 1
        %v2429 = vmax.f32 %v2427, %v2428
        %v2430 = vsel %vm2294, %v2292, -inf
        %v2431 = vsel %vm2294, %v2293, -inf
        %v2432 = vmax.f32 %v2430, %v2431
        %v2433 = vrot.slane %v2432, 4
        %v2434 = vmax.f32 %v2432, %v2433
        %v2435 = vrot.slane %v2434, 2
        %v2436 = vmax.f32 %v2434, %v2435
        %v2437 = vrot.slane %v2436, 1
        %v2438 = vmax.f32 %v2436, %v2437
        %v2439 = vsub.f32 %v2262, %v2303
        %v2440 = vsub.f32 %v2263, %v2303
        %v2441 = vsub.f32 %v2264, %v2312
        %v2442 = vsub.f32 %v2265, %v2312
        %v2443 = vsub.f32 %v2266, %v2321
        %v2444 = vsub.f32 %v2267, %v2321
        %v2445 = vsub.f32 %v2268, %v2330
        %v2446 = vsub.f32 %v2269, %v2330
        %v2447 = vsub.f32 %v2270, %v2339
        %v2448 = vsub.f32 %v2271, %v2339
        %v2449 = vsub.f32 %v2272, %v2348
        %v2450 = vsub.f32 %v2273, %v2348
        %v2451 = vsub.f32 %v2274, %v2357
        %v2452 = vsub.f32 %v2275, %v2357
        %v2453 = vsub.f32 %v2276, %v2366
        %v2454 = vsub.f32 %v2277, %v2366
        %v2455 = vsub.f32 %v2278, %v2375
        %v2456 = vsub.f32 %v2279, %v2375
        %v2457 = vsub.f32 %v2280, %v2384
        %v2458 = vsub.f32 %v2281, %v2384
        %v2459 = vsub.f32 %v2282, %v2393
        %v2460 = vsub.f32 %v2283, %v2393
        %v2461 = vsub.f32 %v2284, %v2402
        %v2462 = vsub.f32 %v2285, %v2402
        %v2463 = vsub.f32 %v2286, %v2411
        %v2464 = vsub.f32 %v2287, %v2411
        %v2465 = vsub.f32 %v2288, %v2420
        %v2466 = vsub.f32 %v2289, %v2420
        %v2467 = vsub.f32 %v2290, %v2429
        %v2468 = vsub.f32 %v2291, %v2429
        %v2469 = vsub.f32 %v2292, %v2438
        %v2470 = vsub.f32 %v2293, %v2438
        %v2471 = vmul.f32 %v2439, 1.442695
        %v2472 = vpow.pop %v2471
        %v2473 = vmul.f32 %v2440, 1.442695
        %v2474 = vpow.pop %v2473
        %v2475 = vmul.f32 %v2441, 1.442695
        %v2476 = vpow.pop %v2475
        %v2477 = vmul.f32 %v2442, 1.442695
        %v2478 = vpow.pop %v2477
        %v2479 = vmul.f32 %v2443, 1.442695
        %v2480 = vpow.pop %v2479
        %v2481 = vmul.f32 %v2444, 1.442695
        %v2482 = vpow.pop %v2481
        %v2483 = vmul.f32 %v2445, 1.442695
        %v2484 = vpow.pop %v2483
        %v2485 = vmul.f32 %v2446, 1.442695
        %v2486 = vpow.pop %v2485
        %v2487 = vmul.f32 %v2447, 1.442695
        %v2488 = vpow.pop %v2487
        %v2489 = vmul.f32 %v2448, 1.442695
        %v2490 = vpow.pop %v2489
        %v2491 = vmul.f32 %v2449, 1.442695
        %v2492 = vpow.pop %v2491
        %v2493 = vmul.f32 %v2450, 1.442695
        %v2494 = vpow.pop %v2493
        %v2495 = vmul.f32 %v2451, 1.442695
        %v2496 = vpow.pop %v2495
        %v2497 = vmul.f32 %v2452, 1.442695
        %v2498 = vpow.pop %v2497
        %v2499 = vmul.f32 %v2453, 1.442695
        %v2500 = vpow.pop %v2499
        %v2501 = vmul.f32 %v2454, 1.442695
        %v2502 = vpow.pop %v2501
        %v2503 = vmul.f32 %v2455, 1.442695
        %v2504 = vpow.pop %v2503
        %v2505 = vmul.f32 %v2456, 1.442695
        %v2506 = vpow.pop %v2505
        %v2507 = vmul.f32 %v2457, 1.442695
        %v2508 = vpow.pop %v2507
        %v2509 = vmul.f32 %v2458, 1.442695
        %v2510 = vpow.pop %v2509
        %v2511 = vmul.f32 %v2459, 1.442695
        %v2512 = vpow.pop %v2511
        %v2513 = vmul.f32 %v2460, 1.442695
        %v2514 = vpow.pop %v2513
        %v2515 = vmul.f32 %v2461, 1.442695
        %v2516 = vpow.pop %v2515
        %v2517 = vmul.f32 %v2462, 1.442695
        %v2518 = vpow.pop %v2517
        %v2519 = vmul.f32 %v2463, 1.442695
        %v2520 = vpow.pop %v2519
        %v2521 = vmul.f32 %v2464, 1.442695
        %v2522 = vpow.pop %v2521
        %v2523 = vmul.f32 %v2465, 1.442695
        %v2524 = vpow.pop %v2523
        %v2525 = vmul.f32 %v2466, 1.442695
        %v2526 = vpow.pop %v2525
        %v2527 = vmul.f32 %v2467, 1.442695
        %v2528 = vpow.pop %v2527
        %v2529 = vmul.f32 %v2468, 1.442695
        %v2530 = vpow.pop %v2529
        %v2531 = vmul.f32 %v2469, 1.442695
        %v2532 = vpow.pop %v2531
        %v2533 = vmul.f32 %v2470, 1.442695
        %v2534 = vpow.pop %v2533
        %v2535 = vsel %vm2294, %v2472, 0.0
        %v2536 = vsel %vm2294, %v2474, 0.0
        %v2537 = vadd.f32 %v2535, %v2536
        %v2538 = vrot.slane %v2537, 4
        %v2539 = vadd.f32 %v2537, %v2538
        %v2540 = vrot.slane %v2539, 2
        %v2541 = vadd.f32 %v2539, %v2540
        %v2542 = vrot.slane %v2541, 1
        %v2543 = vadd.f32 %v2541, %v2542
        %v2544 = vsel %vm2294, %v2476, 0.0
        %v2545 = vsel %vm2294, %v2478, 0.0
        %v2546 = vadd.f32 %v2544, %v2545
        %v2547 = vrot.slane %v2546, 4
        %v2548 = vadd.f32 %v2546, %v2547
        %v2549 = vrot.slane %v2548, 2
        %v2550 = vadd.f32 %v2548, %v2549
        %v2551 = vrot.slane %v2550, 1
        %v2552 = vadd.f32 %v2550, %v2551
        %v2553 = vsel %vm2294, %v2480, 0.0
        %v2554 = vsel %vm2294, %v2482, 0.0
        %v2555 = vadd.f32 %v2553, %v2554
        %v2556 = vrot.slane %v2555, 4
        %v2557 = vadd.f32 %v2555, %v2556
        %v2558 = vrot.slane %v2557, 2
        %v2559 = vadd.f32 %v2557, %v2558
        %v2560 = vrot.slane %v2559, 1
        %v2561 = vadd.f32 %v2559, %v2560
        %v2562 = vsel %vm2294, %v2484, 0.0
        %v2563 = vsel %vm2294, %v2486, 0.0
        %v2564 = vadd.f32 %v2562, %v2563
        %v2565 = vrot.slane %v2564, 4
        %v2566 = vadd.f32 %v2564, %v2565
        %v2567 = vrot.slane %v2566, 2
        %v2568 = vadd.f32 %v2566, %v2567
        %v2569 = vrot.slane %v2568, 1
        %v2570 = vadd.f32 %v2568, %v2569
        %v2571 = vsel %vm2294, %v2488, 0.0
        %v2572 = vsel %vm2294, %v2490, 0.0
        %v2573 = vadd.f32 %v2571, %v2572
        %v2574 = vrot.slane %v2573, 4
        %v2575 = vadd.f32 %v2573, %v2574
        %v2576 = vrot.slane %v2575, 2
        %v2577 = vadd.f32 %v2575, %v2576
        %v2578 = vrot.slane %v2577, 1
        %v2579 = vadd.f32 %v2577, %v2578
        %v2580 = vsel %vm2294, %v2492, 0.0
        %v2581 = vsel %vm2294, %v2494, 0.0
        %v2582 = vadd.f32 %v2580, %v2581
        %v2583 = vrot.slane %v2582, 4
        %v2584 = vadd.f32 %v2582, %v2583
        %v2585 = vrot.slane %v2584, 2
        %v2586 = vadd.f32 %v2584, %v2585
        %v2587 = vrot.slane %v2586, 1
        %v2588 = vadd.f32 %v2586, %v2587
        %v2589 = vsel %vm2294, %v2496, 0.0
        %v2590 = vsel %vm2294, %v2498, 0.0
        %v2591 = vadd.f32 %v2589, %v2590
        %v2592 = vrot.slane %v2591, 4
        %v2593 = vadd.f32 %v2591, %v2592
        %v2594 = vrot.slane %v2593, 2
        %v2595 = vadd.f32 %v2593, %v2594
        %v2596 = vrot.slane %v2595, 1
        %v2597 = vadd.f32 %v2595, %v2596
        %v2598 = vsel %vm2294, %v2500, 0.0
        %v2599 = vsel %vm2294, %v2502, 0.0
        %v2600 = vadd.f32 %v2598, %v2599
        %v2601 = vrot.slane %v2600, 4
        %v2602 = vadd.f32 %v2600, %v2601
        %v2603 = vrot.slane %v2602, 2
        %v2604 = vadd.f32 %v2602, %v2603
        %v2605 = vrot.slane %v2604, 1
        %v2606 = vadd.f32 %v2604, %v2605
        %v2607 = vsel %vm2294, %v2504, 0.0
        %v2608 = vsel %vm2294, %v2506, 0.0
        %v2609 = vadd.f32 %v2607, %v2608
        %v2610 = vrot.slane %v2609, 4
        %v2611 = vadd.f32 %v2609, %v2610
        %v2612 = vrot.slane %v2611, 2
        %v2613 = vadd.f32 %v2611, %v2612
        %v2614 = vrot.slane %v2613, 1
        %v2615 = vadd.f32 %v2613, %v2614
        %v2616 = vsel %vm2294, %v2508, 0.0
        %v2617 = vsel %vm2294, %v2510, 0.0
        %v2618 = vadd.f32 %v2616, %v2617
        %v2619 = vrot.slane %v2618, 4
        %v2620 = vadd.f32 %v2618, %v2619
        %v2621 = vrot.slane %v2620, 2
        %v2622 = vadd.f32 %v2620, %v2621
        %v2623 = vrot.slane %v2622, 1
        %v2624 = vadd.f32 %v2622, %v2623
        %v2625 = vsel %vm2294, %v2512, 0.0
        %v2626 = vsel %vm2294, %v2514, 0.0
        %v2627 = vadd.f32 %v2625, %v2626
        %v2628 = vrot.slane %v2627, 4
        %v2629 = vadd.f32 %v2627, %v2628
        %v2630 = vrot.slane %v2629, 2
        %v2631 = vadd.f32 %v2629, %v2630
        %v2632 = vrot.slane %v2631, 1
        %v2633 = vadd.f32 %v2631, %v2632
        %v2634 = vsel %vm2294, %v2516, 0.0
        %v2635 = vsel %vm2294, %v2518, 0.0
        %v2636 = vadd.f32 %v2634, %v2635
        %v2637 = vrot.slane %v2636, 4
        %v2638 = vadd.f32 %v2636, %v2637
        %v2639 = vrot.slane %v2638, 2
        %v2640 = vadd.f32 %v2638, %v2639
        %v2641 = vrot.slane %v2640, 1
        %v2642 = vadd.f32 %v2640, %v2641
        %v2643 = vsel %vm2294, %v2520, 0.0
        %v2644 = vsel %vm2294, %v2522, 0.0
        %v2645 = vadd.f32 %v2643, %v2644
        %v2646 = vrot.slane %v2645, 4
        %v2647 = vadd.f32 %v2645, %v2646
        %v2648 = vrot.slane %v2647, 2
        %v2649 = vadd.f32 %v2647, %v2648
        %v2650 = vrot.slane %v2649, 1
        %v2651 = vadd.f32 %v2649, %v2650
        %v2652 = vsel %vm2294, %v2524, 0.0
        %v2653 = vsel %vm2294, %v2526, 0.0
        %v2654 = vadd.f32 %v2652, %v2653
        %v2655 = vrot.slane %v2654, 4
        %v2656 = vadd.f32 %v2654, %v2655
        %v2657 = vrot.slane %v2656, 2
        %v2658 = vadd.f32 %v2656, %v2657
        %v2659 = vrot.slane %v2658, 1
        %v2660 = vadd.f32 %v2658, %v2659
        %v2661 = vsel %vm2294, %v2528, 0.0
        %v2662 = vsel %vm2294, %v2530, 0.0
        %v2663 = vadd.f32 %v2661, %v2662
        %v2664 = vrot.slane %v2663, 4
        %v2665 = vadd.f32 %v2663, %v2664
        %v2666 = vrot.slane %v2665, 2
        %v2667 = vadd.f32 %v2665, %v2666
        %v2668 = vrot.slane %v2667, 1
        %v2669 = vadd.f32 %v2667, %v2668
        %v2670 = vsel %vm2294, %v2532, 0.0
        %v2671 = vsel %vm2294, %v2534, 0.0
        %v2672 = vadd.f32 %v2670, %v2671
        %v2673 = vrot.slane %v2672, 4
        %v2674 = vadd.f32 %v2672, %v2673
        %v2675 = vrot.slane %v2674, 2
        %v2676 = vadd.f32 %v2674, %v2675
        %v2677 = vrot.slane %v2676, 1
        %v2678 = vadd.f32 %v2676, %v2677
        %v2679 = vrcp.pop %v2543
        %v2680 = vrcp.pop %v2552
        %v2681 = vrcp.pop %v2561
        %v2682 = vrcp.pop %v2570
        %v2683 = vrcp.pop %v2579
        %v2684 = vrcp.pop %v2588
        %v2685 = vrcp.pop %v2597
        %v2686 = vrcp.pop %v2606
        %v2687 = vrcp.pop %v2615
        %v2688 = vrcp.pop %v2624
        %v2689 = vrcp.pop %v2633
        %v2690 = vrcp.pop %v2642
        %v2691 = vrcp.pop %v2651
        %v2692 = vrcp.pop %v2660
        %v2693 = vrcp.pop %v2669
        %v2694 = vrcp.pop %v2678
        %v2695 = vmul.f32 %v2472, %v2679
        %v2696 = vmul.f32 %v2474, %v2679
        %v2697 = vmul.f32 %v2476, %v2680
        %v2698 = vmul.f32 %v2478, %v2680
        %v2699 = vmul.f32 %v2480, %v2681
        %v2700 = vmul.f32 %v2482, %v2681
        %v2701 = vmul.f32 %v2484, %v2682
        %v2702 = vmul.f32 %v2486, %v2682
        %v2703 = vmul.f32 %v2488, %v2683
        %v2704 = vmul.f32 %v2490, %v2683
        %v2705 = vmul.f32 %v2492, %v2684
        %v2706 = vmul.f32 %v2494, %v2684
        %v2707 = vmul.f32 %v2496, %v2685
        %v2708 = vmul.f32 %v2498, %v2685
        %v2709 = vmul.f32 %v2500, %v2686
        %v2710 = vmul.f32 %v2502, %v2686
        %v2711 = vmul.f32 %v2504, %v2687
        %v2712 = vmul.f32 %v2506, %v2687
        %v2713 = vmul.f32 %v2508, %v2688
        %v2714 = vmul.f32 %v2510, %v2688
        %v2715 = vmul.f32 %v2512, %v2689
        %v2716 = vmul.f32 %v2514, %v2689
        %v2717 = vmul.f32 %v2516, %v2690
        %v2718 = vmul.f32 %v2518, %v2690
        %v2719 = vmul.f32 %v2520, %v2691
        %v2720 = vmul.f32 %v2522, %v2691
        %v2721 = vmul.f32 %v2524, %v2692
        %v2722 = vmul.f32 %v2526, %v2692
        %v2723 = vmul.f32 %v2528, %v2693
        %v2724 = vmul.f32 %v2530, %v2693
        %v2725 = vmul.f32 %v2532, %v2694
        %v2726 = vmul.f32 %v2534, %v2694
        %2727 = vxpose.xlu0.b32.start [1/16] %v2695, 128
        %2728 = vxpose.xlu0.b32.cont [2/16] %v2696, 128
        %2729 = vxpose.xlu0.b32.cont [3/16] 0.0, 128
        %2730 = vxpose.xlu0.b32.cont [4/16] 0.0, 128
        %2731 = vxpose.xlu0.b32.cont [5/16] 0.0, 128
        %2732 = vxpose.xlu0.b32.cont [6/16] 0.0, 128
        %2733 = vxpose.xlu0.b32.cont [7/16] 0.0, 128
        %2734 = vxpose.xlu0.b32.cont [8/16] 0.0, 128
        %2735 = vxpose.xlu0.b32.cont [9/16] 0.0, 128
        %2736 = vxpose.xlu0.b32.cont [10/16] 0.0, 128
        %2737 = vxpose.xlu0.b32.cont [11/16] 0.0, 128
        %2738 = vxpose.xlu0.b32.cont [12/16] 0.0, 128
        %2739 = vxpose.xlu0.b32.cont [13/16] 0.0, 128
        %2740 = vxpose.xlu0.b32.cont [14/16] 0.0, 128
        %2741 = vxpose.xlu0.b32.cont [15/16] 0.0, 128
        %2742 = vxpose.xlu0.b32.end [16/16] 0.0, 128
        %v2743 = vpop.trf.xlu0
        %v2744 = vpop.trf.xlu0
        %v2745 = vpop.trf.xlu0
        %v2746 = vpop.trf.xlu0
        %v2747 = vpop.trf.xlu0
        %v2748 = vpop.trf.xlu0
        %v2749 = vpop.trf.xlu0
        %v2750 = vpop.trf.xlu0
        %v2751 = vpop.trf.xlu0
        %v2752 = vpop.trf.xlu0
        %v2753 = vpop.trf.xlu0
        %v2754 = vpop.trf.xlu0
        %v2755 = vpop.trf.xlu0
        %v2756 = vpop.trf.xlu0
        %v2757 = vpop.trf.xlu0
        %v2758 = vpop.trf.xlu0
        %v2760 = vsel %vm2294, %v2743, 0
        %v2763 = vsel %vm2294, %v2744, 0
        %2765 = vmatpush.msra.mxu0 0.0
        %2766 = vmatpush.msra.mxu0 0.0
        %2767 = vmatpush.msra.mxu0 0.0
        %2768 = vmatpush.msra.mxu0 0.0
        %2769 = vmatpush.msra.mxu0 0.0
        %2770 = vmatpush.msra.mxu0 0.0
        %2771 = vmatpush.msra.mxu0 0.0
        %2772 = vmatpush.msra.mxu0 0.0
        %2773 = vmatpush.msra.mxu0 0.0
        %2774 = vmatpush.msra.mxu0 0.0
        %2775 = vmatpush.msra.mxu0 0.0
        %2776 = vmatpush.msra.mxu0 0.0
        %2777 = vmatpush.msra.mxu0 0.0
        %2778 = vmatpush.msra.mxu0 0.0
        %2779 = vmatpush.msra.mxu0 %v1392
        %2780 = vmatpush.msra.mxu0 %v1389
        %2781 = vmatmul.f32.gmra.mxu0 %v2760
        %v2782 = vpop.f32.mrf.mxu0
        %v2783 = vadd.f32 0.0, %v2782
        %2784 = vmatmul.f32.gmra.mxu0 %v2763
        %v2785 = vpop.f32.mrf.mxu0
        %v2786 = vadd.f32 0.0, %v2785
        %2787 = vdwg.mxu0
        %2788 = vxpose.xlu0.b32.start [1/16] %v2697, 128
        %2789 = vxpose.xlu0.b32.cont [2/16] %v2698, 128
        %2790 = vxpose.xlu0.b32.cont [3/16] 0.0, 128
        %2791 = vxpose.xlu0.b32.cont [4/16] 0.0, 128
        %2792 = vxpose.xlu0.b32.cont [5/16] 0.0, 128
        %2793 = vxpose.xlu0.b32.cont [6/16] 0.0, 128
        %2794 = vxpose.xlu0.b32.cont [7/16] 0.0, 128
        %2795 = vxpose.xlu0.b32.cont [8/16] 0.0, 128
        %2796 = vxpose.xlu0.b32.cont [9/16] 0.0, 128
        %2797 = vxpose.xlu0.b32.cont [10/16] 0.0, 128
        %2798 = vxpose.xlu0.b32.cont [11/16] 0.0, 128
        %2799 = vxpose.xlu0.b32.cont [12/16] 0.0, 128
        %2800 = vxpose.xlu0.b32.cont [13/16] 0.0, 128
        %2801 = vxpose.xlu0.b32.cont [14/16] 0.0, 128
        %2802 = vxpose.xlu0.b32.cont [15/16] 0.0, 128
        %2803 = vxpose.xlu0.b32.end [16/16] 0.0, 128
        %v2804 = vpop.trf.xlu0
        %v2805 = vpop.trf.xlu0
        %v2806 = vpop.trf.xlu0
        %v2807 = vpop.trf.xlu0
        %v2808 = vpop.trf.xlu0
        %v2809 = vpop.trf.xlu0
        %v2810 = vpop.trf.xlu0
        %v2811 = vpop.trf.xlu0
        %v2812 = vpop.trf.xlu0
        %v2813 = vpop.trf.xlu0
        %v2814 = vpop.trf.xlu0
        %v2815 = vpop.trf.xlu0
        %v2816 = vpop.trf.xlu0
        %v2817 = vpop.trf.xlu0
        %v2818 = vpop.trf.xlu0
        %v2819 = vpop.trf.xlu0
        %v2821 = vsel %vm2294, %v2804, 0
        %v2824 = vsel %vm2294, %v2805, 0
        %2826 = vmatpush.msra.mxu0 0.0
        %2827 = vmatpush.msra.mxu0 0.0
        %2828 = vmatpush.msra.mxu0 0.0
        %2829 = vmatpush.msra.mxu0 0.0
        %2830 = vmatpush.msra.mxu0 0.0
        %2831 = vmatpush.msra.mxu0 0.0
        %2832 = vmatpush.msra.mxu0 0.0
        %2833 = vmatpush.msra.mxu0 0.0
        %2834 = vmatpush.msra.mxu0 0.0
        %2835 = vmatpush.msra.mxu0 0.0
        %2836 = vmatpush.msra.mxu0 0.0
        %2837 = vmatpush.msra.mxu0 0.0
        %2838 = vmatpush.msra.mxu0 0.0
        %2839 = vmatpush.msra.mxu0 0.0
        %2840 = vmatpush.msra.mxu0 %v1398
        %2841 = vmatpush.msra.mxu0 %v1395
        %2842 = vmatmul.f32.gmra.mxu0 %v2821
        %v2843 = vpop.f32.mrf.mxu0
        %v2844 = vadd.f32 0.0, %v2843
        %2845 = vmatmul.f32.gmra.mxu0 %v2824
        %v2846 = vpop.f32.mrf.mxu0
        %v2847 = vadd.f32 0.0, %v2846
        %2848 = vdwg.mxu0
        %2849 = vxpose.xlu0.b32.start [1/16] %v2699, 128
        %2850 = vxpose.xlu0.b32.cont [2/16] %v2700, 128
        %2851 = vxpose.xlu0.b32.cont [3/16] 0.0, 128
        %2852 = vxpose.xlu0.b32.cont [4/16] 0.0, 128
        %2853 = vxpose.xlu0.b32.cont [5/16] 0.0, 128
        %2854 = vxpose.xlu0.b32.cont [6/16] 0.0, 128
        %2855 = vxpose.xlu0.b32.cont [7/16] 0.0, 128
        %2856 = vxpose.xlu0.b32.cont [8/16] 0.0, 128
        %2857 = vxpose.xlu0.b32.cont [9/16] 0.0, 128
        %2858 = vxpose.xlu0.b32.cont [10/16] 0.0, 128
        %2859 = vxpose.xlu0.b32.cont [11/16] 0.0, 128
        %2860 = vxpose.xlu0.b32.cont [12/16] 0.0, 128
        %2861 = vxpose.xlu0.b32.cont [13/16] 0.0, 128
        %2862 = vxpose.xlu0.b32.cont [14/16] 0.0, 128
        %2863 = vxpose.xlu0.b32.cont [15/16] 0.0, 128
        %2864 = vxpose.xlu0.b32.end [16/16] 0.0, 128
        %v2865 = vpop.trf.xlu0
        %v2866 = vpop.trf.xlu0
        %v2867 = vpop.trf.xlu0
        %v2868 = vpop.trf.xlu0
        %v2869 = vpop.trf.xlu0
        %v2870 = vpop.trf.xlu0
        %v2871 = vpop.trf.xlu0
        %v2872 = vpop.trf.xlu0
        %v2873 = vpop.trf.xlu0
        %v2874 = vpop.trf.xlu0
        %v2875 = vpop.trf.xlu0
        %v2876 = vpop.trf.xlu0
        %v2877 = vpop.trf.xlu0
        %v2878 = vpop.trf.xlu0
        %v2879 = vpop.trf.xlu0
        %v2880 = vpop.trf.xlu0
        %v2882 = vsel %vm2294, %v2865, 0
        %v2885 = vsel %vm2294, %v2866, 0
        %2887 = vmatpush.msra.mxu0 0.0
        %2888 = vmatpush.msra.mxu0 0.0
        %2889 = vmatpush.msra.mxu0 0.0
        %2890 = vmatpush.msra.mxu0 0.0
        %2891 = vmatpush.msra.mxu0 0.0
        %2892 = vmatpush.msra.mxu0 0.0
        %2893 = vmatpush.msra.mxu0 0.0
        %2894 = vmatpush.msra.mxu0 0.0
        %2895 = vmatpush.msra.mxu0 0.0
        %2896 = vmatpush.msra.mxu0 0.0
        %2897 = vmatpush.msra.mxu0 0.0
        %2898 = vmatpush.msra.mxu0 0.0
        %2899 = vmatpush.msra.mxu0 0.0
        %2900 = vmatpush.msra.mxu0 0.0
        %2901 = vmatpush.msra.mxu0 %v1404
        %2902 = vmatpush.msra.mxu0 %v1401
        %2903 = vmatmul.f32.gmra.mxu0 %v2882
        %v2904 = vpop.f32.mrf.mxu0
        %v2905 = vadd.f32 0.0, %v2904
        %2906 = vmatmul.f32.gmra.mxu0 %v2885
        %v2907 = vpop.f32.mrf.mxu0
        %v2908 = vadd.f32 0.0, %v2907
        %2909 = vdwg.mxu0
        %2910 = vxpose.xlu0.b32.start [1/16] %v2701, 128
        %2911 = vxpose.xlu0.b32.cont [2/16] %v2702, 128
        %2912 = vxpose.xlu0.b32.cont [3/16] 0.0, 128
        %2913 = vxpose.xlu0.b32.cont [4/16] 0.0, 128
        %2914 = vxpose.xlu0.b32.cont [5/16] 0.0, 128
        %2915 = vxpose.xlu0.b32.cont [6/16] 0.0, 128
        %2916 = vxpose.xlu0.b32.cont [7/16] 0.0, 128
        %2917 = vxpose.xlu0.b32.cont [8/16] 0.0, 128
        %2918 = vxpose.xlu0.b32.cont [9/16] 0.0, 128
        %2919 = vxpose.xlu0.b32.cont [10/16] 0.0, 128
        %2920 = vxpose.xlu0.b32.cont [11/16] 0.0, 128
        %2921 = vxpose.xlu0.b32.cont [12/16] 0.0, 128
        %2922 = vxpose.xlu0.b32.cont [13/16] 0.0, 128
        %2923 = vxpose.xlu0.b32.cont [14/16] 0.0, 128
        %2924 = vxpose.xlu0.b32.cont [15/16] 0.0, 128
        %2925 = vxpose.xlu0.b32.end [16/16] 0.0, 128
        %v2926 = vpop.trf.xlu0
        %v2927 = vpop.trf.xlu0
        %v2928 = vpop.trf.xlu0
        %v2929 = vpop.trf.xlu0
        %v2930 = vpop.trf.xlu0
        %v2931 = vpop.trf.xlu0
        %v2932 = vpop.trf.xlu0
        %v2933 = vpop.trf.xlu0
        %v2934 = vpop.trf.xlu0
        %v2935 = vpop.trf.xlu0
        %v2936 = vpop.trf.xlu0
        %v2937 = vpop.trf.xlu0
        %v2938 = vpop.trf.xlu0
        %v2939 = vpop.trf.xlu0
        %v2940 = vpop.trf.xlu0
        %v2941 = vpop.trf.xlu0
        %v2943 = vsel %vm2294, %v2926, 0
        %v2946 = vsel %vm2294, %v2927, 0
        %2948 = vmatpush.msra.mxu0 0.0
        %2949 = vmatpush.msra.mxu0 0.0
        %2950 = vmatpush.msra.mxu0 0.0
        %2951 = vmatpush.msra.mxu0 0.0
        %2952 = vmatpush.msra.mxu0 0.0
        %2953 = vmatpush.msra.mxu0 0.0
        %2954 = vmatpush.msra.mxu0 0.0
        %2955 = vmatpush.msra.mxu0 0.0
        %2956 = vmatpush.msra.mxu0 0.0
        %2957 = vmatpush.msra.mxu0 0.0
        %2958 = vmatpush.msra.mxu0 0.0
        %2959 = vmatpush.msra.mxu0 0.0
        %2960 = vmatpush.msra.mxu0 0.0
        %2961 = vmatpush.msra.mxu0 0.0
        %2962 = vmatpush.msra.mxu0 %v1410
        %2963 = vmatpush.msra.mxu0 %v1407
        %2964 = vmatmul.f32.gmra.mxu0 %v2943
        %v2965 = vpop.f32.mrf.mxu0
        %v2966 = vadd.f32 0.0, %v2965
        %2967 = vmatmul.f32.gmra.mxu0 %v2946
        %v2968 = vpop.f32.mrf.mxu0
        %v2969 = vadd.f32 0.0, %v2968
        %2970 = vdwg.mxu0
        %2971 = vxpose.xlu0.b32.start [1/16] %v2703, 128
        %2972 = vxpose.xlu0.b32.cont [2/16] %v2704, 128
        %2973 = vxpose.xlu0.b32.cont [3/16] 0.0, 128
        %2974 = vxpose.xlu0.b32.cont [4/16] 0.0, 128
        %2975 = vxpose.xlu0.b32.cont [5/16] 0.0, 128
        %2976 = vxpose.xlu0.b32.cont [6/16] 0.0, 128
        %2977 = vxpose.xlu0.b32.cont [7/16] 0.0, 128
        %2978 = vxpose.xlu0.b32.cont [8/16] 0.0, 128
        %2979 = vxpose.xlu0.b32.cont [9/16] 0.0, 128
        %2980 = vxpose.xlu0.b32.cont [10/16] 0.0, 128
        %2981 = vxpose.xlu0.b32.cont [11/16] 0.0, 128
        %2982 = vxpose.xlu0.b32.cont [12/16] 0.0, 128
        %2983 = vxpose.xlu0.b32.cont [13/16] 0.0, 128
        %2984 = vxpose.xlu0.b32.cont [14/16] 0.0, 128
        %2985 = vxpose.xlu0.b32.cont [15/16] 0.0, 128
        %2986 = vxpose.xlu0.b32.end [16/16] 0.0, 128
        %v2987 = vpop.trf.xlu0
        %v2988 = vpop.trf.xlu0
        %v2989 = vpop.trf.xlu0
        %v2990 = vpop.trf.xlu0
        %v2991 = vpop.trf.xlu0
        %v2992 = vpop.trf.xlu0
        %v2993 = vpop.trf.xlu0
        %v2994 = vpop.trf.xlu0
        %v2995 = vpop.trf.xlu0
        %v2996 = vpop.trf.xlu0
        %v2997 = vpop.trf.xlu0
        %v2998 = vpop.trf.xlu0
        %v2999 = vpop.trf.xlu0
        %v3000 = vpop.trf.xlu0
        %v3001 = vpop.trf.xlu0
        %v3002 = vpop.trf.xlu0
        %v3004 = vsel %vm2294, %v2987, 0
        %v3007 = vsel %vm2294, %v2988, 0
        %3009 = vmatpush.msra.mxu0 0.0
        %3010 = vmatpush.msra.mxu0 0.0
        %3011 = vmatpush.msra.mxu0 0.0
        %3012 = vmatpush.msra.mxu0 0.0
        %3013 = vmatpush.msra.mxu0 0.0
        %3014 = vmatpush.msra.mxu0 0.0
        %3015 = vmatpush.msra.mxu0 0.0
        %3016 = vmatpush.msra.mxu0 0.0
        %3017 = vmatpush.msra.mxu0 0.0
        %3018 = vmatpush.msra.mxu0 0.0
        %3019 = vmatpush.msra.mxu0 0.0
        %3020 = vmatpush.msra.mxu0 0.0
        %3021 = vmatpush.msra.mxu0 0.0
        %3022 = vmatpush.msra.mxu0 0.0
        %3023 = vmatpush.msra.mxu0 %v1416
        %3024 = vmatpush.msra.mxu0 %v1413
        %3025 = vmatmul.f32.gmra.mxu0 %v3004
        %v3026 = vpop.f32.mrf.mxu0
        %v3027 = vadd.f32 0.0, %v3026
        %3028 = vmatmul.f32.gmra.mxu0 %v3007
        %v3029 = vpop.f32.mrf.mxu0
        %v3030 = vadd.f32 0.0, %v3029
        %3031 = vdwg.mxu0
        %3032 = vxpose.xlu0.b32.start [1/16] %v2705, 128
        %3033 = vxpose.xlu0.b32.cont [2/16] %v2706, 128
        %3034 = vxpose.xlu0.b32.cont [3/16] 0.0, 128
        %3035 = vxpose.xlu0.b32.cont [4/16] 0.0, 128
        %3036 = vxpose.xlu0.b32.cont [5/16] 0.0, 128
        %3037 = vxpose.xlu0.b32.cont [6/16] 0.0, 128
        %3038 = vxpose.xlu0.b32.cont [7/16] 0.0, 128
        %3039 = vxpose.xlu0.b32.cont [8/16] 0.0, 128
        %3040 = vxpose.xlu0.b32.cont [9/16] 0.0, 128
        %3041 = vxpose.xlu0.b32.cont [10/16] 0.0, 128
        %3042 = vxpose.xlu0.b32.cont [11/16] 0.0, 128
        %3043 = vxpose.xlu0.b32.cont [12/16] 0.0, 128
        %3044 = vxpose.xlu0.b32.cont [13/16] 0.0, 128
        %3045 = vxpose.xlu0.b32.cont [14/16] 0.0, 128
        %3046 = vxpose.xlu0.b32.cont [15/16] 0.0, 128
        %3047 = vxpose.xlu0.b32.end [16/16] 0.0, 128
        %v3048 = vpop.trf.xlu0
        %v3049 = vpop.trf.xlu0
        %v3050 = vpop.trf.xlu0
        %v3051 = vpop.trf.xlu0
        %v3052 = vpop.trf.xlu0
        %v3053 = vpop.trf.xlu0
        %v3054 = vpop.trf.xlu0
        %v3055 = vpop.trf.xlu0
        %v3056 = vpop.trf.xlu0
        %v3057 = vpop.trf.xlu0
        %v3058 = vpop.trf.xlu0
        %v3059 = vpop.trf.xlu0
        %v3060 = vpop.trf.xlu0
        %v3061 = vpop.trf.xlu0
        %v3062 = vpop.trf.xlu0
        %v3063 = vpop.trf.xlu0
        %v3065 = vsel %vm2294, %v3048, 0
        %v3068 = vsel %vm2294, %v3049, 0
        %3070 = vmatpush.msra.mxu0 0.0
        %3071 = vmatpush.msra.mxu0 0.0
        %3072 = vmatpush.msra.mxu0 0.0
        %3073 = vmatpush.msra.mxu0 0.0
        %3074 = vmatpush.msra.mxu0 0.0
        %3075 = vmatpush.msra.mxu0 0.0
        %3076 = vmatpush.msra.mxu0 0.0
        %3077 = vmatpush.msra.mxu0 0.0
        %3078 = vmatpush.msra.mxu0 0.0
        %3079 = vmatpush.msra.mxu0 0.0
        %3080 = vmatpush.msra.mxu0 0.0
        %3081 = vmatpush.msra.mxu0 0.0
        %3082 = vmatpush.msra.mxu0 0.0
        %3083 = vmatpush.msra.mxu0 0.0
        %3084 = vmatpush.msra.mxu0 %v1422
        %3085 = vmatpush.msra.mxu0 %v1419
        %3086 = vmatmul.f32.gmra.mxu0 %v3065
        %v3087 = vpop.f32.mrf.mxu0
        %v3088 = vadd.f32 0.0, %v3087
        %3089 = vmatmul.f32.gmra.mxu0 %v3068
        %v3090 = vpop.f32.mrf.mxu0
        %v3091 = vadd.f32 0.0, %v3090
        %3092 = vdwg.mxu0
        %3093 = vxpose.xlu0.b32.start [1/16] %v2707, 128
        %3094 = vxpose.xlu0.b32.cont [2/16] %v2708, 128
        %3095 = vxpose.xlu0.b32.cont [3/16] 0.0, 128
        %3096 = vxpose.xlu0.b32.cont [4/16] 0.0, 128
        %3097 = vxpose.xlu0.b32.cont [5/16] 0.0, 128
        %3098 = vxpose.xlu0.b32.cont [6/16] 0.0, 128
        %3099 = vxpose.xlu0.b32.cont [7/16] 0.0, 128
        %3100 = vxpose.xlu0.b32.cont [8/16] 0.0, 128
        %3101 = vxpose.xlu0.b32.cont [9/16] 0.0, 128
        %3102 = vxpose.xlu0.b32.cont [10/16] 0.0, 128
        %3103 = vxpose.xlu0.b32.cont [11/16] 0.0, 128
        %3104 = vxpose.xlu0.b32.cont [12/16] 0.0, 128
        %3105 = vxpose.xlu0.b32.cont [13/16] 0.0, 128
        %3106 = vxpose.xlu0.b32.cont [14/16] 0.0, 128
        %3107 = vxpose.xlu0.b32.cont [15/16] 0.0, 128
        %3108 = vxpose.xlu0.b32.end [16/16] 0.0, 128
        %v3109 = vpop.trf.xlu0
        %v3110 = vpop.trf.xlu0
        %v3111 = vpop.trf.xlu0
        %v3112 = vpop.trf.xlu0
        %v3113 = vpop.trf.xlu0
        %v3114 = vpop.trf.xlu0
        %v3115 = vpop.trf.xlu0
        %v3116 = vpop.trf.xlu0
        %v3117 = vpop.trf.xlu0
        %v3118 = vpop.trf.xlu0
        %v3119 = vpop.trf.xlu0
        %v3120 = vpop.trf.xlu0
        %v3121 = vpop.trf.xlu0
        %v3122 = vpop.trf.xlu0
        %v3123 = vpop.trf.xlu0
        %v3124 = vpop.trf.xlu0
        %v3126 = vsel %vm2294, %v3109, 0
        %v3129 = vsel %vm2294, %v3110, 0
        %3131 = vmatpush.msra.mxu0 0.0
        %3132 = vmatpush.msra.mxu0 0.0
        %3133 = vmatpush.msra.mxu0 0.0
        %3134 = vmatpush.msra.mxu0 0.0
        %3135 = vmatpush.msra.mxu0 0.0
        %3136 = vmatpush.msra.mxu0 0.0
        %3137 = vmatpush.msra.mxu0 0.0
        %3138 = vmatpush.msra.mxu0 0.0
        %3139 = vmatpush.msra.mxu0 0.0
        %3140 = vmatpush.msra.mxu0 0.0
        %3141 = vmatpush.msra.mxu0 0.0
        %3142 = vmatpush.msra.mxu0 0.0
        %3143 = vmatpush.msra.mxu0 0.0
        %3144 = vmatpush.msra.mxu0 0.0
        %3145 = vmatpush.msra.mxu0 %v1428
        %3146 = vmatpush.msra.mxu0 %v1425
        %3147 = vmatmul.f32.gmra.mxu0 %v3126
        %v3148 = vpop.f32.mrf.mxu0
        %v3149 = vadd.f32 0.0, %v3148
        %3150 = vmatmul.f32.gmra.mxu0 %v3129
        %v3151 = vpop.f32.mrf.mxu0
        %v3152 = vadd.f32 0.0, %v3151
        %3153 = vdwg.mxu0
        %3154 = vxpose.xlu0.b32.start [1/16] %v2709, 128
        %3155 = vxpose.xlu0.b32.cont [2/16] %v2710, 128
        %3156 = vxpose.xlu0.b32.cont [3/16] 0.0, 128
        %3157 = vxpose.xlu0.b32.cont [4/16] 0.0, 128
        %3158 = vxpose.xlu0.b32.cont [5/16] 0.0, 128
        %3159 = vxpose.xlu0.b32.cont [6/16] 0.0, 128
        %3160 = vxpose.xlu0.b32.cont [7/16] 0.0, 128
        %3161 = vxpose.xlu0.b32.cont [8/16] 0.0, 128
        %3162 = vxpose.xlu0.b32.cont [9/16] 0.0, 128
        %3163 = vxpose.xlu0.b32.cont [10/16] 0.0, 128
        %3164 = vxpose.xlu0.b32.cont [11/16] 0.0, 128
        %3165 = vxpose.xlu0.b32.cont [12/16] 0.0, 128
        %3166 = vxpose.xlu0.b32.cont [13/16] 0.0, 128
        %3167 = vxpose.xlu0.b32.cont [14/16] 0.0, 128
        %3168 = vxpose.xlu0.b32.cont [15/16] 0.0, 128
        %3169 = vxpose.xlu0.b32.end [16/16] 0.0, 128
        %v3170 = vpop.trf.xlu0
        %v3171 = vpop.trf.xlu0
        %v3172 = vpop.trf.xlu0
        %v3173 = vpop.trf.xlu0
        %v3174 = vpop.trf.xlu0
        %v3175 = vpop.trf.xlu0
        %v3176 = vpop.trf.xlu0
        %v3177 = vpop.trf.xlu0
        %v3178 = vpop.trf.xlu0
        %v3179 = vpop.trf.xlu0
        %v3180 = vpop.trf.xlu0
        %v3181 = vpop.trf.xlu0
        %v3182 = vpop.trf.xlu0
        %v3183 = vpop.trf.xlu0
        %v3184 = vpop.trf.xlu0
        %v3185 = vpop.trf.xlu0
        %v3187 = vsel %vm2294, %v3170, 0
        %v3190 = vsel %vm2294, %v3171, 0
        %3192 = vmatpush.msra.mxu0 0.0
        %3193 = vmatpush.msra.mxu0 0.0
        %3194 = vmatpush.msra.mxu0 0.0
        %3195 = vmatpush.msra.mxu0 0.0
        %3196 = vmatpush.msra.mxu0 0.0
        %3197 = vmatpush.msra.mxu0 0.0
        %3198 = vmatpush.msra.mxu0 0.0
        %3199 = vmatpush.msra.mxu0 0.0
        %3200 = vmatpush.msra.mxu0 0.0
        %3201 = vmatpush.msra.mxu0 0.0
        %3202 = vmatpush.msra.mxu0 0.0
        %3203 = vmatpush.msra.mxu0 0.0
        %3204 = vmatpush.msra.mxu0 0.0
        %3205 = vmatpush.msra.mxu0 0.0
        %3206 = vmatpush.msra.mxu0 %v1434
        %3207 = vmatpush.msra.mxu0 %v1431
        %3208 = vmatmul.f32.gmra.mxu0 %v3187
        %v3209 = vpop.f32.mrf.mxu0
        %v3210 = vadd.f32 0.0, %v3209
        %3211 = vmatmul.f32.gmra.mxu0 %v3190
        %v3212 = vpop.f32.mrf.mxu0
        %v3213 = vadd.f32 0.0, %v3212
        %3214 = vdwg.mxu0
        %3215 = vxpose.xlu0.b32.start [1/16] %v2711, 128
        %3216 = vxpose.xlu0.b32.cont [2/16] %v2712, 128
        %3217 = vxpose.xlu0.b32.cont [3/16] 0.0, 128
        %3218 = vxpose.xlu0.b32.cont [4/16] 0.0, 128
        %3219 = vxpose.xlu0.b32.cont [5/16] 0.0, 128
        %3220 = vxpose.xlu0.b32.cont [6/16] 0.0, 128
        %3221 = vxpose.xlu0.b32.cont [7/16] 0.0, 128
        %3222 = vxpose.xlu0.b32.cont [8/16] 0.0, 128
        %3223 = vxpose.xlu0.b32.cont [9/16] 0.0, 128
        %3224 = vxpose.xlu0.b32.cont [10/16] 0.0, 128
        %3225 = vxpose.xlu0.b32.cont [11/16] 0.0, 128
        %3226 = vxpose.xlu0.b32.cont [12/16] 0.0, 128
        %3227 = vxpose.xlu0.b32.cont [13/16] 0.0, 128
        %3228 = vxpose.xlu0.b32.cont [14/16] 0.0, 128
        %3229 = vxpose.xlu0.b32.cont [15/16] 0.0, 128
        %3230 = vxpose.xlu0.b32.end [16/16] 0.0, 128
        %v3231 = vpop.trf.xlu0
        %v3232 = vpop.trf.xlu0
        %v3233 = vpop.trf.xlu0
        %v3234 = vpop.trf.xlu0
        %v3235 = vpop.trf.xlu0
        %v3236 = vpop.trf.xlu0
        %v3237 = vpop.trf.xlu0
        %v3238 = vpop.trf.xlu0
        %v3239 = vpop.trf.xlu0
        %v3240 = vpop.trf.xlu0
        %v3241 = vpop.trf.xlu0
        %v3242 = vpop.trf.xlu0
        %v3243 = vpop.trf.xlu0
        %v3244 = vpop.trf.xlu0
        %v3245 = vpop.trf.xlu0
        %v3246 = vpop.trf.xlu0
        %v3248 = vsel %vm2294, %v3231, 0
        %v3251 = vsel %vm2294, %v3232, 0
        %3253 = vmatpush.msra.mxu0 0.0
        %3254 = vmatpush.msra.mxu0 0.0
        %3255 = vmatpush.msra.mxu0 0.0
        %3256 = vmatpush.msra.mxu0 0.0
        %3257 = vmatpush.msra.mxu0 0.0
        %3258 = vmatpush.msra.mxu0 0.0
        %3259 = vmatpush.msra.mxu0 0.0
        %3260 = vmatpush.msra.mxu0 0.0
        %3261 = vmatpush.msra.mxu0 0.0
        %3262 = vmatpush.msra.mxu0 0.0
        %3263 = vmatpush.msra.mxu0 0.0
        %3264 = vmatpush.msra.mxu0 0.0
        %3265 = vmatpush.msra.mxu0 0.0
        %3266 = vmatpush.msra.mxu0 0.0
        %3267 = vmatpush.msra.mxu0 %v1440
        %3268 = vmatpush.msra.mxu0 %v1437
        %3269 = vmatmul.f32.gmra.mxu0 %v3248
        %v3270 = vpop.f32.mrf.mxu0
        %v3271 = vadd.f32 0.0, %v3270
        %3272 = vmatmul.f32.gmra.mxu0 %v3251
        %v3273 = vpop.f32.mrf.mxu0
        %v3274 = vadd.f32 0.0, %v3273
        %3275 = vdwg.mxu0
        %3276 = vxpose.xlu0.b32.start [1/16] %v2713, 128
        %3277 = vxpose.xlu0.b32.cont [2/16] %v2714, 128
        %3278 = vxpose.xlu0.b32.cont [3/16] 0.0, 128
        %3279 = vxpose.xlu0.b32.cont [4/16] 0.0, 128
        %3280 = vxpose.xlu0.b32.cont [5/16] 0.0, 128
        %3281 = vxpose.xlu0.b32.cont [6/16] 0.0, 128
        %3282 = vxpose.xlu0.b32.cont [7/16] 0.0, 128
        %3283 = vxpose.xlu0.b32.cont [8/16] 0.0, 128
        %3284 = vxpose.xlu0.b32.cont [9/16] 0.0, 128
        %3285 = vxpose.xlu0.b32.cont [10/16] 0.0, 128
        %3286 = vxpose.xlu0.b32.cont [11/16] 0.0, 128
        %3287 = vxpose.xlu0.b32.cont [12/16] 0.0, 128
        %3288 = vxpose.xlu0.b32.cont [13/16] 0.0, 128
        %3289 = vxpose.xlu0.b32.cont [14/16] 0.0, 128
        %3290 = vxpose.xlu0.b32.cont [15/16] 0.0, 128
        %3291 = vxpose.xlu0.b32.end [16/16] 0.0, 128
        %v3292 = vpop.trf.xlu0
        %v3293 = vpop.trf.xlu0
        %v3294 = vpop.trf.xlu0
        %v3295 = vpop.trf.xlu0
        %v3296 = vpop.trf.xlu0
        %v3297 = vpop.trf.xlu0
        %v3298 = vpop.trf.xlu0
        %v3299 = vpop.trf.xlu0
        %v3300 = vpop.trf.xlu0
        %v3301 = vpop.trf.xlu0
        %v3302 = vpop.trf.xlu0
        %v3303 = vpop.trf.xlu0
        %v3304 = vpop.trf.xlu0
        %v3305 = vpop.trf.xlu0
        %v3306 = vpop.trf.xlu0
        %v3307 = vpop.trf.xlu0
        %v3309 = vsel %vm2294, %v3292, 0
        %v3312 = vsel %vm2294, %v3293, 0
        %3314 = vmatpush.msra.mxu0 0.0
        %3315 = vmatpush.msra.mxu0 0.0
        %3316 = vmatpush.msra.mxu0 0.0
        %3317 = vmatpush.msra.mxu0 0.0
        %3318 = vmatpush.msra.mxu0 0.0
        %3319 = vmatpush.msra.mxu0 0.0
        %3320 = vmatpush.msra.mxu0 0.0
        %3321 = vmatpush.msra.mxu0 0.0
        %3322 = vmatpush.msra.mxu0 0.0
        %3323 = vmatpush.msra.mxu0 0.0
        %3324 = vmatpush.msra.mxu0 0.0
        %3325 = vmatpush.msra.mxu0 0.0
        %3326 = vmatpush.msra.mxu0 0.0
        %3327 = vmatpush.msra.mxu0 0.0
        %3328 = vmatpush.msra.mxu0 %v1446
        %3329 = vmatpush.msra.mxu0 %v1443
        %3330 = vmatmul.f32.gmra.mxu0 %v3309
        %v3331 = vpop.f32.mrf.mxu0
        %v3332 = vadd.f32 0.0, %v3331
        %3333 = vmatmul.f32.gmra.mxu0 %v3312
        %v3334 = vpop.f32.mrf.mxu0
        %v3335 = vadd.f32 0.0, %v3334
        %3336 = vdwg.mxu0
        %3337 = vxpose.xlu0.b32.start [1/16] %v2715, 128
        %3338 = vxpose.xlu0.b32.cont [2/16] %v2716, 128
        %3339 = vxpose.xlu0.b32.cont [3/16] 0.0, 128
        %3340 = vxpose.xlu0.b32.cont [4/16] 0.0, 128
        %3341 = vxpose.xlu0.b32.cont [5/16] 0.0, 128
        %3342 = vxpose.xlu0.b32.cont [6/16] 0.0, 128
        %3343 = vxpose.xlu0.b32.cont [7/16] 0.0, 128
        %3344 = vxpose.xlu0.b32.cont [8/16] 0.0, 128
        %3345 = vxpose.xlu0.b32.cont [9/16] 0.0, 128
        %3346 = vxpose.xlu0.b32.cont [10/16] 0.0, 128
        %3347 = vxpose.xlu0.b32.cont [11/16] 0.0, 128
        %3348 = vxpose.xlu0.b32.cont [12/16] 0.0, 128
        %3349 = vxpose.xlu0.b32.cont [13/16] 0.0, 128
        %3350 = vxpose.xlu0.b32.cont [14/16] 0.0, 128
        %3351 = vxpose.xlu0.b32.cont [15/16] 0.0, 128
        %3352 = vxpose.xlu0.b32.end [16/16] 0.0, 128
        %v3353 = vpop.trf.xlu0
        %v3354 = vpop.trf.xlu0
        %v3355 = vpop.trf.xlu0
        %v3356 = vpop.trf.xlu0
        %v3357 = vpop.trf.xlu0
        %v3358 = vpop.trf.xlu0
        %v3359 = vpop.trf.xlu0
        %v3360 = vpop.trf.xlu0
        %v3361 = vpop.trf.xlu0
        %v3362 = vpop.trf.xlu0
        %v3363 = vpop.trf.xlu0
        %v3364 = vpop.trf.xlu0
        %v3365 = vpop.trf.xlu0
        %v3366 = vpop.trf.xlu0
        %v3367 = vpop.trf.xlu0
        %v3368 = vpop.trf.xlu0
        %v3370 = vsel %vm2294, %v3353, 0
        %v3373 = vsel %vm2294, %v3354, 0
        %3375 = vmatpush.msra.mxu0 0.0
        %3376 = vmatpush.msra.mxu0 0.0
        %3377 = vmatpush.msra.mxu0 0.0
        %3378 = vmatpush.msra.mxu0 0.0
        %3379 = vmatpush.msra.mxu0 0.0
        %3380 = vmatpush.msra.mxu0 0.0
        %3381 = vmatpush.msra.mxu0 0.0
        %3382 = vmatpush.msra.mxu0 0.0
        %3383 = vmatpush.msra.mxu0 0.0
        %3384 = vmatpush.msra.mxu0 0.0
        %3385 = vmatpush.msra.mxu0 0.0
        %3386 = vmatpush.msra.mxu0 0.0
        %3387 = vmatpush.msra.mxu0 0.0
        %3388 = vmatpush.msra.mxu0 0.0
        %3389 = vmatpush.msra.mxu0 %v1452
        %3390 = vmatpush.msra.mxu0 %v1449
        %3391 = vmatmul.f32.gmra.mxu0 %v3370
        %v3392 = vpop.f32.mrf.mxu0
        %v3393 = vadd.f32 0.0, %v3392
        %3394 = vmatmul.f32.gmra.mxu0 %v3373
        %v3395 = vpop.f32.mrf.mxu0
        %v3396 = vadd.f32 0.0, %v3395
        %3397 = vdwg.mxu0
        %3398 = vxpose.xlu0.b32.start [1/16] %v2717, 128
        %3399 = vxpose.xlu0.b32.cont [2/16] %v2718, 128
        %3400 = vxpose.xlu0.b32.cont [3/16] 0.0, 128
        %3401 = vxpose.xlu0.b32.cont [4/16] 0.0, 128
        %3402 = vxpose.xlu0.b32.cont [5/16] 0.0, 128
        %3403 = vxpose.xlu0.b32.cont [6/16] 0.0, 128
        %3404 = vxpose.xlu0.b32.cont [7/16] 0.0, 128
        %3405 = vxpose.xlu0.b32.cont [8/16] 0.0, 128
        %3406 = vxpose.xlu0.b32.cont [9/16] 0.0, 128
        %3407 = vxpose.xlu0.b32.cont [10/16] 0.0, 128
        %3408 = vxpose.xlu0.b32.cont [11/16] 0.0, 128
        %3409 = vxpose.xlu0.b32.cont [12/16] 0.0, 128
        %3410 = vxpose.xlu0.b32.cont [13/16] 0.0, 128
        %3411 = vxpose.xlu0.b32.cont [14/16] 0.0, 128
        %3412 = vxpose.xlu0.b32.cont [15/16] 0.0, 128
        %3413 = vxpose.xlu0.b32.end [16/16] 0.0, 128
        %v3414 = vpop.trf.xlu0
        %v3415 = vpop.trf.xlu0
        %v3416 = vpop.trf.xlu0
        %v3417 = vpop.trf.xlu0
        %v3418 = vpop.trf.xlu0
        %v3419 = vpop.trf.xlu0
        %v3420 = vpop.trf.xlu0
        %v3421 = vpop.trf.xlu0
        %v3422 = vpop.trf.xlu0
        %v3423 = vpop.trf.xlu0
        %v3424 = vpop.trf.xlu0
        %v3425 = vpop.trf.xlu0
        %v3426 = vpop.trf.xlu0
        %v3427 = vpop.trf.xlu0
        %v3428 = vpop.trf.xlu0
        %v3429 = vpop.trf.xlu0
        %v3431 = vsel %vm2294, %v3414, 0
        %v3434 = vsel %vm2294, %v3415, 0
        %3436 = vmatpush.msra.mxu0 0.0
        %3437 = vmatpush.msra.mxu0 0.0
        %3438 = vmatpush.msra.mxu0 0.0
        %3439 = vmatpush.msra.mxu0 0.0
        %3440 = vmatpush.msra.mxu0 0.0
        %3441 = vmatpush.msra.mxu0 0.0
        %3442 = vmatpush.msra.mxu0 0.0
        %3443 = vmatpush.msra.mxu0 0.0
        %3444 = vmatpush.msra.mxu0 0.0
        %3445 = vmatpush.msra.mxu0 0.0
        %3446 = vmatpush.msra.mxu0 0.0
        %3447 = vmatpush.msra.mxu0 0.0
        %3448 = vmatpush.msra.mxu0 0.0
        %3449 = vmatpush.msra.mxu0 0.0
        %3450 = vmatpush.msra.mxu0 %v1458
        %3451 = vmatpush.msra.mxu0 %v1455
        %3452 = vmatmul.f32.gmra.mxu0 %v3431
        %v3453 = vpop.f32.mrf.mxu0
        %v3454 = vadd.f32 0.0, %v3453
        %3455 = vmatmul.f32.gmra.mxu0 %v3434
        %v3456 = vpop.f32.mrf.mxu0
        %v3457 = vadd.f32 0.0, %v3456
        %3458 = vdwg.mxu0
        %3459 = vxpose.xlu0.b32.start [1/16] %v2719, 128
        %3460 = vxpose.xlu0.b32.cont [2/16] %v2720, 128
        %3461 = vxpose.xlu0.b32.cont [3/16] 0.0, 128
        %3462 = vxpose.xlu0.b32.cont [4/16] 0.0, 128
        %3463 = vxpose.xlu0.b32.cont [5/16] 0.0, 128
        %3464 = vxpose.xlu0.b32.cont [6/16] 0.0, 128
        %3465 = vxpose.xlu0.b32.cont [7/16] 0.0, 128
        %3466 = vxpose.xlu0.b32.cont [8/16] 0.0, 128
        %3467 = vxpose.xlu0.b32.cont [9/16] 0.0, 128
        %3468 = vxpose.xlu0.b32.cont [10/16] 0.0, 128
        %3469 = vxpose.xlu0.b32.cont [11/16] 0.0, 128
        %3470 = vxpose.xlu0.b32.cont [12/16] 0.0, 128
        %3471 = vxpose.xlu0.b32.cont [13/16] 0.0, 128
        %3472 = vxpose.xlu0.b32.cont [14/16] 0.0, 128
        %3473 = vxpose.xlu0.b32.cont [15/16] 0.0, 128
        %3474 = vxpose.xlu0.b32.end [16/16] 0.0, 128
        %v3475 = vpop.trf.xlu0
        %v3476 = vpop.trf.xlu0
        %v3477 = vpop.trf.xlu0
        %v3478 = vpop.trf.xlu0
        %v3479 = vpop.trf.xlu0
        %v3480 = vpop.trf.xlu0
        %v3481 = vpop.trf.xlu0
        %v3482 = vpop.trf.xlu0
        %v3483 = vpop.trf.xlu0
        %v3484 = vpop.trf.xlu0
        %v3485 = vpop.trf.xlu0
        %v3486 = vpop.trf.xlu0
        %v3487 = vpop.trf.xlu0
        %v3488 = vpop.trf.xlu0
        %v3489 = vpop.trf.xlu0
        %v3490 = vpop.trf.xlu0
        %v3492 = vsel %vm2294, %v3475, 0
        %v3495 = vsel %vm2294, %v3476, 0
        %3497 = vmatpush.msra.mxu0 0.0
        %3498 = vmatpush.msra.mxu0 0.0
        %3499 = vmatpush.msra.mxu0 0.0
        %3500 = vmatpush.msra.mxu0 0.0
        %3501 = vmatpush.msra.mxu0 0.0
        %3502 = vmatpush.msra.mxu0 0.0
        %3503 = vmatpush.msra.mxu0 0.0
        %3504 = vmatpush.msra.mxu0 0.0
        %3505 = vmatpush.msra.mxu0 0.0
        %3506 = vmatpush.msra.mxu0 0.0
        %3507 = vmatpush.msra.mxu0 0.0
        %3508 = vmatpush.msra.mxu0 0.0
        %3509 = vmatpush.msra.mxu0 0.0
        %3510 = vmatpush.msra.mxu0 0.0
        %3511 = vmatpush.msra.mxu0 %v1464
        %3512 = vmatpush.msra.mxu0 %v1461
        %3513 = vmatmul.f32.gmra.mxu0 %v3492
        %v3514 = vpop.f32.mrf.mxu0
        %v3515 = vadd.f32 0.0, %v3514
        %3516 = vmatmul.f32.gmra.mxu0 %v3495
        %v3517 = vpop.f32.mrf.mxu0
        %v3518 = vadd.f32 0.0, %v3517
        %3519 = vdwg.mxu0
        %3520 = vxpose.xlu0.b32.start [1/16] %v2721, 128
        %3521 = vxpose.xlu0.b32.cont [2/16] %v2722, 128
        %3522 = vxpose.xlu0.b32.cont [3/16] 0.0, 128
        %3523 = vxpose.xlu0.b32.cont [4/16] 0.0, 128
        %3524 = vxpose.xlu0.b32.cont [5/16] 0.0, 128
        %3525 = vxpose.xlu0.b32.cont [6/16] 0.0, 128
        %3526 = vxpose.xlu0.b32.cont [7/16] 0.0, 128
        %3527 = vxpose.xlu0.b32.cont [8/16] 0.0, 128
        %3528 = vxpose.xlu0.b32.cont [9/16] 0.0, 128
        %3529 = vxpose.xlu0.b32.cont [10/16] 0.0, 128
        %3530 = vxpose.xlu0.b32.cont [11/16] 0.0, 128
        %3531 = vxpose.xlu0.b32.cont [12/16] 0.0, 128
        %3532 = vxpose.xlu0.b32.cont [13/16] 0.0, 128
        %3533 = vxpose.xlu0.b32.cont [14/16] 0.0, 128
        %3534 = vxpose.xlu0.b32.cont [15/16] 0.0, 128
        %3535 = vxpose.xlu0.b32.end [16/16] 0.0, 128
        %v3536 = vpop.trf.xlu0
        %v3537 = vpop.trf.xlu0
        %v3538 = vpop.trf.xlu0
        %v3539 = vpop.trf.xlu0
        %v3540 = vpop.trf.xlu0
        %v3541 = vpop.trf.xlu0
        %v3542 = vpop.trf.xlu0
        %v3543 = vpop.trf.xlu0
        %v3544 = vpop.trf.xlu0
        %v3545 = vpop.trf.xlu0
        %v3546 = vpop.trf.xlu0
        %v3547 = vpop.trf.xlu0
        %v3548 = vpop.trf.xlu0
        %v3549 = vpop.trf.xlu0
        %v3550 = vpop.trf.xlu0
        %v3551 = vpop.trf.xlu0
        %v3553 = vsel %vm2294, %v3536, 0
        %v3556 = vsel %vm2294, %v3537, 0
        %3558 = vmatpush.msra.mxu0 0.0
        %3559 = vmatpush.msra.mxu0 0.0
        %3560 = vmatpush.msra.mxu0 0.0
        %3561 = vmatpush.msra.mxu0 0.0
        %3562 = vmatpush.msra.mxu0 0.0
        %3563 = vmatpush.msra.mxu0 0.0
        %3564 = vmatpush.msra.mxu0 0.0
        %3565 = vmatpush.msra.mxu0 0.0
        %3566 = vmatpush.msra.mxu0 0.0
        %3567 = vmatpush.msra.mxu0 0.0
        %3568 = vmatpush.msra.mxu0 0.0
        %3569 = vmatpush.msra.mxu0 0.0
        %3570 = vmatpush.msra.mxu0 0.0
        %3571 = vmatpush.msra.mxu0 0.0
        %3572 = vmatpush.msra.mxu0 %v1470
        %3573 = vmatpush.msra.mxu0 %v1467
        %3574 = vmatmul.f32.gmra.mxu0 %v3553
        %v3575 = vpop.f32.mrf.mxu0
        %v3576 = vadd.f32 0.0, %v3575
        %3577 = vmatmul.f32.gmra.mxu0 %v3556
        %v3578 = vpop.f32.mrf.mxu0
        %v3579 = vadd.f32 0.0, %v3578
        %3580 = vdwg.mxu0
        %3581 = vxpose.xlu0.b32.start [1/16] %v2723, 128
        %3582 = vxpose.xlu0.b32.cont [2/16] %v2724, 128
        %3583 = vxpose.xlu0.b32.cont [3/16] 0.0, 128
        %3584 = vxpose.xlu0.b32.cont [4/16] 0.0, 128
        %3585 = vxpose.xlu0.b32.cont [5/16] 0.0, 128
        %3586 = vxpose.xlu0.b32.cont [6/16] 0.0, 128
        %3587 = vxpose.xlu0.b32.cont [7/16] 0.0, 128
        %3588 = vxpose.xlu0.b32.cont [8/16] 0.0, 128
        %3589 = vxpose.xlu0.b32.cont [9/16] 0.0, 128
        %3590 = vxpose.xlu0.b32.cont [10/16] 0.0, 128
        %3591 = vxpose.xlu0.b32.cont [11/16] 0.0, 128
        %3592 = vxpose.xlu0.b32.cont [12/16] 0.0, 128
        %3593 = vxpose.xlu0.b32.cont [13/16] 0.0, 128
        %3594 = vxpose.xlu0.b32.cont [14/16] 0.0, 128
        %3595 = vxpose.xlu0.b32.cont [15/16] 0.0, 128
        %3596 = vxpose.xlu0.b32.end [16/16] 0.0, 128
        %v3597 = vpop.trf.xlu0
        %v3598 = vpop.trf.xlu0
        %v3599 = vpop.trf.xlu0
        %v3600 = vpop.trf.xlu0
        %v3601 = vpop.trf.xlu0
        %v3602 = vpop.trf.xlu0
        %v3603 = vpop.trf.xlu0
        %v3604 = vpop.trf.xlu0
        %v3605 = vpop.trf.xlu0
        %v3606 = vpop.trf.xlu0
        %v3607 = vpop.trf.xlu0
        %v3608 = vpop.trf.xlu0
        %v3609 = vpop.trf.xlu0
        %v3610 = vpop.trf.xlu0
        %v3611 = vpop.trf.xlu0
        %v3612 = vpop.trf.xlu0
        %v3614 = vsel %vm2294, %v3597, 0
        %v3617 = vsel %vm2294, %v3598, 0
        %3619 = vmatpush.msra.mxu0 0.0
        %3620 = vmatpush.msra.mxu0 0.0
        %3621 = vmatpush.msra.mxu0 0.0
        %3622 = vmatpush.msra.mxu0 0.0
        %3623 = vmatpush.msra.mxu0 0.0
        %3624 = vmatpush.msra.mxu0 0.0
        %3625 = vmatpush.msra.mxu0 0.0
        %3626 = vmatpush.msra.mxu0 0.0
        %3627 = vmatpush.msra.mxu0 0.0
        %3628 = vmatpush.msra.mxu0 0.0
        %3629 = vmatpush.msra.mxu0 0.0
        %3630 = vmatpush.msra.mxu0 0.0
        %3631 = vmatpush.msra.mxu0 0.0
        %3632 = vmatpush.msra.mxu0 0.0
        %3633 = vmatpush.msra.mxu0 %v1476
        %3634 = vmatpush.msra.mxu0 %v1473
        %3635 = vmatmul.f32.gmra.mxu0 %v3614
        %v3636 = vpop.f32.mrf.mxu0
        %v3637 = vadd.f32 0.0, %v3636
        %3638 = vmatmul.f32.gmra.mxu0 %v3617
        %v3639 = vpop.f32.mrf.mxu0
        %v3640 = vadd.f32 0.0, %v3639
        %3641 = vdwg.mxu0
        %3642 = vxpose.xlu0.b32.start [1/16] %v2725, 128
        %3643 = vxpose.xlu0.b32.cont [2/16] %v2726, 128
        %3644 = vxpose.xlu0.b32.cont [3/16] 0.0, 128
        %3645 = vxpose.xlu0.b32.cont [4/16] 0.0, 128
        %3646 = vxpose.xlu0.b32.cont [5/16] 0.0, 128
        %3647 = vxpose.xlu0.b32.cont [6/16] 0.0, 128
        %3648 = vxpose.xlu0.b32.cont [7/16] 0.0, 128
        %3649 = vxpose.xlu0.b32.cont [8/16] 0.0, 128
        %3650 = vxpose.xlu0.b32.cont [9/16] 0.0, 128
        %3651 = vxpose.xlu0.b32.cont [10/16] 0.0, 128
        %3652 = vxpose.xlu0.b32.cont [11/16] 0.0, 128
        %3653 = vxpose.xlu0.b32.cont [12/16] 0.0, 128
        %3654 = vxpose.xlu0.b32.cont [13/16] 0.0, 128
        %3655 = vxpose.xlu0.b32.cont [14/16] 0.0, 128
        %3656 = vxpose.xlu0.b32.cont [15/16] 0.0, 128
        %3657 = vxpose.xlu0.b32.end [16/16] 0.0, 128
        %v3658 = vpop.trf.xlu0
        %v3659 = vpop.trf.xlu0
        %v3660 = vpop.trf.xlu0
        %v3661 = vpop.trf.xlu0
        %v3662 = vpop.trf.xlu0
        %v3663 = vpop.trf.xlu0
        %v3664 = vpop.trf.xlu0
        %v3665 = vpop.trf.xlu0
        %v3666 = vpop.trf.xlu0
        %v3667 = vpop.trf.xlu0
        %v3668 = vpop.trf.xlu0
        %v3669 = vpop.trf.xlu0
        %v3670 = vpop.trf.xlu0
        %v3671 = vpop.trf.xlu0
        %v3672 = vpop.trf.xlu0
        %v3673 = vpop.trf.xlu0
        %v3675 = vsel %vm2294, %v3658, 0
        %v3678 = vsel %vm2294, %v3659, 0
        %3680 = vmatpush.msra.mxu0 0.0
        %3681 = vmatpush.msra.mxu0 0.0
        %3682 = vmatpush.msra.mxu0 0.0
        %3683 = vmatpush.msra.mxu0 0.0
        %3684 = vmatpush.msra.mxu0 0.0
        %3685 = vmatpush.msra.mxu0 0.0
        %3686 = vmatpush.msra.mxu0 0.0
        %3687 = vmatpush.msra.mxu0 0.0
        %3688 = vmatpush.msra.mxu0 0.0
        %3689 = vmatpush.msra.mxu0 0.0
        %3690 = vmatpush.msra.mxu0 0.0
        %3691 = vmatpush.msra.mxu0 0.0
        %3692 = vmatpush.msra.mxu0 0.0
        %3693 = vmatpush.msra.mxu0 0.0
        %3694 = vmatpush.msra.mxu0 %v1482
        %3695 = vmatpush.msra.mxu0 %v1479
        %3696 = vmatmul.f32.gmra.mxu0 %v3675
        %v3697 = vpop.f32.mrf.mxu0
        %v3698 = vadd.f32 0.0, %v3697
        %3699 = vmatmul.f32.gmra.mxu0 %v3678
        %v3700 = vpop.f32.mrf.mxu0
        %v3701 = vadd.f32 0.0, %v3700
        %3702 = vdwg.mxu0
        %3735 = vrot.lane.b32.xlu0 %v2783, 12
        %v3736 = vpop.permute.xlu0 %3735
        %3737 = vrot.lane.b32.xlu0 %v2786, 12
        %v3738 = vpop.permute.xlu0 %3737
        %3739 = vrot.lane.b32.xlu0 %v2844, 12
        %v3740 = vpop.permute.xlu0 %3739
        %3741 = vrot.lane.b32.xlu0 %v2847, 12
        %v3742 = vpop.permute.xlu0 %3741
        %3743 = vrot.lane.b32.xlu0 %v2905, 12
        %v3744 = vpop.permute.xlu0 %3743
        %3745 = vrot.lane.b32.xlu0 %v2908, 12
        %v3746 = vpop.permute.xlu0 %3745
        %3747 = vrot.lane.b32.xlu0 %v2966, 12
        %v3748 = vpop.permute.xlu0 %3747
        %3749 = vrot.lane.b32.xlu0 %v2969, 12
        %v3750 = vpop.permute.xlu0 %3749
        %3751 = vrot.lane.b32.xlu0 %v3027, 12
        %v3752 = vpop.permute.xlu0 %3751
        %3753 = vrot.lane.b32.xlu0 %v3030, 12
        %v3754 = vpop.permute.xlu0 %3753
        %3755 = vrot.lane.b32.xlu0 %v3088, 12
        %v3756 = vpop.permute.xlu0 %3755
        %3757 = vrot.lane.b32.xlu0 %v3091, 12
        %v3758 = vpop.permute.xlu0 %3757
        %3759 = vrot.lane.b32.xlu0 %v3149, 12
        %v3760 = vpop.permute.xlu0 %3759
        %3761 = vrot.lane.b32.xlu0 %v3152, 12
        %v3762 = vpop.permute.xlu0 %3761
        %3763 = vrot.lane.b32.xlu0 %v3210, 12
        %v3764 = vpop.permute.xlu0 %3763
        %3765 = vrot.lane.b32.xlu0 %v3213, 12
        %v3766 = vpop.permute.xlu0 %3765
        %3767 = vrot.lane.b32.xlu0 %v3271, 12
        %v3768 = vpop.permute.xlu0 %3767
        %3769 = vrot.lane.b32.xlu0 %v3274, 12
        %v3770 = vpop.permute.xlu0 %3769
        %3771 = vrot.lane.b32.xlu0 %v3332, 12
        %v3772 = vpop.permute.xlu0 %3771
        %3773 = vrot.lane.b32.xlu0 %v3335, 12
        %v3774 = vpop.permute.xlu0 %3773
        %3775 = vrot.lane.b32.xlu0 %v3393, 12
        %v3776 = vpop.permute.xlu0 %3775
        %3777 = vrot.lane.b32.xlu0 %v3396, 12
        %v3778 = vpop.permute.xlu0 %3777
        %3779 = vrot.lane.b32.xlu0 %v3454, 12
        %v3780 = vpop.permute.xlu0 %3779
        %3781 = vrot.lane.b32.xlu0 %v3457, 12
        %v3782 = vpop.permute.xlu0 %3781
        %3783 = vrot.lane.b32.xlu0 %v3515, 12
        %v3784 = vpop.permute.xlu0 %3783
        %3785 = vrot.lane.b32.xlu0 %v3518, 12
        %v3786 = vpop.permute.xlu0 %3785
        %3787 = vrot.lane.b32.xlu0 %v3576, 12
        %v3788 = vpop.permute.xlu0 %3787
        %3789 = vrot.lane.b32.xlu0 %v3579, 12
        %v3790 = vpop.permute.xlu0 %3789
        %3791 = vrot.lane.b32.xlu0 %v3637, 12
        %v3792 = vpop.permute.xlu0 %3791
        %3793 = vrot.lane.b32.xlu0 %v3640, 12
        %v3794 = vpop.permute.xlu0 %3793
        %3795 = vrot.lane.b32.xlu0 %v3698, 12
        %v3796 = vpop.permute.xlu0 %3795
        %3797 = vrot.lane.b32.xlu0 %v3701, 12
        %v3798 = vpop.permute.xlu0 %3797
        %v3831 = vadd.f32 %v1607, %v3736
        %v3832 = vadd.f32 %v1610, %v3738
        %v3833 = vadd.f32 %v1613, %v3740
        %v3834 = vadd.f32 %v1616, %v3742
        %v3835 = vadd.f32 %v1619, %v3744
        %v3836 = vadd.f32 %v1622, %v3746
        %v3837 = vadd.f32 %v1625, %v3748
        %v3838 = vadd.f32 %v1628, %v3750
        %v3839 = vadd.f32 %v1631, %v3752
        %v3840 = vadd.f32 %v1634, %v3754
        %v3841 = vadd.f32 %v1637, %v3756
        %v3842 = vadd.f32 %v1640, %v3758
        %v3843 = vadd.f32 %v1643, %v3760
        %v3844 = vadd.f32 %v1646, %v3762
        %v3845 = vadd.f32 %v1649, %v3764
        %v3846 = vadd.f32 %v1652, %v3766
        %v3847 = vadd.f32 %v1655, %v3768
        %v3848 = vadd.f32 %v1658, %v3770
        %v3849 = vadd.f32 %v1661, %v3772
        %v3850 = vadd.f32 %v1664, %v3774
        %v3851 = vadd.f32 %v1667, %v3776
        %v3852 = vadd.f32 %v1670, %v3778
        %v3853 = vadd.f32 %v1673, %v3780
        %v3854 = vadd.f32 %v1676, %v3782
        %v3855 = vadd.f32 %v1679, %v3784
        %v3856 = vadd.f32 %v1682, %v3786
        %v3857 = vadd.f32 %v1685, %v3788
        %v3858 = vadd.f32 %v1688, %v3790
        %v3859 = vadd.f32 %v1691, %v3792
        %v3860 = vadd.f32 %v1694, %v3794
        %v3861 = vadd.f32 %v1697, %v3796
        %v3862 = vadd.f32 %v1700, %v3798
        %3863 = vmax.xlane.f32.xlu0 %v2295
        %v3864 = vpop.xlane.xlu0 %3863
        %3865 = vmax.xlane.f32.xlu0 %v2296
        %v3866 = vpop.xlane.xlu0 %3865
        %3867 = vmax.xlane.f32.xlu0 %v2304
        %v3868 = vpop.xlane.xlu0 %3867
        %3869 = vmax.xlane.f32.xlu0 %v2305
        %v3870 = vpop.xlane.xlu0 %3869
        %3871 = vmax.xlane.f32.xlu0 %v2313
        %v3872 = vpop.xlane.xlu0 %3871
        %3873 = vmax.xlane.f32.xlu0 %v2314
        %v3874 = vpop.xlane.xlu0 %3873
        %3875 = vmax.xlane.f32.xlu0 %v2322
        %v3876 = vpop.xlane.xlu0 %3875
        %3877 = vmax.xlane.f32.xlu0 %v2323
        %v3878 = vpop.xlane.xlu0 %3877
        %3879 = vmax.xlane.f32.xlu0 %v2331
        %v3880 = vpop.xlane.xlu0 %3879
        %3881 = vmax.xlane.f32.xlu0 %v2332
        %v3882 = vpop.xlane.xlu0 %3881
        %3883 = vmax.xlane.f32.xlu0 %v2340
        %v3884 = vpop.xlane.xlu0 %3883
        %3885 = vmax.xlane.f32.xlu0 %v2341
        %v3886 = vpop.xlane.xlu0 %3885
        %3887 = vmax.xlane.f32.xlu0 %v2349
        %v3888 = vpop.xlane.xlu0 %3887
        %3889 = vmax.xlane.f32.xlu0 %v2350
        %v3890 = vpop.xlane.xlu0 %3889
        %3891 = vmax.xlane.f32.xlu0 %v2358
        %v3892 = vpop.xlane.xlu0 %3891
        %3893 = vmax.xlane.f32.xlu0 %v2359
        %v3894 = vpop.xlane.xlu0 %3893
        %3895 = vmax.xlane.f32.xlu0 %v2367
        %v3896 = vpop.xlane.xlu0 %3895
        %3897 = vmax.xlane.f32.xlu0 %v2368
        %v3898 = vpop.xlane.xlu0 %3897
        %3899 = vmax.xlane.f32.xlu0 %v2376
        %v3900 = vpop.xlane.xlu0 %3899
        %3901 = vmax.xlane.f32.xlu0 %v2377
        %v3902 = vpop.xlane.xlu0 %3901
        %3903 = vmax.xlane.f32.xlu0 %v2385
        %v3904 = vpop.xlane.xlu0 %3903
        %3905 = vmax.xlane.f32.xlu0 %v2386
        %v3906 = vpop.xlane.xlu0 %3905
        %3907 = vmax.xlane.f32.xlu0 %v2394
        %v3908 = vpop.xlane.xlu0 %3907
        %3909 = vmax.xlane.f32.xlu0 %v2395
        %v3910 = vpop.xlane.xlu0 %3909
        %3911 = vmax.xlane.f32.xlu0 %v2403
        %v3912 = vpop.xlane.xlu0 %3911
        %3913 = vmax.xlane.f32.xlu0 %v2404
        %v3914 = vpop.xlane.xlu0 %3913
        %3915 = vmax.xlane.f32.xlu0 %v2412
        %v3916 = vpop.xlane.xlu0 %3915
        %3917 = vmax.xlane.f32.xlu0 %v2413
        %v3918 = vpop.xlane.xlu0 %3917
        %3919 = vmax.xlane.f32.xlu0 %v2421
        %v3920 = vpop.xlane.xlu0 %3919
        %3921 = vmax.xlane.f32.xlu0 %v2422
        %v3922 = vpop.xlane.xlu0 %3921
        %3923 = vmax.xlane.f32.xlu0 %v2430
        %v3924 = vpop.xlane.xlu0 %3923
        %3925 = vmax.xlane.f32.xlu0 %v2431
        %v3926 = vpop.xlane.xlu0 %3925
        %v3927 = vsub.f32 %v2262, %v3864
        %v3928 = vsub.f32 %v2263, %v3866
        %v3929 = vsub.f32 %v2264, %v3868
        %v3930 = vsub.f32 %v2265, %v3870
        %v3931 = vsub.f32 %v2266, %v3872
        %v3932 = vsub.f32 %v2267, %v3874
        %v3933 = vsub.f32 %v2268, %v3876
        %v3934 = vsub.f32 %v2269, %v3878
        %v3935 = vsub.f32 %v2270, %v3880
        %v3936 = vsub.f32 %v2271, %v3882
        %v3937 = vsub.f32 %v2272, %v3884
        %v3938 = vsub.f32 %v2273, %v3886
        %v3939 = vsub.f32 %v2274, %v3888
        %v3940 = vsub.f32 %v2275, %v3890
        %v3941 = vsub.f32 %v2276, %v3892
        %v3942 = vsub.f32 %v2277, %v3894
        %v3943 = vsub.f32 %v2278, %v3896
        %v3944 = vsub.f32 %v2279, %v3898
        %v3945 = vsub.f32 %v2280, %v3900
        %v3946 = vsub.f32 %v2281, %v3902
        %v3947 = vsub.f32 %v2282, %v3904
        %v3948 = vsub.f32 %v2283, %v3906
        %v3949 = vsub.f32 %v2284, %v3908
        %v3950 = vsub.f32 %v2285, %v3910
        %v3951 = vsub.f32 %v2286, %v3912
        %v3952 = vsub.f32 %v2287, %v3914
        %v3953 = vsub.f32 %v2288, %v3916
        %v3954 = vsub.f32 %v2289, %v3918
        %v3955 = vsub.f32 %v2290, %v3920
        %v3956 = vsub.f32 %v2291, %v3922
        %v3957 = vsub.f32 %v2292, %v3924
        %v3958 = vsub.f32 %v2293, %v3926
        %v3959 = vmul.f32 %v3927, 1.442695
        %v3960 = vpow.pop %v3959
        %v3961 = vmul.f32 %v3928, 1.442695
        %v3962 = vpow.pop %v3961
        %v3963 = vmul.f32 %v3929, 1.442695
        %v3964 = vpow.pop %v3963
        %v3965 = vmul.f32 %v3930, 1.442695
        %v3966 = vpow.pop %v3965
        %v3967 = vmul.f32 %v3931, 1.442695
        %v3968 = vpow.pop %v3967
        %v3969 = vmul.f32 %v3932, 1.442695
        %v3970 = vpow.pop %v3969
        %v3971 = vmul.f32 %v3933, 1.442695
        %v3972 = vpow.pop %v3971
        %v3973 = vmul.f32 %v3934, 1.442695
        %v3974 = vpow.pop %v3973
        %v3975 = vmul.f32 %v3935, 1.442695
        %v3976 = vpow.pop %v3975
        %v3977 = vmul.f32 %v3936, 1.442695
        %v3978 = vpow.pop %v3977
        %v3979 = vmul.f32 %v3937, 1.442695
        %v3980 = vpow.pop %v3979
        %v3981 = vmul.f32 %v3938, 1.442695
        %v3982 = vpow.pop %v3981
        %v3983 = vmul.f32 %v3939, 1.442695
        %v3984 = vpow.pop %v3983
        %v3985 = vmul.f32 %v3940, 1.442695
        %v3986 = vpow.pop %v3985
        %v3987 = vmul.f32 %v3941, 1.442695
        %v3988 = vpow.pop %v3987
        %v3989 = vmul.f32 %v3942, 1.442695
        %v3990 = vpow.pop %v3989
        %v3991 = vmul.f32 %v3943, 1.442695
        %v3992 = vpow.pop %v3991
        %v3993 = vmul.f32 %v3944, 1.442695
        %v3994 = vpow.pop %v3993
        %v3995 = vmul.f32 %v3945, 1.442695
        %v3996 = vpow.pop %v3995
        %v3997 = vmul.f32 %v3946, 1.442695
        %v3998 = vpow.pop %v3997
        %v3999 = vmul.f32 %v3947, 1.442695
        %v4000 = vpow.pop %v3999
        %v4001 = vmul.f32 %v3948, 1.442695
        %v4002 = vpow.pop %v4001
        %v4003 = vmul.f32 %v3949, 1.442695
        %v4004 = vpow.pop %v4003
        %v4005 = vmul.f32 %v3950, 1.442695
        %v4006 = vpow.pop %v4005
        %v4007 = vmul.f32 %v3951, 1.442695
        %v4008 = vpow.pop %v4007
        %v4009 = vmul.f32 %v3952, 1.442695
        %v4010 = vpow.pop %v4009
        %v4011 = vmul.f32 %v3953, 1.442695
        %v4012 = vpow.pop %v4011
        %v4013 = vmul.f32 %v3954, 1.442695
        %v4014 = vpow.pop %v4013
        %v4015 = vmul.f32 %v3955, 1.442695
        %v4016 = vpow.pop %v4015
        %v4017 = vmul.f32 %v3956, 1.442695
        %v4018 = vpow.pop %v4017
        %v4019 = vmul.f32 %v3957, 1.442695
        %v4020 = vpow.pop %v4019
        %v4021 = vmul.f32 %v3958, 1.442695
        %v4022 = vpow.pop %v4021
        %v4023 = vsel %vm2294, %v3960, 0.0
        %4024 = vadd.xlane.f32.xlu0 %v4023
        %v4025 = vpop.xlane.xlu0 %4024
        %v4026 = vsel %vm2294, %v3962, 0.0
        %4027 = vadd.xlane.f32.xlu0 %v4026
        %v4028 = vpop.xlane.xlu0 %4027
        %v4029 = vsel %vm2294, %v3964, 0.0
        %4030 = vadd.xlane.f32.xlu0 %v4029
        %v4031 = vpop.xlane.xlu0 %4030
        %v4032 = vsel %vm2294, %v3966, 0.0
        %4033 = vadd.xlane.f32.xlu0 %v4032
        %v4034 = vpop.xlane.xlu0 %4033
        %v4035 = vsel %vm2294, %v3968, 0.0
        %4036 = vadd.xlane.f32.xlu0 %v4035
        %v4037 = vpop.xlane.xlu0 %4036
        %v4038 = vsel %vm2294, %v3970, 0.0
        %4039 = vadd.xlane.f32.xlu0 %v4038
        %v4040 = vpop.xlane.xlu0 %4039
        %v4041 = vsel %vm2294, %v3972, 0.0
        %4042 = vadd.xlane.f32.xlu0 %v4041
        %v4043 = vpop.xlane.xlu0 %4042
        %v4044 = vsel %vm2294, %v3974, 0.0
        %4045 = vadd.xlane.f32.xlu0 %v4044
        %v4046 = vpop.xlane.xlu0 %4045
        %v4047 = vsel %vm2294, %v3976, 0.0
        %4048 = vadd.xlane.f32.xlu0 %v4047
        %v4049 = vpop.xlane.xlu0 %4048
        %v4050 = vsel %vm2294, %v3978, 0.0
        %4051 = vadd.xlane.f32.xlu0 %v4050
        %v4052 = vpop.xlane.xlu0 %4051
        %v4053 = vsel %vm2294, %v3980, 0.0
        %4054 = vadd.xlane.f32.xlu0 %v4053
        %v4055 = vpop.xlane.xlu0 %4054
        %v4056 = vsel %vm2294, %v3982, 0.0
        %4057 = vadd.xlane.f32.xlu0 %v4056
        %v4058 = vpop.xlane.xlu0 %4057
        %v4059 = vsel %vm2294, %v3984, 0.0
        %4060 = vadd.xlane.f32.xlu0 %v4059
        %v4061 = vpop.xlane.xlu0 %4060
        %v4062 = vsel %vm2294, %v3986, 0.0
        %4063 = vadd.xlane.f32.xlu0 %v4062
        %v4064 = vpop.xlane.xlu0 %4063
        %v4065 = vsel %vm2294, %v3988, 0.0
        %4066 = vadd.xlane.f32.xlu0 %v4065
        %v4067 = vpop.xlane.xlu0 %4066
        %v4068 = vsel %vm2294, %v3990, 0.0
        %4069 = vadd.xlane.f32.xlu0 %v4068
        %v4070 = vpop.xlane.xlu0 %4069
        %v4071 = vsel %vm2294, %v3992, 0.0
        %4072 = vadd.xlane.f32.xlu0 %v4071
        %v4073 = vpop.xlane.xlu0 %4072
        %v4074 = vsel %vm2294, %v3994, 0.0
        %4075 = vadd.xlane.f32.xlu0 %v4074
        %v4076 = vpop.xlane.xlu0 %4075
        %v4077 = vsel %vm2294, %v3996, 0.0
        %4078 = vadd.xlane.f32.xlu0 %v4077
        %v4079 = vpop.xlane.xlu0 %4078
        %v4080 = vsel %vm2294, %v3998, 0.0
        %4081 = vadd.xlane.f32.xlu0 %v4080
        %v4082 = vpop.xlane.xlu0 %4081
        %v4083 = vsel %vm2294, %v4000, 0.0
        %4084 = vadd.xlane.f32.xlu0 %v4083
        %v4085 = vpop.xlane.xlu0 %4084
        %v4086 = vsel %vm2294, %v4002, 0.0
        %4087 = vadd.xlane.f32.xlu0 %v4086
        %v4088 = vpop.xlane.xlu0 %4087
        %v4089 = vsel %vm2294, %v4004, 0.0
        %4090 = vadd.xlane.f32.xlu0 %v4089
        %v4091 = vpop.xlane.xlu0 %4090
        %v4092 = vsel %vm2294, %v4006, 0.0
        %4093 = vadd.xlane.f32.xlu0 %v4092
        %v4094 = vpop.xlane.xlu0 %4093
        %v4095 = vsel %vm2294, %v4008, 0.0
        %4096 = vadd.xlane.f32.xlu0 %v4095
        %v4097 = vpop.xlane.xlu0 %4096
        %v4098 = vsel %vm2294, %v4010, 0.0
        %4099 = vadd.xlane.f32.xlu0 %v4098
        %v4100 = vpop.xlane.xlu0 %4099
        %v4101 = vsel %vm2294, %v4012, 0.0
        %4102 = vadd.xlane.f32.xlu0 %v4101
        %v4103 = vpop.xlane.xlu0 %4102
        %v4104 = vsel %vm2294, %v4014, 0.0
        %4105 = vadd.xlane.f32.xlu0 %v4104
        %v4106 = vpop.xlane.xlu0 %4105
        %v4107 = vsel %vm2294, %v4016, 0.0
        %4108 = vadd.xlane.f32.xlu0 %v4107
        %v4109 = vpop.xlane.xlu0 %4108
        %v4110 = vsel %vm2294, %v4018, 0.0
        %4111 = vadd.xlane.f32.xlu0 %v4110
        %v4112 = vpop.xlane.xlu0 %4111
        %v4113 = vsel %vm2294, %v4020, 0.0
        %4114 = vadd.xlane.f32.xlu0 %v4113
        %v4115 = vpop.xlane.xlu0 %4114
        %v4116 = vsel %vm2294, %v4022, 0.0
        %4117 = vadd.xlane.f32.xlu0 %v4116
        %v4118 = vpop.xlane.xlu0 %4117
        %v4119 = vrcp.pop %v4025
        %v4120 = vrcp.pop %v4028
        %v4121 = vrcp.pop %v4031
        %v4122 = vrcp.pop %v4034
        %v4123 = vrcp.pop %v4037
        %v4124 = vrcp.pop %v4040
        %v4125 = vrcp.pop %v4043
        %v4126 = vrcp.pop %v4046
        %v4127 = vrcp.pop %v4049
        %v4128 = vrcp.pop %v4052
        %v4129 = vrcp.pop %v4055
        %v4130 = vrcp.pop %v4058
        %v4131 = vrcp.pop %v4061
        %v4132 = vrcp.pop %v4064
        %v4133 = vrcp.pop %v4067
        %v4134 = vrcp.pop %v4070
        %v4135 = vrcp.pop %v4073
        %v4136 = vrcp.pop %v4076
        %v4137 = vrcp.pop %v4079
        %v4138 = vrcp.pop %v4082
        %v4139 = vrcp.pop %v4085
        %v4140 = vrcp.pop %v4088
        %v4141 = vrcp.pop %v4091
        %v4142 = vrcp.pop %v4094
        %v4143 = vrcp.pop %v4097
        %v4144 = vrcp.pop %v4100
        %v4145 = vrcp.pop %v4103
        %v4146 = vrcp.pop %v4106
        %v4147 = vrcp.pop %v4109
        %v4148 = vrcp.pop %v4112
        %v4149 = vrcp.pop %v4115
        %v4150 = vrcp.pop %v4118
        %v4151 = vmul.f32 %v3960, %v4119
        %v4152 = vmul.f32 %v3962, %v4120
        %v4153 = vmul.f32 %v3964, %v4121
        %v4154 = vmul.f32 %v3966, %v4122
        %v4155 = vmul.f32 %v3968, %v4123
        %v4156 = vmul.f32 %v3970, %v4124
        %v4157 = vmul.f32 %v3972, %v4125
        %v4158 = vmul.f32 %v3974, %v4126
        %v4159 = vmul.f32 %v3976, %v4127
        %v4160 = vmul.f32 %v3978, %v4128
        %v4161 = vmul.f32 %v3980, %v4129
        %v4162 = vmul.f32 %v3982, %v4130
        %v4163 = vmul.f32 %v3984, %v4131
        %v4164 = vmul.f32 %v3986, %v4132
        %v4165 = vmul.f32 %v3988, %v4133
        %v4166 = vmul.f32 %v3990, %v4134
        %v4167 = vmul.f32 %v3992, %v4135
        %v4168 = vmul.f32 %v3994, %v4136
        %v4169 = vmul.f32 %v3996, %v4137
        %v4170 = vmul.f32 %v3998, %v4138
        %v4171 = vmul.f32 %v4000, %v4139
        %v4172 = vmul.f32 %v4002, %v4140
        %v4173 = vmul.f32 %v4004, %v4141
        %v4174 = vmul.f32 %v4006, %v4142
        %v4175 = vmul.f32 %v4008, %v4143
        %v4176 = vmul.f32 %v4010, %v4144
        %v4177 = vmul.f32 %v4012, %v4145
        %v4178 = vmul.f32 %v4014, %v4146
        %v4179 = vmul.f32 %v4016, %v4147
        %v4180 = vmul.f32 %v4018, %v4148
        %v4181 = vmul.f32 %v4020, %v4149
        %v4182 = vmul.f32 %v4022, %v4150
        %4183 = vrot.lane.b32.xlu0 %v1607, 120
        %v4184 = vpop.permute.xlu0 %4183
        %4185 = vrot.lane.b32.xlu0 %v1610, 120
        %v4186 = vpop.permute.xlu0 %4185
        %v4190 = vsel %vm2294, %v4151, 0
        %v4193 = vsel %vm2294, %v4152, 0
        %4195 = vmatpush.msra.mxu0 0.0
        %4196 = vmatpush.msra.mxu0 0.0
        %4197 = vmatpush.msra.mxu0 0.0
        %4198 = vmatpush.msra.mxu0 0.0
        %4199 = vmatpush.msra.mxu0 0.0
        %4200 = vmatpush.msra.mxu0 0.0
        %4201 = vmatpush.msra.mxu0 0.0
        %4202 = vmatpush.msra.mxu0 0.0
        %4203 = vmatpush.msra.mxu0 0.0
        %4204 = vmatpush.msra.mxu0 0.0
        %4205 = vmatpush.msra.mxu0 0.0
        %4206 = vmatpush.msra.mxu0 0.0
        %4207 = vmatpush.msra.mxu0 0.0
        %4208 = vmatpush.msra.mxu0 0.0
        %4209 = vmatpush.msra.mxu0 %v4186
        %4210 = vmatpush.msra.mxu0 %v4184
        %4211 = vmatmul.f32.gmra.mxu0 %v4190
        %v4212 = vpop.f32.mrf.mxu0
        %v4213 = vadd.f32 0.0, %v4212
        %4214 = vmatmul.f32.gmra.mxu0 %v4193
        %v4215 = vpop.f32.mrf.mxu0
        %v4216 = vadd.f32 0.0, %v4215
        %4217 = vdwg.mxu0
        %4218 = vrot.lane.b32.xlu0 %v1613, 120
        %v4219 = vpop.permute.xlu0 %4218
        %4220 = vrot.lane.b32.xlu0 %v1616, 120
        %v4221 = vpop.permute.xlu0 %4220
        %v4225 = vsel %vm2294, %v4153, 0
        %v4228 = vsel %vm2294, %v4154, 0
        %4230 = vmatpush.msra.mxu0 0.0
        %4231 = vmatpush.msra.mxu0 0.0
        %4232 = vmatpush.msra.mxu0 0.0
        %4233 = vmatpush.msra.mxu0 0.0
        %4234 = vmatpush.msra.mxu0 0.0
        %4235 = vmatpush.msra.mxu0 0.0
        %4236 = vmatpush.msra.mxu0 0.0
        %4237 = vmatpush.msra.mxu0 0.0
        %4238 = vmatpush.msra.mxu0 0.0
        %4239 = vmatpush.msra.mxu0 0.0
        %4240 = vmatpush.msra.mxu0 0.0
        %4241 = vmatpush.msra.mxu0 0.0
        %4242 = vmatpush.msra.mxu0 0.0
        %4243 = vmatpush.msra.mxu0 0.0
        %4244 = vmatpush.msra.mxu0 %v4221
        %4245 = vmatpush.msra.mxu0 %v4219
        %4246 = vmatmul.f32.gmra.mxu0 %v4225
        %v4247 = vpop.f32.mrf.mxu0
        %v4248 = vadd.f32 0.0, %v4247
        %4249 = vmatmul.f32.gmra.mxu0 %v4228
        %v4250 = vpop.f32.mrf.mxu0
        %v4251 = vadd.f32 0.0, %v4250
        %4252 = vdwg.mxu0
        %4253 = vrot.lane.b32.xlu0 %v1619, 120
        %v4254 = vpop.permute.xlu0 %4253
        %4255 = vrot.lane.b32.xlu0 %v1622, 120
        %v4256 = vpop.permute.xlu0 %4255
        %v4260 = vsel %vm2294, %v4155, 0
        %v4263 = vsel %vm2294, %v4156, 0
        %4265 = vmatpush.msra.mxu0 0.0
        %4266 = vmatpush.msra.mxu0 0.0
        %4267 = vmatpush.msra.mxu0 0.0
        %4268 = vmatpush.msra.mxu0 0.0
        %4269 = vmatpush.msra.mxu0 0.0
        %4270 = vmatpush.msra.mxu0 0.0
        %4271 = vmatpush.msra.mxu0 0.0
        %4272 = vmatpush.msra.mxu0 0.0
        %4273 = vmatpush.msra.mxu0 0.0
        %4274 = vmatpush.msra.mxu0 0.0
        %4275 = vmatpush.msra.mxu0 0.0
        %4276 = vmatpush.msra.mxu0 0.0
        %4277 = vmatpush.msra.mxu0 0.0
        %4278 = vmatpush.msra.mxu0 0.0
        %4279 = vmatpush.msra.mxu0 %v4256
        %4280 = vmatpush.msra.mxu0 %v4254
        %4281 = vmatmul.f32.gmra.mxu0 %v4260
        %v4282 = vpop.f32.mrf.mxu0
        %v4283 = vadd.f32 0.0, %v4282
        %4284 = vmatmul.f32.gmra.mxu0 %v4263
        %v4285 = vpop.f32.mrf.mxu0
        %v4286 = vadd.f32 0.0, %v4285
        %4287 = vdwg.mxu0
        %4288 = vrot.lane.b32.xlu0 %v1625, 120
        %v4289 = vpop.permute.xlu0 %4288
        %4290 = vrot.lane.b32.xlu0 %v1628, 120
        %v4291 = vpop.permute.xlu0 %4290
        %v4295 = vsel %vm2294, %v4157, 0
        %v4298 = vsel %vm2294, %v4158, 0
        %4300 = vmatpush.msra.mxu0 0.0
        %4301 = vmatpush.msra.mxu0 0.0
        %4302 = vmatpush.msra.mxu0 0.0
        %4303 = vmatpush.msra.mxu0 0.0
        %4304 = vmatpush.msra.mxu0 0.0
        %4305 = vmatpush.msra.mxu0 0.0
        %4306 = vmatpush.msra.mxu0 0.0
        %4307 = vmatpush.msra.mxu0 0.0
        %4308 = vmatpush.msra.mxu0 0.0
        %4309 = vmatpush.msra.mxu0 0.0
        %4310 = vmatpush.msra.mxu0 0.0
        %4311 = vmatpush.msra.mxu0 0.0
        %4312 = vmatpush.msra.mxu0 0.0
        %4313 = vmatpush.msra.mxu0 0.0
        %4314 = vmatpush.msra.mxu0 %v4291
        %4315 = vmatpush.msra.mxu0 %v4289
        %4316 = vmatmul.f32.gmra.mxu0 %v4295
        %v4317 = vpop.f32.mrf.mxu0
        %v4318 = vadd.f32 0.0, %v4317
        %4319 = vmatmul.f32.gmra.mxu0 %v4298
        %v4320 = vpop.f32.mrf.mxu0
        %v4321 = vadd.f32 0.0, %v4320
        %4322 = vdwg.mxu0
        %4323 = vrot.lane.b32.xlu0 %v1631, 120
        %v4324 = vpop.permute.xlu0 %4323
        %4325 = vrot.lane.b32.xlu0 %v1634, 120
        %v4326 = vpop.permute.xlu0 %4325
        %v4330 = vsel %vm2294, %v4159, 0
        %v4333 = vsel %vm2294, %v4160, 0
        %4335 = vmatpush.msra.mxu0 0.0
        %4336 = vmatpush.msra.mxu0 0.0
        %4337 = vmatpush.msra.mxu0 0.0
        %4338 = vmatpush.msra.mxu0 0.0
        %4339 = vmatpush.msra.mxu0 0.0
        %4340 = vmatpush.msra.mxu0 0.0
        %4341 = vmatpush.msra.mxu0 0.0
        %4342 = vmatpush.msra.mxu0 0.0
        %4343 = vmatpush.msra.mxu0 0.0
        %4344 = vmatpush.msra.mxu0 0.0
        %4345 = vmatpush.msra.mxu0 0.0
        %4346 = vmatpush.msra.mxu0 0.0
        %4347 = vmatpush.msra.mxu0 0.0
        %4348 = vmatpush.msra.mxu0 0.0
        %4349 = vmatpush.msra.mxu0 %v4326
        %4350 = vmatpush.msra.mxu0 %v4324
        %4351 = vmatmul.f32.gmra.mxu0 %v4330
        %v4352 = vpop.f32.mrf.mxu0
        %v4353 = vadd.f32 0.0, %v4352
        %4354 = vmatmul.f32.gmra.mxu0 %v4333
        %v4355 = vpop.f32.mrf.mxu0
        %v4356 = vadd.f32 0.0, %v4355
        %4357 = vdwg.mxu0
        %4358 = vrot.lane.b32.xlu0 %v1637, 120
        %v4359 = vpop.permute.xlu0 %4358
        %4360 = vrot.lane.b32.xlu0 %v1640, 120
        %v4361 = vpop.permute.xlu0 %4360
        %v4365 = vsel %vm2294, %v4161, 0
        %v4368 = vsel %vm2294, %v4162, 0
        %4370 = vmatpush.msra.mxu0 0.0
        %4371 = vmatpush.msra.mxu0 0.0
        %4372 = vmatpush.msra.mxu0 0.0
        %4373 = vmatpush.msra.mxu0 0.0
        %4374 = vmatpush.msra.mxu0 0.0
        %4375 = vmatpush.msra.mxu0 0.0
        %4376 = vmatpush.msra.mxu0 0.0
        %4377 = vmatpush.msra.mxu0 0.0
        %4378 = vmatpush.msra.mxu0 0.0
        %4379 = vmatpush.msra.mxu0 0.0
        %4380 = vmatpush.msra.mxu0 0.0
        %4381 = vmatpush.msra.mxu0 0.0
        %4382 = vmatpush.msra.mxu0 0.0
        %4383 = vmatpush.msra.mxu0 0.0
        %4384 = vmatpush.msra.mxu0 %v4361
        %4385 = vmatpush.msra.mxu0 %v4359
        %4386 = vmatmul.f32.gmra.mxu0 %v4365
        %v4387 = vpop.f32.mrf.mxu0
        %v4388 = vadd.f32 0.0, %v4387
        %4389 = vmatmul.f32.gmra.mxu0 %v4368
        %v4390 = vpop.f32.mrf.mxu0
        %v4391 = vadd.f32 0.0, %v4390
        %4392 = vdwg.mxu0
        %4393 = vrot.lane.b32.xlu0 %v1643, 120
        %v4394 = vpop.permute.xlu0 %4393
        %4395 = vrot.lane.b32.xlu0 %v1646, 120
        %v4396 = vpop.permute.xlu0 %4395
        %v4400 = vsel %vm2294, %v4163, 0
        %v4403 = vsel %vm2294, %v4164, 0
        %4405 = vmatpush.msra.mxu0 0.0
        %4406 = vmatpush.msra.mxu0 0.0
        %4407 = vmatpush.msra.mxu0 0.0
        %4408 = vmatpush.msra.mxu0 0.0
        %4409 = vmatpush.msra.mxu0 0.0
        %4410 = vmatpush.msra.mxu0 0.0
        %4411 = vmatpush.msra.mxu0 0.0
        %4412 = vmatpush.msra.mxu0 0.0
        %4413 = vmatpush.msra.mxu0 0.0
        %4414 = vmatpush.msra.mxu0 0.0
        %4415 = vmatpush.msra.mxu0 0.0
        %4416 = vmatpush.msra.mxu0 0.0
        %4417 = vmatpush.msra.mxu0 0.0
        %4418 = vmatpush.msra.mxu0 0.0
        %4419 = vmatpush.msra.mxu0 %v4396
        %4420 = vmatpush.msra.mxu0 %v4394
        %4421 = vmatmul.f32.gmra.mxu0 %v4400
        %v4422 = vpop.f32.mrf.mxu0
        %v4423 = vadd.f32 0.0, %v4422
        %4424 = vmatmul.f32.gmra.mxu0 %v4403
        %v4425 = vpop.f32.mrf.mxu0
        %v4426 = vadd.f32 0.0, %v4425
        %4427 = vdwg.mxu0
        %4428 = vrot.lane.b32.xlu0 %v1649, 120
        %v4429 = vpop.permute.xlu0 %4428
        %4430 = vrot.lane.b32.xlu0 %v1652, 120
        %v4431 = vpop.permute.xlu0 %4430
        %v4435 = vsel %vm2294, %v4165, 0
        %v4438 = vsel %vm2294, %v4166, 0
        %4440 = vmatpush.msra.mxu0 0.0
        %4441 = vmatpush.msra.mxu0 0.0
        %4442 = vmatpush.msra.mxu0 0.0
        %4443 = vmatpush.msra.mxu0 0.0
        %4444 = vmatpush.msra.mxu0 0.0
        %4445 = vmatpush.msra.mxu0 0.0
        %4446 = vmatpush.msra.mxu0 0.0
        %4447 = vmatpush.msra.mxu0 0.0
        %4448 = vmatpush.msra.mxu0 0.0
        %4449 = vmatpush.msra.mxu0 0.0
        %4450 = vmatpush.msra.mxu0 0.0
        %4451 = vmatpush.msra.mxu0 0.0
        %4452 = vmatpush.msra.mxu0 0.0
        %4453 = vmatpush.msra.mxu0 0.0
        %4454 = vmatpush.msra.mxu0 %v4431
        %4455 = vmatpush.msra.mxu0 %v4429
        %4456 = vmatmul.f32.gmra.mxu0 %v4435
        %v4457 = vpop.f32.mrf.mxu0
        %v4458 = vadd.f32 0.0, %v4457
        %4459 = vmatmul.f32.gmra.mxu0 %v4438
        %v4460 = vpop.f32.mrf.mxu0
        %v4461 = vadd.f32 0.0, %v4460
        %4462 = vdwg.mxu0
        %4463 = vrot.lane.b32.xlu0 %v1655, 120
        %v4464 = vpop.permute.xlu0 %4463
        %4465 = vrot.lane.b32.xlu0 %v1658, 120
        %v4466 = vpop.permute.xlu0 %4465
        %v4470 = vsel %vm2294, %v4167, 0
        %v4473 = vsel %vm2294, %v4168, 0
        %4475 = vmatpush.msra.mxu0 0.0
        %4476 = vmatpush.msra.mxu0 0.0
        %4477 = vmatpush.msra.mxu0 0.0
        %4478 = vmatpush.msra.mxu0 0.0
        %4479 = vmatpush.msra.mxu0 0.0
        %4480 = vmatpush.msra.mxu0 0.0
        %4481 = vmatpush.msra.mxu0 0.0
        %4482 = vmatpush.msra.mxu0 0.0
        %4483 = vmatpush.msra.mxu0 0.0
        %4484 = vmatpush.msra.mxu0 0.0
        %4485 = vmatpush.msra.mxu0 0.0
        %4486 = vmatpush.msra.mxu0 0.0
        %4487 = vmatpush.msra.mxu0 0.0
        %4488 = vmatpush.msra.mxu0 0.0
        %4489 = vmatpush.msra.mxu0 %v4466
        %4490 = vmatpush.msra.mxu0 %v4464
        %4491 = vmatmul.f32.gmra.mxu0 %v4470
        %v4492 = vpop.f32.mrf.mxu0
        %v4493 = vadd.f32 0.0, %v4492
        %4494 = vmatmul.f32.gmra.mxu0 %v4473
        %v4495 = vpop.f32.mrf.mxu0
        %v4496 = vadd.f32 0.0, %v4495
        %4497 = vdwg.mxu0
        %4498 = vrot.lane.b32.xlu0 %v1661, 120
        %v4499 = vpop.permute.xlu0 %4498
        %4500 = vrot.lane.b32.xlu0 %v1664, 120
        %v4501 = vpop.permute.xlu0 %4500
        %v4505 = vsel %vm2294, %v4169, 0
        %v4508 = vsel %vm2294, %v4170, 0
        %4510 = vmatpush.msra.mxu0 0.0
        %4511 = vmatpush.msra.mxu0 0.0
        %4512 = vmatpush.msra.mxu0 0.0
        %4513 = vmatpush.msra.mxu0 0.0
        %4514 = vmatpush.msra.mxu0 0.0
        %4515 = vmatpush.msra.mxu0 0.0
        %4516 = vmatpush.msra.mxu0 0.0
        %4517 = vmatpush.msra.mxu0 0.0
        %4518 = vmatpush.msra.mxu0 0.0
        %4519 = vmatpush.msra.mxu0 0.0
        %4520 = vmatpush.msra.mxu0 0.0
        %4521 = vmatpush.msra.mxu0 0.0
        %4522 = vmatpush.msra.mxu0 0.0
        %4523 = vmatpush.msra.mxu0 0.0
        %4524 = vmatpush.msra.mxu0 %v4501
        %4525 = vmatpush.msra.mxu0 %v4499
        %4526 = vmatmul.f32.gmra.mxu0 %v4505
        %v4527 = vpop.f32.mrf.mxu0
        %v4528 = vadd.f32 0.0, %v4527
        %4529 = vmatmul.f32.gmra.mxu0 %v4508
        %v4530 = vpop.f32.mrf.mxu0
        %v4531 = vadd.f32 0.0, %v4530
        %4532 = vdwg.mxu0
        %4533 = vrot.lane.b32.xlu0 %v1667, 120
        %v4534 = vpop.permute.xlu0 %4533
        %4535 = vrot.lane.b32.xlu0 %v1670, 120
        %v4536 = vpop.permute.xlu0 %4535
        %v4540 = vsel %vm2294, %v4171, 0
        %v4543 = vsel %vm2294, %v4172, 0
        %4545 = vmatpush.msra.mxu0 0.0
        %4546 = vmatpush.msra.mxu0 0.0
        %4547 = vmatpush.msra.mxu0 0.0
        %4548 = vmatpush.msra.mxu0 0.0
        %4549 = vmatpush.msra.mxu0 0.0
        %4550 = vmatpush.msra.mxu0 0.0
        %4551 = vmatpush.msra.mxu0 0.0
        %4552 = vmatpush.msra.mxu0 0.0
        %4553 = vmatpush.msra.mxu0 0.0
        %4554 = vmatpush.msra.mxu0 0.0
        %4555 = vmatpush.msra.mxu0 0.0
        %4556 = vmatpush.msra.mxu0 0.0
        %4557 = vmatpush.msra.mxu0 0.0
        %4558 = vmatpush.msra.mxu0 0.0
        %4559 = vmatpush.msra.mxu0 %v4536
        %4560 = vmatpush.msra.mxu0 %v4534
        %4561 = vmatmul.f32.gmra.mxu0 %v4540
        %v4562 = vpop.f32.mrf.mxu0
        %v4563 = vadd.f32 0.0, %v4562
        %4564 = vmatmul.f32.gmra.mxu0 %v4543
        %v4565 = vpop.f32.mrf.mxu0
        %v4566 = vadd.f32 0.0, %v4565
        %4567 = vdwg.mxu0
        %4568 = vrot.lane.b32.xlu0 %v1673, 120
        %v4569 = vpop.permute.xlu0 %4568
        %4570 = vrot.lane.b32.xlu0 %v1676, 120
        %v4571 = vpop.permute.xlu0 %4570
        %v4575 = vsel %vm2294, %v4173, 0
        %v4578 = vsel %vm2294, %v4174, 0
        %4580 = vmatpush.msra.mxu0 0.0
        %4581 = vmatpush.msra.mxu0 0.0
        %4582 = vmatpush.msra.mxu0 0.0
        %4583 = vmatpush.msra.mxu0 0.0
        %4584 = vmatpush.msra.mxu0 0.0
        %4585 = vmatpush.msra.mxu0 0.0
        %4586 = vmatpush.msra.mxu0 0.0
        %4587 = vmatpush.msra.mxu0 0.0
        %4588 = vmatpush.msra.mxu0 0.0
        %4589 = vmatpush.msra.mxu0 0.0
        %4590 = vmatpush.msra.mxu0 0.0
        %4591 = vmatpush.msra.mxu0 0.0
        %4592 = vmatpush.msra.mxu0 0.0
        %4593 = vmatpush.msra.mxu0 0.0
        %4594 = vmatpush.msra.mxu0 %v4571
        %4595 = vmatpush.msra.mxu0 %v4569
        %4596 = vmatmul.f32.gmra.mxu0 %v4575
        %v4597 = vpop.f32.mrf.mxu0
        %v4598 = vadd.f32 0.0, %v4597
        %4599 = vmatmul.f32.gmra.mxu0 %v4578
        %v4600 = vpop.f32.mrf.mxu0
        %v4601 = vadd.f32 0.0, %v4600
        %4602 = vdwg.mxu0
        %4603 = vrot.lane.b32.xlu0 %v1679, 120
        %v4604 = vpop.permute.xlu0 %4603
        %4605 = vrot.lane.b32.xlu0 %v1682, 120
        %v4606 = vpop.permute.xlu0 %4605
        %v4610 = vsel %vm2294, %v4175, 0
        %v4613 = vsel %vm2294, %v4176, 0
        %4615 = vmatpush.msra.mxu0 0.0
        %4616 = vmatpush.msra.mxu0 0.0
        %4617 = vmatpush.msra.mxu0 0.0
        %4618 = vmatpush.msra.mxu0 0.0
        %4619 = vmatpush.msra.mxu0 0.0
        %4620 = vmatpush.msra.mxu0 0.0
        %4621 = vmatpush.msra.mxu0 0.0
        %4622 = vmatpush.msra.mxu0 0.0
        %4623 = vmatpush.msra.mxu0 0.0
        %4624 = vmatpush.msra.mxu0 0.0
        %4625 = vmatpush.msra.mxu0 0.0
        %4626 = vmatpush.msra.mxu0 0.0
        %4627 = vmatpush.msra.mxu0 0.0
        %4628 = vmatpush.msra.mxu0 0.0
        %4629 = vmatpush.msra.mxu0 %v4606
        %4630 = vmatpush.msra.mxu0 %v4604
        %4631 = vmatmul.f32.gmra.mxu0 %v4610
        %v4632 = vpop.f32.mrf.mxu0
        %v4633 = vadd.f32 0.0, %v4632
        %4634 = vmatmul.f32.gmra.mxu0 %v4613
        %v4635 = vpop.f32.mrf.mxu0
        %v4636 = vadd.f32 0.0, %v4635
        %4637 = vdwg.mxu0
        %4638 = vrot.lane.b32.xlu0 %v1685, 120
        %v4639 = vpop.permute.xlu0 %4638
        %4640 = vrot.lane.b32.xlu0 %v1688, 120
        %v4641 = vpop.permute.xlu0 %4640
        %v4645 = vsel %vm2294, %v4177, 0
        %v4648 = vsel %vm2294, %v4178, 0
        %4650 = vmatpush.msra.mxu0 0.0
        %4651 = vmatpush.msra.mxu0 0.0
        %4652 = vmatpush.msra.mxu0 0.0
        %4653 = vmatpush.msra.mxu0 0.0
        %4654 = vmatpush.msra.mxu0 0.0
        %4655 = vmatpush.msra.mxu0 0.0
        %4656 = vmatpush.msra.mxu0 0.0
        %4657 = vmatpush.msra.mxu0 0.0
        %4658 = vmatpush.msra.mxu0 0.0
        %4659 = vmatpush.msra.mxu0 0.0
        %4660 = vmatpush.msra.mxu0 0.0
        %4661 = vmatpush.msra.mxu0 0.0
        %4662 = vmatpush.msra.mxu0 0.0
        %4663 = vmatpush.msra.mxu0 0.0
        %4664 = vmatpush.msra.mxu0 %v4641
        %4665 = vmatpush.msra.mxu0 %v4639
        %4666 = vmatmul.f32.gmra.mxu0 %v4645
        %v4667 = vpop.f32.mrf.mxu0
        %v4668 = vadd.f32 0.0, %v4667
        %4669 = vmatmul.f32.gmra.mxu0 %v4648
        %v4670 = vpop.f32.mrf.mxu0
        %v4671 = vadd.f32 0.0, %v4670
        %4672 = vdwg.mxu0
        %4673 = vrot.lane.b32.xlu0 %v1691, 120
        %v4674 = vpop.permute.xlu0 %4673
        %4675 = vrot.lane.b32.xlu0 %v1694, 120
        %v4676 = vpop.permute.xlu0 %4675
        %v4680 = vsel %vm2294, %v4179, 0
        %v4683 = vsel %vm2294, %v4180, 0
        %4685 = vmatpush.msra.mxu0 0.0
        %4686 = vmatpush.msra.mxu0 0.0
        %4687 = vmatpush.msra.mxu0 0.0
        %4688 = vmatpush.msra.mxu0 0.0
        %4689 = vmatpush.msra.mxu0 0.0
        %4690 = vmatpush.msra.mxu0 0.0
        %4691 = vmatpush.msra.mxu0 0.0
        %4692 = vmatpush.msra.mxu0 0.0
        %4693 = vmatpush.msra.mxu0 0.0
        %4694 = vmatpush.msra.mxu0 0.0
        %4695 = vmatpush.msra.mxu0 0.0
        %4696 = vmatpush.msra.mxu0 0.0
        %4697 = vmatpush.msra.mxu0 0.0
        %4698 = vmatpush.msra.mxu0 0.0
        %4699 = vmatpush.msra.mxu0 %v4676
        %4700 = vmatpush.msra.mxu0 %v4674
        %4701 = vmatmul.f32.gmra.mxu0 %v4680
        %v4702 = vpop.f32.mrf.mxu0
        %v4703 = vadd.f32 0.0, %v4702
        %4704 = vmatmul.f32.gmra.mxu0 %v4683
        %v4705 = vpop.f32.mrf.mxu0
        %v4706 = vadd.f32 0.0, %v4705
        %4707 = vdwg.mxu0
        %4708 = vrot.lane.b32.xlu0 %v1697, 120
        %v4709 = vpop.permute.xlu0 %4708
        %4710 = vrot.lane.b32.xlu0 %v1700, 120
        %v4711 = vpop.permute.xlu0 %4710
        %v4715 = vsel %vm2294, %v4181, 0
        %v4718 = vsel %vm2294, %v4182, 0
        %4720 = vmatpush.msra.mxu0 0.0
        %4721 = vmatpush.msra.mxu0 0.0
        %4722 = vmatpush.msra.mxu0 0.0
        %4723 = vmatpush.msra.mxu0 0.0
        %4724 = vmatpush.msra.mxu0 0.0
        %4725 = vmatpush.msra.mxu0 0.0
        %4726 = vmatpush.msra.mxu0 0.0
        %4727 = vmatpush.msra.mxu0 0.0
        %4728 = vmatpush.msra.mxu0 0.0
        %4729 = vmatpush.msra.mxu0 0.0
        %4730 = vmatpush.msra.mxu0 0.0
        %4731 = vmatpush.msra.mxu0 0.0
        %4732 = vmatpush.msra.mxu0 0.0
        %4733 = vmatpush.msra.mxu0 0.0
        %4734 = vmatpush.msra.mxu0 %v4711
        %4735 = vmatpush.msra.mxu0 %v4709
        %4736 = vmatmul.f32.gmra.mxu0 %v4715
        %v4737 = vpop.f32.mrf.mxu0
        %v4738 = vadd.f32 0.0, %v4737
        %4739 = vmatmul.f32.gmra.mxu0 %v4718
        %v4740 = vpop.f32.mrf.mxu0
        %v4741 = vadd.f32 0.0, %v4740
        %4742 = vdwg.mxu0
        %4775 = vrot.lane.b32.xlu0 %v4213, 4
        %v4776 = vpop.permute.xlu0 %4775
        %4777 = vrot.lane.b32.xlu0 %v4216, 4
        %v4778 = vpop.permute.xlu0 %4777
        %4779 = vrot.lane.b32.xlu0 %v4248, 4
        %v4780 = vpop.permute.xlu0 %4779
        %4781 = vrot.lane.b32.xlu0 %v4251, 4
        %v4782 = vpop.permute.xlu0 %4781
        %4783 = vrot.lane.b32.xlu0 %v4283, 4
        %v4784 = vpop.permute.xlu0 %4783
        %4785 = vrot.lane.b32.xlu0 %v4286, 4
        %v4786 = vpop.permute.xlu0 %4785
        %4787 = vrot.lane.b32.xlu0 %v4318, 4
        %v4788 = vpop.permute.xlu0 %4787
        %4789 = vrot.lane.b32.xlu0 %v4321, 4
        %v4790 = vpop.permute.xlu0 %4789
        %4791 = vrot.lane.b32.xlu0 %v4353, 4
        %v4792 = vpop.permute.xlu0 %4791
        %4793 = vrot.lane.b32.xlu0 %v4356, 4
        %v4794 = vpop.permute.xlu0 %4793
        %4795 = vrot.lane.b32.xlu0 %v4388, 4
        %v4796 = vpop.permute.xlu0 %4795
        %4797 = vrot.lane.b32.xlu0 %v4391, 4
        %v4798 = vpop.permute.xlu0 %4797
        %4799 = vrot.lane.b32.xlu0 %v4423, 4
        %v4800 = vpop.permute.xlu0 %4799
        %4801 = vrot.lane.b32.xlu0 %v4426, 4
        %v4802 = vpop.permute.xlu0 %4801
        %4803 = vrot.lane.b32.xlu0 %v4458, 4
        %v4804 = vpop.permute.xlu0 %4803
        %4805 = vrot.lane.b32.xlu0 %v4461, 4
        %v4806 = vpop.permute.xlu0 %4805
        %4807 = vrot.lane.b32.xlu0 %v4493, 4
        %v4808 = vpop.permute.xlu0 %4807
        %4809 = vrot.lane.b32.xlu0 %v4496, 4
        %v4810 = vpop.permute.xlu0 %4809
        %4811 = vrot.lane.b32.xlu0 %v4528, 4
        %v4812 = vpop.permute.xlu0 %4811
        %4813 = vrot.lane.b32.xlu0 %v4531, 4
        %v4814 = vpop.permute.xlu0 %4813
        %4815 = vrot.lane.b32.xlu0 %v4563, 4
        %v4816 = vpop.permute.xlu0 %4815
        %4817 = vrot.lane.b32.xlu0 %v4566, 4
        %v4818 = vpop.permute.xlu0 %4817
        %4819 = vrot.lane.b32.xlu0 %v4598, 4
        %v4820 = vpop.permute.xlu0 %4819
        %4821 = vrot.lane.b32.xlu0 %v4601, 4
        %v4822 = vpop.permute.xlu0 %4821
        %4823 = vrot.lane.b32.xlu0 %v4633, 4
        %v4824 = vpop.permute.xlu0 %4823
        %4825 = vrot.lane.b32.xlu0 %v4636, 4
        %v4826 = vpop.permute.xlu0 %4825
        %4827 = vrot.lane.b32.xlu0 %v4668, 4
        %v4828 = vpop.permute.xlu0 %4827
        %4829 = vrot.lane.b32.xlu0 %v4671, 4
        %v4830 = vpop.permute.xlu0 %4829
        %4831 = vrot.lane.b32.xlu0 %v4703, 4
        %v4832 = vpop.permute.xlu0 %4831
        %4833 = vrot.lane.b32.xlu0 %v4706, 4
        %v4834 = vpop.permute.xlu0 %4833
        %4835 = vrot.lane.b32.xlu0 %v4738, 4
        %v4836 = vpop.permute.xlu0 %4835
        %4837 = vrot.lane.b32.xlu0 %v4741, 4
        %v4838 = vpop.permute.xlu0 %4837
        %v4871 = vadd.f32 %v1389, %v4776
        %v4872 = vadd.f32 %v1392, %v4778
        %v4873 = vadd.f32 %v1395, %v4780
        %v4874 = vadd.f32 %v1398, %v4782
        %v4875 = vadd.f32 %v1401, %v4784
        %v4876 = vadd.f32 %v1404, %v4786
        %v4877 = vadd.f32 %v1407, %v4788
        %v4878 = vadd.f32 %v1410, %v4790
        %v4879 = vadd.f32 %v1413, %v4792
        %v4880 = vadd.f32 %v1416, %v4794
        %v4881 = vadd.f32 %v1419, %v4796
        %v4882 = vadd.f32 %v1422, %v4798
        %v4883 = vadd.f32 %v1425, %v4800
        %v4884 = vadd.f32 %v1428, %v4802
        %v4885 = vadd.f32 %v1431, %v4804
        %v4886 = vadd.f32 %v1434, %v4806
        %v4887 = vadd.f32 %v1437, %v4808
        %v4888 = vadd.f32 %v1440, %v4810
        %v4889 = vadd.f32 %v1443, %v4812
        %v4890 = vadd.f32 %v1446, %v4814
        %v4891 = vadd.f32 %v1449, %v4816
        %v4892 = vadd.f32 %v1452, %v4818
        %v4893 = vadd.f32 %v1455, %v4820
        %v4894 = vadd.f32 %v1458, %v4822
        %v4895 = vadd.f32 %v1461, %v4824
        %v4896 = vadd.f32 %v1464, %v4826
        %v4897 = vadd.f32 %v1467, %v4828
        %v4898 = vadd.f32 %v1470, %v4830
        %v4899 = vadd.f32 %v1473, %v4832
        %v4900 = vadd.f32 %v1476, %v4834
        %v4901 = vadd.f32 %v1479, %v4836
        %v4902 = vadd.f32 %v1482, %v4838
        %4935 = vrot.lane.b32.xlu0 %v4871, 124
        %v4936 = vpop.permute.xlu0 %4935
        %4937 = vrot.lane.b32.xlu0 %v4872, 124
        %v4938 = vpop.permute.xlu0 %4937
        %4939 = vrot.lane.b32.xlu0 %v4873, 124
        %v4940 = vpop.permute.xlu0 %4939
        %4941 = vrot.lane.b32.xlu0 %v4874, 124
        %v4942 = vpop.permute.xlu0 %4941
        %4943 = vrot.lane.b32.xlu0 %v4875, 124
        %v4944 = vpop.permute.xlu0 %4943
        %4945 = vrot.lane.b32.xlu0 %v4876, 124
        %v4946 = vpop.permute.xlu0 %4945
        %4947 = vrot.lane.b32.xlu0 %v4877, 124
        %v4948 = vpop.permute.xlu0 %4947
        %4949 = vrot.lane.b32.xlu0 %v4878, 124
        %v4950 = vpop.permute.xlu0 %4949
        %4951 = vrot.lane.b32.xlu0 %v4879, 124
        %v4952 = vpop.permute.xlu0 %4951
        %4953 = vrot.lane.b32.xlu0 %v4880, 124
        %v4954 = vpop.permute.xlu0 %4953
        %4955 = vrot.lane.b32.xlu0 %v4881, 124
        %v4956 = vpop.permute.xlu0 %4955
        %4957 = vrot.lane.b32.xlu0 %v4882, 124
        %v4958 = vpop.permute.xlu0 %4957
        %4959 = vrot.lane.b32.xlu0 %v4883, 124
        %v4960 = vpop.permute.xlu0 %4959
        %4961 = vrot.lane.b32.xlu0 %v4884, 124
        %v4962 = vpop.permute.xlu0 %4961
        %4963 = vrot.lane.b32.xlu0 %v4885, 124
        %v4964 = vpop.permute.xlu0 %4963
        %4965 = vrot.lane.b32.xlu0 %v4886, 124
        %v4966 = vpop.permute.xlu0 %4965
        %4967 = vrot.lane.b32.xlu0 %v4887, 124
        %v4968 = vpop.permute.xlu0 %4967
        %4969 = vrot.lane.b32.xlu0 %v4888, 124
        %v4970 = vpop.permute.xlu0 %4969
        %4971 = vrot.lane.b32.xlu0 %v4889, 124
        %v4972 = vpop.permute.xlu0 %4971
        %4973 = vrot.lane.b32.xlu0 %v4890, 124
        %v4974 = vpop.permute.xlu0 %4973
        %4975 = vrot.lane.b32.xlu0 %v4891, 124
        %v4976 = vpop.permute.xlu0 %4975
        %4977 = vrot.lane.b32.xlu0 %v4892, 124
        %v4978 = vpop.permute.xlu0 %4977
        %4979 = vrot.lane.b32.xlu0 %v4893, 124
        %v4980 = vpop.permute.xlu0 %4979
        %4981 = vrot.lane.b32.xlu0 %v4894, 124
        %v4982 = vpop.permute.xlu0 %4981
        %4983 = vrot.lane.b32.xlu0 %v4895, 124
        %v4984 = vpop.permute.xlu0 %4983
        %4985 = vrot.lane.b32.xlu0 %v4896, 124
        %v4986 = vpop.permute.xlu0 %4985
        %4987 = vrot.lane.b32.xlu0 %v4897, 124
        %v4988 = vpop.permute.xlu0 %4987
        %4989 = vrot.lane.b32.xlu0 %v4898, 124
        %v4990 = vpop.permute.xlu0 %4989
        %4991 = vrot.lane.b32.xlu0 %v4899, 124
        %v4992 = vpop.permute.xlu0 %4991
        %4993 = vrot.lane.b32.xlu0 %v4900, 124
        %v4994 = vpop.permute.xlu0 %4993
        %4995 = vrot.lane.b32.xlu0 %v4901, 124
        %v4996 = vpop.permute.xlu0 %4995
        %4997 = vrot.lane.b32.xlu0 %v4902, 124
        %v4998 = vpop.permute.xlu0 %4997
        %5063 = vrot.lane.b32.xlu0 %v3831, 120
        %v5064 = vpop.permute.xlu0 %5063
        %5065 = vrot.lane.b32.xlu0 %v3832, 120
        %v5066 = vpop.permute.xlu0 %5065
        %5067 = vrot.lane.b32.xlu0 %v3833, 120
        %v5068 = vpop.permute.xlu0 %5067
        %5069 = vrot.lane.b32.xlu0 %v3834, 120
        %v5070 = vpop.permute.xlu0 %5069
        %5071 = vrot.lane.b32.xlu0 %v3835, 120
        %v5072 = vpop.permute.xlu0 %5071
        %5073 = vrot.lane.b32.xlu0 %v3836, 120
        %v5074 = vpop.permute.xlu0 %5073
        %5075 = vrot.lane.b32.xlu0 %v3837, 120
        %v5076 = vpop.permute.xlu0 %5075
        %5077 = vrot.lane.b32.xlu0 %v3838, 120
        %v5078 = vpop.permute.xlu0 %5077
        %5079 = vrot.lane.b32.xlu0 %v3839, 120
        %v5080 = vpop.permute.xlu0 %5079
        %5081 = vrot.lane.b32.xlu0 %v3840, 120
        %v5082 = vpop.permute.xlu0 %5081
        %5083 = vrot.lane.b32.xlu0 %v3841, 120
        %v5084 = vpop.permute.xlu0 %5083
        %5085 = vrot.lane.b32.xlu0 %v3842, 120
        %v5086 = vpop.permute.xlu0 %5085
        %5087 = vrot.lane.b32.xlu0 %v3843, 120
        %v5088 = vpop.permute.xlu0 %5087
        %5089 = vrot.lane.b32.xlu0 %v3844, 120
        %v5090 = vpop.permute.xlu0 %5089
        %5091 = vrot.lane.b32.xlu0 %v3845, 120
        %v5092 = vpop.permute.xlu0 %5091
        %5093 = vrot.lane.b32.xlu0 %v3846, 120
        %v5094 = vpop.permute.xlu0 %5093
        %5095 = vrot.lane.b32.xlu0 %v3847, 120
        %v5096 = vpop.permute.xlu0 %5095
        %5097 = vrot.lane.b32.xlu0 %v3848, 120
        %v5098 = vpop.permute.xlu0 %5097
        %5099 = vrot.lane.b32.xlu0 %v3849, 120
        %v5100 = vpop.permute.xlu0 %5099
        %5101 = vrot.lane.b32.xlu0 %v3850, 120
        %v5102 = vpop.permute.xlu0 %5101
        %5103 = vrot.lane.b32.xlu0 %v3851, 120
        %v5104 = vpop.permute.xlu0 %5103
        %5105 = vrot.lane.b32.xlu0 %v3852, 120
        %v5106 = vpop.permute.xlu0 %5105
        %5107 = vrot.lane.b32.xlu0 %v3853, 120
        %v5108 = vpop.permute.xlu0 %5107
        %5109 = vrot.lane.b32.xlu0 %v3854, 120
        %v5110 = vpop.permute.xlu0 %5109
        %5111 = vrot.lane.b32.xlu0 %v3855, 120
        %v5112 = vpop.permute.xlu0 %5111
        %5113 = vrot.lane.b32.xlu0 %v3856, 120
        %v5114 = vpop.permute.xlu0 %5113
        %5115 = vrot.lane.b32.xlu0 %v3857, 120
        %v5116 = vpop.permute.xlu0 %5115
        %5117 = vrot.lane.b32.xlu0 %v3858, 120
        %v5118 = vpop.permute.xlu0 %5117
        %5119 = vrot.lane.b32.xlu0 %v3859, 120
        %v5120 = vpop.permute.xlu0 %5119
        %5121 = vrot.lane.b32.xlu0 %v3860, 120
        %v5122 = vpop.permute.xlu0 %5121
        %5123 = vrot.lane.b32.xlu0 %v3861, 120
        %v5124 = vpop.permute.xlu0 %5123
        %5125 = vrot.lane.b32.xlu0 %v3862, 120
        %v5126 = vpop.permute.xlu0 %5125
        %v5159 = vsel %vm1488, %v4936, %v5064
        %v5160 = vsel %vm1488, %v4938, %v5066
        %v5161 = vsel %vm1488, %v4940, %v5068
        %v5162 = vsel %vm1488, %v4942, %v5070
        %v5163 = vsel %vm1488, %v4944, %v5072
        %v5164 = vsel %vm1488, %v4946, %v5074
        %v5165 = vsel %vm1488, %v4948, %v5076
        %v5166 = vsel %vm1488, %v4950, %v5078
        %v5167 = vsel %vm1488, %v4952, %v5080
        %v5168 = vsel %vm1488, %v4954, %v5082
        %v5169 = vsel %vm1488, %v4956, %v5084
        %v5170 = vsel %vm1488, %v4958, %v5086
        %v5171 = vsel %vm1488, %v4960, %v5088
        %v5172 = vsel %vm1488, %v4962, %v5090
        %v5173 = vsel %vm1488, %v4964, %v5092
        %v5174 = vsel %vm1488, %v4966, %v5094
        %v5175 = vsel %vm1488, %v4968, %v5096
        %v5176 = vsel %vm1488, %v4970, %v5098
        %v5177 = vsel %vm1488, %v4972, %v5100
        %v5178 = vsel %vm1488, %v4974, %v5102
        %v5179 = vsel %vm1488, %v4976, %v5104
        %v5180 = vsel %vm1488, %v4978, %v5106
        %v5181 = vsel %vm1488, %v4980, %v5108
        %v5182 = vsel %vm1488, %v4982, %v5110
        %v5183 = vsel %vm1488, %v4984, %v5112
        %v5184 = vsel %vm1488, %v4986, %v5114
        %v5185 = vsel %vm1488, %v4988, %v5116
        %v5186 = vsel %vm1488, %v4990, %v5118
        %v5187 = vsel %vm1488, %v4992, %v5120
        %v5188 = vsel %vm1488, %v4994, %v5122
        %v5189 = vsel %vm1488, %v4996, %v5124
        %v5190 = vsel %vm1488, %v4998, %v5126
        %v5191 = vrot.slane %v5163, 4
        %vm5192 = vcmask 1047556
        %v5193 = vsel %vm5192, %v5191, %v5159
        %v5194 = vrot.slane %v5159, 4
        %v5195 = vsel %vm5192, %v5163, %v5194
        %v5197 = vunpack.c.l.s4 1983009808
        %v5198 = vunpack.c.0.s8 %v5197
        %v5199 = vperm.slane %v5193, %v5198
        %v5201 = vunpack.c.l.s4 1983009808
        %v5202 = vunpack.c.0.s8 %v5201
        %v5203 = vperm.slane %v5195, %v5202
        %v5204 = vrot.slane %v5165, 4
        %v5205 = vsel %vm5192, %v5204, %v5161
        %v5206 = vrot.slane %v5161, 4
        %v5207 = vsel %vm5192, %v5165, %v5206
        %v5209 = vunpack.c.l.s4 1983009808
        %v5210 = vunpack.c.0.s8 %v5209
        %v5211 = vperm.slane %v5205, %v5210
        %v5213 = vunpack.c.l.s4 1983009808
        %v5214 = vunpack.c.0.s8 %v5213
        %v5215 = vperm.slane %v5207, %v5214
        %v5216 = vrot.slane %v5171, 4
        %v5217 = vsel %vm5192, %v5216, %v5167
        %v5218 = vrot.slane %v5167, 4
        %v5219 = vsel %vm5192, %v5171, %v5218
        %v5221 = vunpack.c.l.s4 1983009808
        %v5222 = vunpack.c.0.s8 %v5221
        %v5223 = vperm.slane %v5217, %v5222
        %v5225 = vunpack.c.l.s4 1983009808
        %v5226 = vunpack.c.0.s8 %v5225
        %v5227 = vperm.slane %v5219, %v5226
        %v5228 = vrot.slane %v5173, 4
        %v5229 = vsel %vm5192, %v5228, %v5169
        %v5230 = vrot.slane %v5169, 4
        %v5231 = vsel %vm5192, %v5173, %v5230
        %v5233 = vunpack.c.l.s4 1983009808
        %v5234 = vunpack.c.0.s8 %v5233
        %v5235 = vperm.slane %v5229, %v5234
        %v5237 = vunpack.c.l.s4 1983009808
        %v5238 = vunpack.c.0.s8 %v5237
        %v5239 = vperm.slane %v5231, %v5238
        %v5240 = vrot.slane %v5211, 4
        %v5241 = vsel %vm5192, %v5240, %v5199
        %v5242 = vrot.slane %v5199, 4
        %v5243 = vsel %vm5192, %v5211, %v5242
        %v5245 = vunpack.c.l.s4 1934713408
        %v5246 = vunpack.c.0.s8 %v5245
        %v5247 = vperm.slane %v5241, %v5246
        %v5249 = vunpack.c.l.s4 1934713408
        %v5250 = vunpack.c.0.s8 %v5249
        %v5251 = vperm.slane %v5243, %v5250
        %v5252 = vrot.slane %v5215, 4
        %v5253 = vsel %vm5192, %v5252, %v5203
        %v5254 = vrot.slane %v5203, 4
        %v5255 = vsel %vm5192, %v5215, %v5254
        %v5257 = vunpack.c.l.s4 1934713408
        %v5258 = vunpack.c.0.s8 %v5257
        %v5259 = vperm.slane %v5253, %v5258
        %v5261 = vunpack.c.l.s4 1934713408
        %v5262 = vunpack.c.0.s8 %v5261
        %v5263 = vperm.slane %v5255, %v5262
        %v5264 = vrot.slane %v5235, 4
        %v5265 = vsel %vm5192, %v5264, %v5223
        %v5266 = vrot.slane %v5223, 4
        %v5267 = vsel %vm5192, %v5235, %v5266
        %v5269 = vunpack.c.l.s4 1934713408
        %v5270 = vunpack.c.0.s8 %v5269
        %v5271 = vperm.slane %v5265, %v5270
        %v5273 = vunpack.c.l.s4 1934713408
        %v5274 = vunpack.c.0.s8 %v5273
        %v5275 = vperm.slane %v5267, %v5274
        %v5276 = vrot.slane %v5239, 4
        %v5277 = vsel %vm5192, %v5276, %v5227
        %v5278 = vrot.slane %v5227, 4
        %v5279 = vsel %vm5192, %v5239, %v5278
        %v5281 = vunpack.c.l.s4 1934713408
        %v5282 = vunpack.c.0.s8 %v5281
        %v5283 = vperm.slane %v5277, %v5282
        %v5285 = vunpack.c.l.s4 1934713408
        %v5286 = vunpack.c.0.s8 %v5285
        %v5287 = vperm.slane %v5279, %v5286
        %v5288 = vrot.slane %v5271, 4
        %v5289 = vsel %vm5192, %v5288, %v5247
        %v5290 = vrot.slane %v5247, 4
        %v5291 = vsel %vm5192, %v5271, %v5290
        %v5292 = vrot.slane %v5275, 4
        %v5293 = vsel %vm5192, %v5292, %v5251
        %v5294 = vrot.slane %v5251, 4
        %v5295 = vsel %vm5192, %v5275, %v5294
        %v5296 = vrot.slane %v5283, 4
        %v5297 = vsel %vm5192, %v5296, %v5259
        %v5298 = vrot.slane %v5259, 4
        %v5299 = vsel %vm5192, %v5283, %v5298
        %v5300 = vrot.slane %v5287, 4
        %v5301 = vsel %vm5192, %v5300, %v5263
        %v5302 = vrot.slane %v5263, 4
        %v5303 = vsel %vm5192, %v5287, %v5302
        %v5304 = vrot.slane %v5179, 4
        %v5305 = vsel %vm5192, %v5304, %v5175
        %v5306 = vrot.slane %v5175, 4
        %v5307 = vsel %vm5192, %v5179, %v5306
        %v5309 = vunpack.c.l.s4 1983009808
        %v5310 = vunpack.c.0.s8 %v5309
        %v5311 = vperm.slane %v5305, %v5310
        %v5313 = vunpack.c.l.s4 1983009808
        %v5314 = vunpack.c.0.s8 %v5313
        %v5315 = vperm.slane %v5307, %v5314
        %v5316 = vrot.slane %v5181, 4
        %v5317 = vsel %vm5192, %v5316, %v5177
        %v5318 = vrot.slane %v5177, 4
        %v5319 = vsel %vm5192, %v5181, %v5318
        %v5321 = vunpack.c.l.s4 1983009808
        %v5322 = vunpack.c.0.s8 %v5321
        %v5323 = vperm.slane %v5317, %v5322
        %v5325 = vunpack.c.l.s4 1983009808
        %v5326 = vunpack.c.0.s8 %v5325
        %v5327 = vperm.slane %v5319, %v5326
        %v5328 = vrot.slane %v5187, 4
        %v5329 = vsel %vm5192, %v5328, %v5183
        %v5330 = vrot.slane %v5183, 4
        %v5331 = vsel %vm5192, %v5187, %v5330
        %v5333 = vunpack.c.l.s4 1983009808
        %v5334 = vunpack.c.0.s8 %v5333
        %v5335 = vperm.slane %v5329, %v5334
        %v5337 = vunpack.c.l.s4 1983009808
        %v5338 = vunpack.c.0.s8 %v5337
        %v5339 = vperm.slane %v5331, %v5338
        %v5340 = vrot.slane %v5189, 4
        %v5341 = vsel %vm5192, %v5340, %v5185
        %v5342 = vrot.slane %v5185, 4
        %v5343 = vsel %vm5192, %v5189, %v5342
        %v5345 = vunpack.c.l.s4 1983009808
        %v5346 = vunpack.c.0.s8 %v5345
        %v5347 = vperm.slane %v5341, %v5346
        %v5349 = vunpack.c.l.s4 1983009808
        %v5350 = vunpack.c.0.s8 %v5349
        %v5351 = vperm.slane %v5343, %v5350
        %v5352 = vrot.slane %v5323, 4
        %v5353 = vsel %vm5192, %v5352, %v5311
        %v5354 = vrot.slane %v5311, 4
        %v5355 = vsel %vm5192, %v5323, %v5354
        %v5357 = vunpack.c.l.s4 1934713408
        %v5358 = vunpack.c.0.s8 %v5357
        %v5359 = vperm.slane %v5353, %v5358
        %v5361 = vunpack.c.l.s4 1934713408
        %v5362 = vunpack.c.0.s8 %v5361
        %v5363 = vperm.slane %v5355, %v5362
        %v5364 = vrot.slane %v5327, 4
        %v5365 = vsel %vm5192, %v5364, %v5315
        %v5366 = vrot.slane %v5315, 4
        %v5367 = vsel %vm5192, %v5327, %v5366
        %v5369 = vunpack.c.l.s4 1934713408
        %v5370 = vunpack.c.0.s8 %v5369
        %v5371 = vperm.slane %v5365, %v5370
        %v5373 = vunpack.c.l.s4 1934713408
        %v5374 = vunpack.c.0.s8 %v5373
        %v5375 = vperm.slane %v5367, %v5374
        %v5376 = vrot.slane %v5347, 4
        %v5377 = vsel %vm5192, %v5376, %v5335
        %v5378 = vrot.slane %v5335, 4
        %v5379 = vsel %vm5192, %v5347, %v5378
        %v5381 = vunpack.c.l.s4 1934713408
        %v5382 = vunpack.c.0.s8 %v5381
        %v5383 = vperm.slane %v5377, %v5382
        %v5385 = vunpack.c.l.s4 1934713408
        %v5386 = vunpack.c.0.s8 %v5385
        %v5387 = vperm.slane %v5379, %v5386
        %v5388 = vrot.slane %v5351, 4
        %v5389 = vsel %vm5192, %v5388, %v5339
        %v5390 = vrot.slane %v5339, 4
        %v5391 = vsel %vm5192, %v5351, %v5390
        %v5393 = vunpack.c.l.s4 1934713408
        %v5394 = vunpack.c.0.s8 %v5393
        %v5395 = vperm.slane %v5389, %v5394
        %v5397 = vunpack.c.l.s4 1934713408
        %v5398 = vunpack.c.0.s8 %v5397
        %v5399 = vperm.slane %v5391, %v5398
        %v5400 = vrot.slane %v5383, 4
        %v5401 = vsel %vm5192, %v5400, %v5359
        %v5402 = vrot.slane %v5359, 4
        %v5403 = vsel %vm5192, %v5383, %v5402
        %v5404 = vrot.slane %v5387, 4
        %v5405 = vsel %vm5192, %v5404, %v5363
        %v5406 = vrot.slane %v5363, 4
        %v5407 = vsel %vm5192, %v5387, %v5406
        %v5408 = vrot.slane %v5395, 4
        %v5409 = vsel %vm5192, %v5408, %v5371
        %v5410 = vrot.slane %v5371, 4
        %v5411 = vsel %vm5192, %v5395, %v5410
        %v5412 = vrot.slane %v5399, 4
        %v5413 = vsel %vm5192, %v5412, %v5375
        %v5414 = vrot.slane %v5375, 4
        %v5415 = vsel %vm5192, %v5399, %v5414
        %v5416 = vrot.slane %v5164, 4
        %v5417 = vsel %vm5192, %v5416, %v5160
        %v5418 = vrot.slane %v5160, 4
        %v5419 = vsel %vm5192, %v5164, %v5418
        %v5421 = vunpack.c.l.s4 1983009808
        %v5422 = vunpack.c.0.s8 %v5421
        %v5423 = vperm.slane %v5417, %v5422
        %v5425 = vunpack.c.l.s4 1983009808
        %v5426 = vunpack.c.0.s8 %v5425
        %v5427 = vperm.slane %v5419, %v5426
        %v5428 = vrot.slane %v5166, 4
        %v5429 = vsel %vm5192, %v5428, %v5162
        %v5430 = vrot.slane %v5162, 4
        %v5431 = vsel %vm5192, %v5166, %v5430
        %v5433 = vunpack.c.l.s4 1983009808
        %v5434 = vunpack.c.0.s8 %v5433
        %v5435 = vperm.slane %v5429, %v5434
        %v5437 = vunpack.c.l.s4 1983009808
        %v5438 = vunpack.c.0.s8 %v5437
        %v5439 = vperm.slane %v5431, %v5438
        %v5440 = vrot.slane %v5172, 4
        %v5441 = vsel %vm5192, %v5440, %v5168
        %v5442 = vrot.slane %v5168, 4
        %v5443 = vsel %vm5192, %v5172, %v5442
        %v5445 = vunpack.c.l.s4 1983009808
        %v5446 = vunpack.c.0.s8 %v5445
        %v5447 = vperm.slane %v5441, %v5446
        %v5449 = vunpack.c.l.s4 1983009808
        %v5450 = vunpack.c.0.s8 %v5449
        %v5451 = vperm.slane %v5443, %v5450
        %v5452 = vrot.slane %v5174, 4
        %v5453 = vsel %vm5192, %v5452, %v5170
        %v5454 = vrot.slane %v5170, 4
        %v5455 = vsel %vm5192, %v5174, %v5454
        %v5457 = vunpack.c.l.s4 1983009808
        %v5458 = vunpack.c.0.s8 %v5457
        %v5459 = vperm.slane %v5453, %v5458
        %v5461 = vunpack.c.l.s4 1983009808
        %v5462 = vunpack.c.0.s8 %v5461
        %v5463 = vperm.slane %v5455, %v5462
        %v5464 = vrot.slane %v5435, 4
        %v5465 = vsel %vm5192, %v5464, %v5423
        %v5466 = vrot.slane %v5423, 4
        %v5467 = vsel %vm5192, %v5435, %v5466
        %v5469 = vunpack.c.l.s4 1934713408
        %v5470 = vunpack.c.0.s8 %v5469
        %v5471 = vperm.slane %v5465, %v5470
        %v5473 = vunpack.c.l.s4 1934713408
        %v5474 = vunpack.c.0.s8 %v5473
        %v5475 = vperm.slane %v5467, %v5474
        %v5476 = vrot.slane %v5439, 4
        %v5477 = vsel %vm5192, %v5476, %v5427
        %v5478 = vrot.slane %v5427, 4
        %v5479 = vsel %vm5192, %v5439, %v5478
        %v5481 = vunpack.c.l.s4 1934713408
        %v5482 = vunpack.c.0.s8 %v5481
        %v5483 = vperm.slane %v5477, %v5482
        %v5485 = vunpack.c.l.s4 1934713408
        %v5486 = vunpack.c.0.s8 %v5485
        %v5487 = vperm.slane %v5479, %v5486
        %v5488 = vrot.slane %v5459, 4
        %v5489 = vsel %vm5192, %v5488, %v5447
        %v5490 = vrot.slane %v5447, 4
        %v5491 = vsel %vm5192, %v5459, %v5490
        %v5493 = vunpack.c.l.s4 1934713408
        %v5494 = vunpack.c.0.s8 %v5493
        %v5495 = vperm.slane %v5489, %v5494
        %v5497 = vunpack.c.l.s4 1934713408
        %v5498 = vunpack.c.0.s8 %v5497
        %v5499 = vperm.slane %v5491, %v5498
        %v5500 = vrot.slane %v5463, 4
        %v5501 = vsel %vm5192, %v5500, %v5451
        %v5502 = vrot.slane %v5451, 4
        %v5503 = vsel %vm5192, %v5463, %v5502
        %v5505 = vunpack.c.l.s4 1934713408
        %v5506 = vunpack.c.0.s8 %v5505
        %v5507 = vperm.slane %v5501, %v5506
        %v5509 = vunpack.c.l.s4 1934713408
        %v5510 = vunpack.c.0.s8 %v5509
        %v5511 = vperm.slane %v5503, %v5510
        %v5512 = vrot.slane %v5495, 4
        %v5513 = vsel %vm5192, %v5512, %v5471
        %v5514 = vrot.slane %v5471, 4
        %v5515 = vsel %vm5192, %v5495, %v5514
        %v5516 = vrot.slane %v5499, 4
        %v5517 = vsel %vm5192, %v5516, %v5475
        %v5518 = vrot.slane %v5475, 4
        %v5519 = vsel %vm5192, %v5499, %v5518
        %v5520 = vrot.slane %v5507, 4
        %v5521 = vsel %vm5192, %v5520, %v5483
        %v5522 = vrot.slane %v5483, 4
        %v5523 = vsel %vm5192, %v5507, %v5522
        %v5524 = vrot.slane %v5511, 4
        %v5525 = vsel %vm5192, %v5524, %v5487
        %v5526 = vrot.slane %v5487, 4
        %v5527 = vsel %vm5192, %v5511, %v5526
        %v5528 = vrot.slane %v5180, 4
        %v5529 = vsel %vm5192, %v5528, %v5176
        %v5530 = vrot.slane %v5176, 4
        %v5531 = vsel %vm5192, %v5180, %v5530
        %v5533 = vunpack.c.l.s4 1983009808
        %v5534 = vunpack.c.0.s8 %v5533
        %v5535 = vperm.slane %v5529, %v5534
        %v5537 = vunpack.c.l.s4 1983009808
        %v5538 = vunpack.c.0.s8 %v5537
        %v5539 = vperm.slane %v5531, %v5538
        %v5540 = vrot.slane %v5182, 4
        %v5541 = vsel %vm5192, %v5540, %v5178
        %v5542 = vrot.slane %v5178, 4
        %v5543 = vsel %vm5192, %v5182, %v5542
        %v5545 = vunpack.c.l.s4 1983009808
        %v5546 = vunpack.c.0.s8 %v5545
        %v5547 = vperm.slane %v5541, %v5546
        %v5549 = vunpack.c.l.s4 1983009808
        %v5550 = vunpack.c.0.s8 %v5549
        %v5551 = vperm.slane %v5543, %v5550
        %v5552 = vrot.slane %v5188, 4
        %v5553 = vsel %vm5192, %v5552, %v5184
        %v5554 = vrot.slane %v5184, 4
        %v5555 = vsel %vm5192, %v5188, %v5554
        %v5557 = vunpack.c.l.s4 1983009808
        %v5558 = vunpack.c.0.s8 %v5557
        %v5559 = vperm.slane %v5553, %v5558
        %v5561 = vunpack.c.l.s4 1983009808
        %v5562 = vunpack.c.0.s8 %v5561
        %v5563 = vperm.slane %v5555, %v5562
        %v5564 = vrot.slane %v5190, 4
        %v5565 = vsel %vm5192, %v5564, %v5186
        %v5566 = vrot.slane %v5186, 4
        %v5567 = vsel %vm5192, %v5190, %v5566
        %v5569 = vunpack.c.l.s4 1983009808
        %v5570 = vunpack.c.0.s8 %v5569
        %v5571 = vperm.slane %v5565, %v5570
        %v5573 = vunpack.c.l.s4 1983009808
        %v5574 = vunpack.c.0.s8 %v5573
        %v5575 = vperm.slane %v5567, %v5574
        %v5576 = vrot.slane %v5547, 4
        %v5577 = vsel %vm5192, %v5576, %v5535
        %v5578 = vrot.slane %v5535, 4
        %v5579 = vsel %vm5192, %v5547, %v5578
        %v5581 = vunpack.c.l.s4 1934713408
        %v5582 = vunpack.c.0.s8 %v5581
        %v5583 = vperm.slane %v5577, %v5582
        %v5585 = vunpack.c.l.s4 1934713408
        %v5586 = vunpack.c.0.s8 %v5585
        %v5587 = vperm.slane %v5579, %v5586
        %v5588 = vrot.slane %v5551, 4
        %v5589 = vsel %vm5192, %v5588, %v5539
        %v5590 = vrot.slane %v5539, 4
        %v5591 = vsel %vm5192, %v5551, %v5590
        %v5593 = vunpack.c.l.s4 1934713408
        %v5594 = vunpack.c.0.s8 %v5593
        %v5595 = vperm.slane %v5589, %v5594
        %v5597 = vunpack.c.l.s4 1934713408
        %v5598 = vunpack.c.0.s8 %v5597
        %v5599 = vperm.slane %v5591, %v5598
        %v5600 = vrot.slane %v5571, 4
        %v5601 = vsel %vm5192, %v5600, %v5559
        %v5602 = vrot.slane %v5559, 4
        %v5603 = vsel %vm5192, %v5571, %v5602
        %v5605 = vunpack.c.l.s4 1934713408
        %v5606 = vunpack.c.0.s8 %v5605
        %v5607 = vperm.slane %v5601, %v5606
        %v5609 = vunpack.c.l.s4 1934713408
        %v5610 = vunpack.c.0.s8 %v5609
        %v5611 = vperm.slane %v5603, %v5610
        %v5612 = vrot.slane %v5575, 4
        %v5613 = vsel %vm5192, %v5612, %v5563
        %v5614 = vrot.slane %v5563, 4
        %v5615 = vsel %vm5192, %v5575, %v5614
        %v5617 = vunpack.c.l.s4 1934713408
        %v5618 = vunpack.c.0.s8 %v5617
        %v5619 = vperm.slane %v5613, %v5618
        %v5621 = vunpack.c.l.s4 1934713408
        %v5622 = vunpack.c.0.s8 %v5621
        %v5623 = vperm.slane %v5615, %v5622
        %v5624 = vrot.slane %v5607, 4
        %v5625 = vsel %vm5192, %v5624, %v5583
        %v5626 = vrot.slane %v5583, 4
        %v5627 = vsel %vm5192, %v5607, %v5626
        %v5628 = vrot.slane %v5611, 4
        %v5629 = vsel %vm5192, %v5628, %v5587
        %v5630 = vrot.slane %v5587, 4
        %v5631 = vsel %vm5192, %v5611, %v5630
        %v5632 = vrot.slane %v5619, 4
        %v5633 = vsel %vm5192, %v5632, %v5595
        %v5634 = vrot.slane %v5595, 4
        %v5635 = vsel %vm5192, %v5619, %v5634
        %v5636 = vrot.slane %v5623, 4
        %v5637 = vsel %vm5192, %v5636, %v5599
        %v5638 = vrot.slane %v5599, 4
        %v5639 = vsel %vm5192, %v5623, %v5638
        %5642 = vrot.lane.b32.xlu0 %v5291, 8
        %v5643 = vpop.permute.xlu0 %5642
        %5644 = vrot.lane.b32.xlu0 %v5403, 8
        %v5645 = vpop.permute.xlu0 %5644
        %5650 = vrot.lane.b32.xlu0 %v5293, 16
        %v5651 = vpop.permute.xlu0 %5650
        %5652 = vrot.lane.b32.xlu0 %v5405, 16
        %v5653 = vpop.permute.xlu0 %5652
        %5658 = vrot.lane.b32.xlu0 %v5295, 24
        %v5659 = vpop.permute.xlu0 %5658
        %5660 = vrot.lane.b32.xlu0 %v5407, 24
        %v5661 = vpop.permute.xlu0 %5660
        %5666 = vrot.lane.b32.xlu0 %v5297, 32
        %v5667 = vpop.permute.xlu0 %5666
        %5668 = vrot.lane.b32.xlu0 %v5409, 32
        %v5669 = vpop.permute.xlu0 %5668
        %5674 = vrot.lane.b32.xlu0 %v5299, 40
        %v5675 = vpop.permute.xlu0 %5674
        %5676 = vrot.lane.b32.xlu0 %v5411, 40
        %v5677 = vpop.permute.xlu0 %5676
        %5682 = vrot.lane.b32.xlu0 %v5301, 48
        %v5683 = vpop.permute.xlu0 %5682
        %5684 = vrot.lane.b32.xlu0 %v5413, 48
        %v5685 = vpop.permute.xlu0 %5684
        %5690 = vrot.lane.b32.xlu0 %v5303, 56
        %v5691 = vpop.permute.xlu0 %5690
        %5692 = vrot.lane.b32.xlu0 %v5415, 56
        %v5693 = vpop.permute.xlu0 %5692
        %5698 = vrot.lane.b32.xlu0 %v5513, 64
        %v5699 = vpop.permute.xlu0 %5698
        %5700 = vrot.lane.b32.xlu0 %v5625, 64
        %v5701 = vpop.permute.xlu0 %5700
        %5706 = vrot.lane.b32.xlu0 %v5515, 72
        %v5707 = vpop.permute.xlu0 %5706
        %5708 = vrot.lane.b32.xlu0 %v5627, 72
        %v5709 = vpop.permute.xlu0 %5708
        %5714 = vrot.lane.b32.xlu0 %v5517, 80
        %v5715 = vpop.permute.xlu0 %5714
        %5716 = vrot.lane.b32.xlu0 %v5629, 80
        %v5717 = vpop.permute.xlu0 %5716
        %5722 = vrot.lane.b32.xlu0 %v5519, 88
        %v5723 = vpop.permute.xlu0 %5722
        %5724 = vrot.lane.b32.xlu0 %v5631, 88
        %v5725 = vpop.permute.xlu0 %5724
        %5730 = vrot.lane.b32.xlu0 %v5521, 96
        %v5731 = vpop.permute.xlu0 %5730
        %5732 = vrot.lane.b32.xlu0 %v5633, 96
        %v5733 = vpop.permute.xlu0 %5732
        %5738 = vrot.lane.b32.xlu0 %v5523, 104
        %v5739 = vpop.permute.xlu0 %5738
        %5740 = vrot.lane.b32.xlu0 %v5635, 104
        %v5741 = vpop.permute.xlu0 %5740
        %5746 = vrot.lane.b32.xlu0 %v5525, 112
        %v5747 = vpop.permute.xlu0 %5746
        %5748 = vrot.lane.b32.xlu0 %v5637, 112
        %v5749 = vpop.permute.xlu0 %5748
        %5754 = vrot.lane.b32.xlu0 %v5527, 120
        %v5755 = vpop.permute.xlu0 %5754
        %5756 = vrot.lane.b32.xlu0 %v5639, 120
        %v5757 = vpop.permute.xlu0 %5756
        %v5760 = vsel %vm345, %v5289, %v5643
        %v5761 = vsel %vm345, %v5401, %v5645
        %v5762 = vsel %vm2294, %v5760, %v5651
        %v5763 = vsel %vm2294, %v5761, %v5653
        %vm5764 = vcmask 195584
        %v5765 = vsel %vm5764, %v5762, %v5659
        %v5766 = vsel %vm5764, %v5763, %v5661
        %vm5767 = vcmask 261120
        %v5768 = vsel %vm5767, %v5765, %v5667
        %v5769 = vsel %vm5767, %v5766, %v5669
        %vm5770 = vcmask 326656
        %v5771 = vsel %vm5770, %v5768, %v5675
        %v5772 = vsel %vm5770, %v5769, %v5677
        %vm5773 = vcmask 392192
        %v5774 = vsel %vm5773, %v5771, %v5683
        %v5775 = vsel %vm5773, %v5772, %v5685
        %vm5776 = vcmask 457728
        %v5777 = vsel %vm5776, %v5774, %v5691
        %v5778 = vsel %vm5776, %v5775, %v5693
        %vm5779 = vcmask 523264
        %v5780 = vsel %vm5779, %v5777, %v5699
        %v5781 = vsel %vm5779, %v5778, %v5701
        %vm5782 = vcmask 588800
        %v5783 = vsel %vm5782, %v5780, %v5707
        %v5784 = vsel %vm5782, %v5781, %v5709
        %vm5785 = vcmask 654336
        %v5786 = vsel %vm5785, %v5783, %v5715
        %v5787 = vsel %vm5785, %v5784, %v5717
        %vm5788 = vcmask 719872
        %v5789 = vsel %vm5788, %v5786, %v5723
        %v5790 = vsel %vm5788, %v5787, %v5725
        %vm5791 = vcmask 785408
        %v5792 = vsel %vm5791, %v5789, %v5731
        %v5793 = vsel %vm5791, %v5790, %v5733
        %vm5794 = vcmask 850944
        %v5795 = vsel %vm5794, %v5792, %v5739
        %v5796 = vsel %vm5794, %v5793, %v5741
        %vm5797 = vcmask 916480
        %v5798 = vsel %vm5797, %v5795, %v5747
        %v5799 = vsel %vm5797, %v5796, %v5749
        %vm5800 = vcmask 982016
        %v5801 = vsel %vm5800, %v5798, %v5755
        %v5802 = vsel %vm5800, %v5799, %v5757
        %5803 = vst [vmem:[%s265] sm:$0xff] %v5801
        %5804 = vst [vmem:[%s265 + $0x8] sm:$0xff] %v5802
        %s5805 = sand.u32 %s164, 1
        %s5806 = scalar_lea.sflag [#allocation3], %s5805
        %s5807 = sand.u32 %s164, 1
        %s5808 = smul.addr %s5807, 16
        %s5809 = scalar_lea.vmem [#allocation2], %s5808
        // Predicated region
        $region45: #{tpu_custom_call.1} parent=43 // pred_check
          %p5810 = pneg %p174
        $region46: #{tpu_custom_call.1} parent=43 // pred_check_branch
          %5812 = sbr.rel (%p5810) target = $region48
        $region47: #{tpu_custom_call.1} parent=43 // pred_region
          %s5813 = smul.u32 2, %s20
          %5815 = vsyncadd %s5806, 0
          %s5816 = smul.addr %s5813, 8
          %s5817 = scalar_lea.hbm %s6, %s5816
          %s5818 = sshll.u32 %s5809, 4
          %s5819 = int_to_ptr.vmem [resolvable:$true] %s5818
          %s5820 = sshll.u32 %s5817, 4
          %s5821 = int_to_ptr.hbm [resolvable:$true] %s5820
          %5826 = dma.vmem_to_hbm [thread:$0]  %s5819, 256, %s5821, %s5806, 128, 128, 8
        $region48: #{tpu_custom_call.1} parent=43 // pred_fallthru
          _
      $region44: #{tpu_custom_call.1} parent=5 // pred_fallthru
        _
      %p5827 = scmp.le.s32.totalorder 2, %s15
      // Predicated region
      $region49: #{tpu_custom_call.1} parent=5 // pred_check
        %p5828 = pneg %p5827
      $region50: #{tpu_custom_call.1} parent=5 // pred_check_branch
        %5830 = sbr.rel (%p5828) target = $region52
      $region51: #{tpu_custom_call.1} parent=5 // pred_region
        %s5831 = ssub.s32 %s15, 2
        // Predicated region
        $region53: #{tpu_custom_call.1} parent=51 // pred_check
          %p5832 = pneg %p180
        $region54: #{tpu_custom_call.1} parent=51 // pred_check_branch
          %5834 = sbr.rel (%p5832) target = $region56
        $region55: #{tpu_custom_call.1} parent=51 // pred_region
          %s5835 = sand.u32 %s165, 1
          %s5836 = scalar_lea.sflag [#allocation3], %s5835
          %s5837 = sand.u32 %s165, 1
          %s5838 = smul.addr %s5837, 16
          %s5839 = scalar_lea.vmem [#allocation2], %s5838
          %5841 = dma.done %s5836, 256
        $region56: #{tpu_custom_call.1} parent=51 // pred_fallthru
          _
      $region52: #{tpu_custom_call.1} parent=5 // pred_fallthru
        _
    $region6: #{tpu_custom_call.1} parent=1 // loop_footer
      %s19 = sadd.s32 1, %s15
    $region7: #{tpu_custom_call.1} parent=1 // loop_footer_branch
      %14 = sbr.rel target = $region3
    $region8: #{tpu_custom_call.1} parent=1 // loop_exit
      _
    %5842 = vsyncpa [#allocation3], 1
    %s5843 = scalar_lea.sflag [#allocation3], 1
    %5844 = vsyncpa %s5843, 1

</llo_original>
